<compile_context>
chip_gen: v6e
topology: v6e:2x2x1
jax: 0.10.0
libtpu: 0.0.40
codegen_flags: <defaults>
</compile_context>

<pallas_src>
import functools

import numpy as np
import jax
import jax.numpy as jnp
from jax.experimental import pallas as pl
from jax.experimental.pallas import tpu as pltpu

EPS = 1e-5


# --------------------------------------------------------------------------
# In-kernel helpers: the body is only MXU matmuls, XLU rolls, VPU elementwise
# ops and axis-0 reductions (no gathers / data-dependent indexing).
# --------------------------------------------------------------------------
def _dot(a, b):
    return jnp.dot(a, b, preferred_element_type=jnp.float32)


def _h_taps(a, st):
    """Stack [x_{h-1} | x_h | x_{h+1}] along lanes, zero-padded at image edges."""
    if "sh" in st:                          # rows not a multiple of the sublane
        up = _dot(st["sh"][0], a)           # tile: tiny explicit shift matmuls
        dn = _dot(st["sh"][1], a)
    else:                                   # sublane rolls (XLU) + boundary masks
        nh = a.shape[0]
        up = pltpu.roll(a, shift=1, axis=0) * st["mt"][...]
        dn = pltpu.roll(a, shift=nh - 1, axis=0) * st["mb"][...]
    return jnp.concatenate([up, a, dn], axis=1)


def _conv_bn(a, st, relu):
    """kxk conv (k=1 or 3, any stride, zero pad) + BatchNorm(train stats) (+ReLU).

    a  : [N*Hin, Win*Cin] activation (f32).
    st : dict of refs:
         wc   [k*Win*Cin, Wout*Cout]  bf16 fused (kh, W-shift, W-stride) x weight
         mt/mb [N*Hin, 1]             f32 image-boundary masks      (k == 3, roll path)
         sh   [2, N*Hin, N*Hin]       f32 explicit +-1 row shifts   (k == 3, fallback)
         dec  [N*Hout, N*Hin]         f32 H decimation              (stride == 2)
         kred [Wout*Cout, Cout]       per-channel reducer (x 1/count)
         kbc  [Cout, Wout*Cout]       per-channel broadcaster
         gamma/beta [1, Cout]
    """
    # TODO(synk): eval()-mode BatchNorm (running stats) is not modeled; this
    # matches the freshly-constructed PyTorch module's default train() forward.
    taps = _h_taps(a, st) if ("mt" in st or "sh" in st) else a       # 3x3 vs 1x1
    y = _dot(taps.astype(jnp.bfloat16), st["wc"][...])               # ONE conv matmul
    if "dec" in st:                                                  # stride 2: one
        y = _dot(st["dec"][...], y)                                  # H decimation
    # BatchNorm2d, training-mode batch statistics, biased variance, single pass.
    s1 = jnp.sum(y, axis=0, keepdims=True)
    s2 = jnp.sum(y * y, axis=0, keepdims=True)
    red = _dot(jnp.concatenate([s1, s2], axis=0), st["kred"][...])   # [2, Cout]
    mean = red[0:1, :]
    var = jnp.maximum(red[1:2, :] - mean * mean, 0.0)
    scale = st["gamma"][...] * jax.lax.rsqrt(var + EPS)
    shift = st["beta"][...] - mean * scale
    ss = _dot(jnp.concatenate([scale, shift], axis=0), st["kbc"][...])  # [2, Wout*Cout]
    y = y * ss[0:1, :] + ss[1:2, :]
    return jnp.maximum(y, 0.0) if relu else y


def _maxpool(a, st, c):
    """3x3 / stride 2 / pad 1 max-pool; input is post-ReLU so 0-padding is exact."""
    nh, wlanes = a.shape
    up = pltpu.roll(a, shift=1, axis=0) * st["mt"][...]
    dn = pltpu.roll(a, shift=nh - 1, axis=0) * st["mb"][...]
    m = jnp.maximum(jnp.maximum(up, dn), a)            # H-window max, full height
    m = _dot(st["dech"][...], m)                       # H decimation (stride 2)
    lf = pltpu.roll(m, shift=c, axis=1) * st["ml"][...]
    rt = pltpu.roll(m, shift=wlanes - c, axis=1) * st["mr"][...]
    m = jnp.maximum(jnp.maximum(lf, rt), m)            # W-window max, full width
    return _dot(m, st["decw"][...])                    # W decimation (stride 2)


def _resnet8_kernel(*refs, treedef, pool_c):
    x_ref = refs[0]
    o_ref = refs[-1]
    plan = jax.tree_util.tree_unflatten(treedef, refs[1:-1])

    a = x_ref[...]                                     # [N*16, 16*3]
    a = _conv_bn(a, plan["conv1"], relu=True)          # [N*16, 16*8]
    a = _maxpool(a, plan["maxpool"], pool_c)           # [N*8,  8*8]
    for bp in plan["blocks"]:
        y = _conv_bn(a, bp["c1"], relu=True)
        y = _conv_bn(y, bp["c2"], relu=False)
        res = _conv_bn(a, bp["ds"], relu=False) if "ds" in bp else a
        a = jnp.maximum(y + res, 0.0)                  # ... -> [N*2, 2*32]

    head = plan["head"]
    pooled = _dot(head["pn"][...], a)                  # [N, Wf*Cf] (sum over H)
    o_ref[...] = _dot(pooled, head["fc"][...]) + head["fc_b"][...]


# --------------------------------------------------------------------------
# Host-side constant-matrix construction (numpy, built once at init time)
# --------------------------------------------------------------------------
def _col_conv(w, Win, Wout, stride, pad):
    """w [k,k,Cin,Cout] -> [k*Win*Cin, Wout*Cout]: fused W-shift x weight, kh-stacked."""
    k, _, Cin, Cout = w.shape
    Wc = np.zeros((k, Win * Cin, Wout * Cout), np.float32)
    for kh in range(k):
        for kw in range(k):
            for wo in range(Wout):
                wi = stride * wo + kw - pad
                if 0 <= wi < Win:
                    Wc[kh, wi * Cin:(wi + 1) * Cin,
                       wo * Cout:(wo + 1) * Cout] += w[kh, kw]
    return Wc.reshape(k * Win * Cin, Wout * Cout)


def _row_masks(N, H):
    mt = np.ones((N * H, 1), np.float32)
    mb = np.ones((N * H, 1), np.float32)
    mt[np.arange(N) * H, 0] = 0.0                 # rows with h == 0
    mb[np.arange(N) * H + (H - 1), 0] = 0.0       # rows with h == H-1
    return mt, mb


def _row_shifts(N, H):
    """Explicit +-1 row shift with per-image zero boundary (tiny-layer fallback)."""
    NH = N * H
    S = np.zeros((2, NH, NH), np.float32)
    for n in range(N):
        for h in range(H):
            i = n * H + h
            if h - 1 >= 0:
                S[0, i, i - 1] = 1.0
            if h + 1 < H:
                S[1, i, i + 1] = 1.0
    return S


def _row_decim(N, Hin, Hout, stride):
    D = np.zeros((N * Hout, N * Hin), np.float32)
    for n in range(N):
        for ho in range(Hout):
            D[n * Hout + ho, n * Hin + stride * ho] = 1.0
    return D


def _col_decim(Win, Wout, stride, C):
    D = np.zeros((Win * C, Wout * C), np.float32)
    eye = np.eye(C, dtype=np.float32)
    for wo in range(Wout):
        D[stride * wo * C:(stride * wo + 1) * C, wo * C:(wo + 1) * C] = eye
    return D


def _lane_masks(Win, C):
    ml = np.ones((1, Win * C), np.float32)
    mr = np.ones((1, Win * C), np.float32)
    ml[0, :C] = 0.0
    mr[0, (Win - 1) * C:] = 0.0
    return ml, mr


def _chan_reduce(W, C, scale=1.0):
    K = np.zeros((W * C, C), np.float32)
    eye = np.eye(C, dtype=np.float32) * scale
    for w in range(W):
        K[w * C:(w + 1) * C, :] = eye
    return K


def _conv_bn_plan(w4, N, Hin, Win, stride, pad):
    w = np.asarray(w4)
    k, _, Cin, Cout = w.shape
    Hout = (Hin + 2 * pad - k) // stride + 1
    Wout = (Win + 2 * pad - k) // stride + 1
    count = float(N * Hout * Wout)
    st = dict(
        wc=jnp.asarray(_col_conv(w, Win, Wout, stride, pad), dtype=jnp.bfloat16),
        kred=jnp.asarray(_chan_reduce(Wout, Cout, 1.0 / count)),
        kbc=jnp.asarray(_chan_reduce(Wout, Cout, 1.0).T),
        gamma=jnp.ones((1, Cout), jnp.float32),    # BatchNorm2d weight init = 1
        beta=jnp.zeros((1, Cout), jnp.float32),    # BatchNorm2d bias   init = 0
    )
    if k == 3:
        if (N * Hin) % 8 == 0:                     # sublane-roll path
            mt, mb = _row_masks(N, Hin)
            st["mt"], st["mb"] = jnp.asarray(mt), jnp.asarray(mb)
        else:                                      # tiny explicit-shift fallback
            st["sh"] = jnp.asarray(_row_shifts(N, Hin))
    if stride != 1:
        st["dec"] = jnp.asarray(_row_decim(N, Hin, Hout, stride))
    return st, (Hout, Wout, Cout)


def _maxpool_plan(N, Hin, Win, C, k=3, stride=2, pad=1):
    Hout = (Hin + 2 * pad - k) // stride + 1
    Wout = (Win + 2 * pad - k) // stride + 1
    assert (N * Hin) % 8 == 0, "maxpool roll path needs rows % 8 == 0"
    mt, mb = _row_masks(N, Hin)
    ml, mr = _lane_masks(Win, C)
    st = dict(mt=jnp.asarray(mt), mb=jnp.asarray(mb),
              ml=jnp.asarray(ml), mr=jnp.asarray(mr),
              dech=jnp.asarray(_row_decim(N, Hin, Hout, stride)),
              decw=jnp.asarray(_col_decim(Win, Wout, stride, C)))
    return st, (Hout, Wout, C)


def build_plan(params, N, H, W):
    plan = {}
    plan["conv1"], (H, W, C) = _conv_bn_plan(params["conv1_w"], N, H, W, 1, 1)
    plan["maxpool"], (H, W, C) = _maxpool_plan(N, H, W, C)
    blocks = []
    for blk in params["blocks"]:
        stride = blk["stride"]
        b = {}
        b["c1"], (H1, W1, C1) = _conv_bn_plan(blk["w1"], N, H, W, stride, 1)
        b["c2"], (H2, W2, C2) = _conv_bn_plan(blk["w2"], N, H1, W1, 1, 1)
        if "wd" in blk:
            b["ds"], _ = _conv_bn_plan(blk["wd"], N, H, W, stride, 0)
        blocks.append(b)
        H, W, C = H2, W2, C2
    plan["blocks"] = blocks

    # Head: avgpool + fc folded -> (sum over H via pn) x (fc/(H*W) replicated over W).
    Pn = np.zeros((N, N * H), np.float32)
    for n in range(N):
        Pn[n, n * H:(n + 1) * H] = 1.0
    fc_w = np.asarray(params["fc_w"])                       # [C, num_classes]
    fc_fold = np.zeros((W * C, fc_w.shape[1]), np.float32)
    for w in range(W):
        fc_fold[w * C:(w + 1) * C, :] = fc_w / float(H * W)
    plan["head"] = dict(pn=jnp.asarray(Pn), fc=jnp.asarray(fc_fold),
                        fc_b=params["fc_b"])
    return plan


# --------------------------------------------------------------------------
# Cost estimate derived from the plan (advisory; shapes are static under jit)
# --------------------------------------------------------------------------
def _plan_cost(plan, x_shape, out_shape):
    def conv_fl(st, nh):
        f = 0
        k0, k1 = st["wc"].shape
        if "sh" in st:
            f += 2 * (2 * nh * nh * (k0 // 3))
        f += 2 * nh * k0 * k1
        if "dec" in st:
            nho = st["dec"].shape[0]
            f += 2 * nho * nh * k1
            nh = nho
        f += 2 * 2 * st["kred"].shape[0] * st["kred"].shape[1]
        f += 2 * 2 * st["kbc"].shape[0] * st["kbc"].shape[1]
        return f, nh

    N, _, H, _ = x_shape
    fl = 0
    nh = N * H
    f, nh = conv_fl(plan["conv1"], nh); fl += f
    mp = plan["maxpool"]
    lanes = mp["decw"].shape[0]
    nho = mp["dech"].shape[0]
    fl += 2 * nho * nh * lanes + 2 * nho * lanes * mp["decw"].shape[1]
    nh = nho
    for bp in plan["blocks"]:
        f, nh1 = conv_fl(bp["c1"], nh); fl += f
        f, nh2 = conv_fl(bp["c2"], nh1); fl += f
        if "ds" in bp:
            f, _ = conv_fl(bp["ds"], nh); fl += f
        nh = nh2
    hd = plan["head"]
    fl += 2 * hd["pn"].shape[0] * hd["pn"].shape[1] * hd["fc"].shape[0]
    fl += 2 * hd["pn"].shape[0] * hd["fc"].shape[0] * hd["fc"].shape[1]

    nbytes = int(np.prod(x_shape)) * 4 + int(np.prod(out_shape)) * 4
    for leaf in jax.tree_util.tree_leaves(plan):
        nbytes += int(np.prod(leaf.shape)) * leaf.dtype.itemsize
    return pl.CostEstimate(flops=int(fl), transcendentals=256,
                           bytes_accessed=int(nbytes))


# --------------------------------------------------------------------------
# Single fused pallas_call
# --------------------------------------------------------------------------
def resnet8_forward(x_nchw, plan):
    N, Cin, H, W = x_nchw.shape
    num_classes = plan["head"]["fc"].shape[1]
    pool_c = plan["conv1"]["kred"].shape[1]          # channels entering maxpool
    # one-time layout glue on the tiny input: NCHW -> NHWC -> [N*H, W*C]
    a0 = jnp.transpose(x_nchw, (0, 2, 3, 1)).astype(jnp.float32).reshape(N * H, W * Cin)

    flat, treedef = jax.tree_util.tree_flatten(plan)
    inputs = [a0] + list(flat)
    kernel = functools.partial(_resnet8_kernel, treedef=treedef, pool_c=int(pool_c))

    return pl.pallas_call(
        kernel,
        out_shape=jax.ShapeDtypeStruct((N, num_classes), jnp.float32),
        in_specs=[pl.BlockSpec(memory_space=pltpu.MemorySpace.VMEM)] * len(inputs),
        out_specs=pl.BlockSpec(memory_space=pltpu.MemorySpace.VMEM),
        compiler_params=pltpu.CompilerParams(vmem_limit_bytes=32 * 1024 * 1024),
        cost_estimate=_plan_cost(plan, x_nchw.shape, (N, num_classes)),
    )(*inputs)


# --------------------------------------------------------------------------
# Deterministic parameter initialization (mirrors the PyTorch __init__)
# --------------------------------------------------------------------------
def _kaiming_conv(key, kh, kw, cin, cout):
    fan_out = kh * kw * cout                       # kaiming_normal_, mode='fan_out'
    return jax.random.normal(key, (kh, kw, cin, cout), jnp.float32) * (2.0 / fan_out) ** 0.5


def init_params(key, scaling=0.125, num_classes=10):
    inplanes = int(64 * scaling)                   # 8
    keys = iter(jax.random.split(key, 64))
    params = {"conv1_w": _kaiming_conv(next(keys), 3, 3, 3, inplanes)}
    blocks = []
    layer_cfg = [(int(64 * scaling), 1, 1),
                 (int(128 * scaling), 1, 2),
                 (int(256 * scaling), 1, 2)]
    for planes, nlayers, first_stride in layer_cfg:
        for li in range(nlayers):
            stride = first_stride if li == 0 else 1
            blk = {"stride": stride,
                   "w1": _kaiming_conv(next(keys), 3, 3, inplanes, planes),
                   "w2": _kaiming_conv(next(keys), 3, 3, planes, planes)}
            if stride != 1 or inplanes != planes:  # downsample: conv1x1 + bn
                blk["wd"] = _kaiming_conv(next(keys), 1, 1, inplanes, planes)
            blocks.append(blk)
            inplanes = planes
    params["blocks"] = blocks
    bound = 1.0 / (inplanes ** 0.5)                # PyTorch nn.Linear default init
    params["fc_w"] = jax.random.uniform(next(keys), (inplanes, num_classes),
                                        jnp.float32, -bound, bound)
    params["fc_b"] = jax.random.uniform(next(keys), (1, num_classes),
                                        jnp.float32, -bound, bound)
    return params


# --------------------------------------------------------------------------
if __name__ == "__main__":
    key = jax.random.PRNGKey(0)
    pkey, xkey = jax.random.split(key)

    params = init_params(pkey, scaling=0.125, num_classes=10)
    plan = build_plan(params, N=2, H=16, W=16)
    x = jax.random.normal(xkey, (2, 3, 16, 16), jnp.float32)   # NCHW, like PyTorch

    fwd = jax.jit(resnet8_forward)
    out = fwd(x, plan)
    jax.block_until_ready(out)

    assert out.shape == (2, 10), out.shape
    assert bool(jnp.all(jnp.isfinite(out)))
    print("KERNEL_OK")
</pallas_src>

<mosaic_0001>
module attributes {stable_mosaic.version = 11 : i64} {
  func.func @_resnet8_kernel(%arg0: memref<32x48xf32, #tpu.memory_space<vmem>>, %arg1: memref<1x8xf32, #tpu.memory_space<vmem>>, %arg2: memref<1x8xf32, #tpu.memory_space<vmem>>, %arg3: memref<8x64xf32, #tpu.memory_space<vmem>>, %arg4: memref<64x8xf32, #tpu.memory_space<vmem>>, %arg5: memref<16x1xf32, #tpu.memory_space<vmem>>, %arg6: memref<16x1xf32, #tpu.memory_space<vmem>>, %arg7: memref<192x64xbf16, #tpu.memory_space<vmem>>, %arg8: memref<1x8xf32, #tpu.memory_space<vmem>>, %arg9: memref<1x8xf32, #tpu.memory_space<vmem>>, %arg10: memref<8x64xf32, #tpu.memory_space<vmem>>, %arg11: memref<64x8xf32, #tpu.memory_space<vmem>>, %arg12: memref<16x1xf32, #tpu.memory_space<vmem>>, %arg13: memref<16x1xf32, #tpu.memory_space<vmem>>, %arg14: memref<192x64xbf16, #tpu.memory_space<vmem>>, %arg15: memref<1x16xf32, #tpu.memory_space<vmem>>, %arg16: memref<8x16xf32, #tpu.memory_space<vmem>>, %arg17: memref<1x16xf32, #tpu.memory_space<vmem>>, %arg18: memref<16x64xf32, #tpu.memory_space<vmem>>, %arg19: memref<64x16xf32, #tpu.memory_space<vmem>>, %arg20: memref<16x1xf32, #tpu.memory_space<vmem>>, %arg21: memref<16x1xf32, #tpu.memory_space<vmem>>, %arg22: memref<192x64xbf16, #tpu.memory_space<vmem>>, %arg23: memref<1x16xf32, #tpu.memory_space<vmem>>, %arg24: memref<1x16xf32, #tpu.memory_space<vmem>>, %arg25: memref<16x64xf32, #tpu.memory_space<vmem>>, %arg26: memref<64x16xf32, #tpu.memory_space<vmem>>, %arg27: memref<8x1xf32, #tpu.memory_space<vmem>>, %arg28: memref<8x1xf32, #tpu.memory_space<vmem>>, %arg29: memref<192x64xbf16, #tpu.memory_space<vmem>>, %arg30: memref<1x16xf32, #tpu.memory_space<vmem>>, %arg31: memref<8x16xf32, #tpu.memory_space<vmem>>, %arg32: memref<1x16xf32, #tpu.memory_space<vmem>>, %arg33: memref<16x64xf32, #tpu.memory_space<vmem>>, %arg34: memref<64x16xf32, #tpu.memory_space<vmem>>, %arg35: memref<64x64xbf16, #tpu.memory_space<vmem>>, %arg36: memref<1x32xf32, #tpu.memory_space<vmem>>, %arg37: memref<4x8xf32, #tpu.memory_space<vmem>>, %arg38: memref<1x32xf32, #tpu.memory_space<vmem>>, %arg39: memref<32x64xf32, #tpu.memory_space<vmem>>, %arg40: memref<64x32xf32, #tpu.memory_space<vmem>>, %arg41: memref<8x1xf32, #tpu.memory_space<vmem>>, %arg42: memref<8x1xf32, #tpu.memory_space<vmem>>, %arg43: memref<192x64xbf16, #tpu.memory_space<vmem>>, %arg44: memref<1x32xf32, #tpu.memory_space<vmem>>, %arg45: memref<1x32xf32, #tpu.memory_space<vmem>>, %arg46: memref<32x64xf32, #tpu.memory_space<vmem>>, %arg47: memref<64x32xf32, #tpu.memory_space<vmem>>, %arg48: memref<2x4x4xf32, #tpu.memory_space<vmem>>, %arg49: memref<192x64xbf16, #tpu.memory_space<vmem>>, %arg50: memref<1x32xf32, #tpu.memory_space<vmem>>, %arg51: memref<4x8xf32, #tpu.memory_space<vmem>>, %arg52: memref<1x32xf32, #tpu.memory_space<vmem>>, %arg53: memref<32x64xf32, #tpu.memory_space<vmem>>, %arg54: memref<64x32xf32, #tpu.memory_space<vmem>>, %arg55: memref<64x64xbf16, #tpu.memory_space<vmem>>, %arg56: memref<1x8xf32, #tpu.memory_space<vmem>>, %arg57: memref<1x8xf32, #tpu.memory_space<vmem>>, %arg58: memref<8x128xf32, #tpu.memory_space<vmem>>, %arg59: memref<128x8xf32, #tpu.memory_space<vmem>>, %arg60: memref<32x1xf32, #tpu.memory_space<vmem>>, %arg61: memref<32x1xf32, #tpu.memory_space<vmem>>, %arg62: memref<144x128xbf16, #tpu.memory_space<vmem>>, %arg63: memref<64x10xf32, #tpu.memory_space<vmem>>, %arg64: memref<1x10xf32, #tpu.memory_space<vmem>>, %arg65: memref<2x4xf32, #tpu.memory_space<vmem>>, %arg66: memref<16x32xf32, #tpu.memory_space<vmem>>, %arg67: memref<128x64xf32, #tpu.memory_space<vmem>>, %arg68: memref<32x1xf32, #tpu.memory_space<vmem>>, %arg69: memref<1x128xf32, #tpu.memory_space<vmem>>, %arg70: memref<1x128xf32, #tpu.memory_space<vmem>>, %arg71: memref<32x1xf32, #tpu.memory_space<vmem>>, %arg72: memref<2x10xf32, #tpu.memory_space<vmem>>) attributes {dimension_semantics = [], scalar_prefetch = 0 : i64, scratch_operands = 0 : i64, tpu.core_type = #tpu.core_type<tc>} {
    %c0 = arith.constant 0 : index
    %c0_0 = arith.constant 0 : index
    %0 = vector.load %arg0[%c0, %c0_0] : memref<32x48xf32, #tpu.memory_space<vmem>>, vector<32x48xf32>
    %c1_i32 = arith.constant 1 : i32
    %1 = tpu.dynamic_rotate %0 by %c1_i32 dim 0 : vector<32x48xf32>, i32 -> vector<32x48xf32>
    %c0_1 = arith.constant 0 : index
    %c0_2 = arith.constant 0 : index
    %2 = vector.load %arg61[%c0_1, %c0_2] : memref<32x1xf32, #tpu.memory_space<vmem>>, vector<32x1xf32>
    %3 = vector.broadcast %2 : vector<32x1xf32> to vector<32x48xf32>
    %4 = arith.mulf %1, %3 : vector<32x48xf32>
    %c31_i32 = arith.constant 31 : i32
    %5 = tpu.dynamic_rotate %0 by %c31_i32 dim 0 : vector<32x48xf32>, i32 -> vector<32x48xf32>
    %c0_3 = arith.constant 0 : index
    %c0_4 = arith.constant 0 : index
    %6 = vector.load %arg60[%c0_3, %c0_4] : memref<32x1xf32, #tpu.memory_space<vmem>>, vector<32x1xf32>
    %7 = vector.broadcast %6 : vector<32x1xf32> to vector<32x48xf32>
    %8 = arith.mulf %5, %7 : vector<32x48xf32>
    %9 = tpu.concatenate %4, %0, %8 in 1 : vector<32x48xf32>, vector<32x48xf32>, vector<32x48xf32> -> vector<32x144xf32>
    %10 = arith.truncf %9 : vector<32x144xf32> to vector<32x144xbf16>
    %c0_5 = arith.constant 0 : index
    %c0_6 = arith.constant 0 : index
    %11 = vector.load %arg62[%c0_5, %c0_6] : memref<144x128xbf16, #tpu.memory_space<vmem>>, vector<144x128xbf16>
    %cst = arith.constant dense<0.000000e+00> : vector<32x128xf32>
    %12 = tpu.matmul %10, %11, %cst {dimension_numbers = #tpu.dot_dimension_numbers<[1], [0], [0], [1], [0, 0, 1, 1], [], []>} : vector<32x144xbf16>, vector<144x128xbf16>, vector<32x128xf32> -> vector<32x128xf32>
    %cst_7 = arith.constant dense<0.000000e+00> : vector<128xf32>
    %13 = vector.multi_reduction <add>, %12, %cst_7 [0] : vector<32x128xf32> to vector<128xf32>
    %14 = vector.shape_cast %13 : vector<128xf32> to vector<1x128xf32>
    %15 = arith.mulf %12, %12 : vector<32x128xf32>
    %cst_8 = arith.constant dense<0.000000e+00> : vector<128xf32>
    %16 = vector.multi_reduction <add>, %15, %cst_8 [0] : vector<32x128xf32> to vector<128xf32>
    %17 = vector.shape_cast %16 : vector<128xf32> to vector<1x128xf32>
    %18 = tpu.concatenate %14, %17 in 0 : vector<1x128xf32>, vector<1x128xf32> -> vector<2x128xf32>
    %c0_9 = arith.constant 0 : index
    %c0_10 = arith.constant 0 : index
    %19 = vector.load %arg59[%c0_9, %c0_10] : memref<128x8xf32, #tpu.memory_space<vmem>>, vector<128x8xf32>
    %cst_11 = arith.constant dense<0.000000e+00> : vector<2x8xf32>
    %20 = tpu.matmul %18, %19, %cst_11 {dimension_numbers = #tpu.dot_dimension_numbers<[1], [0], [0], [1], [0, 0, 1, 1], [], []>} : vector<2x128xf32>, vector<128x8xf32>, vector<2x8xf32> -> vector<2x8xf32>
    %21 = vector.extract_strided_slice %20 {offsets = [0, 0], sizes = [1, 8], strides = [1, 1]} : vector<2x8xf32> to vector<1x8xf32>
    %22 = vector.extract_strided_slice %20 {offsets = [1, 0], sizes = [1, 8], strides = [1, 1]} : vector<2x8xf32> to vector<1x8xf32>
    %23 = arith.mulf %21, %21 : vector<1x8xf32>
    %24 = arith.subf %22, %23 : vector<1x8xf32>
    %cst_12 = arith.constant 0.000000e+00 : f32
    %25 = vector.broadcast %cst_12 : f32 to vector<1x8xf32>
    %26 = arith.maximumf %24, %25 : vector<1x8xf32>
    %c0_13 = arith.constant 0 : index
    %c0_14 = arith.constant 0 : index
    %27 = vector.load %arg57[%c0_13, %c0_14] : memref<1x8xf32, #tpu.memory_space<vmem>>, vector<1x8xf32>
    %cst_15 = arith.constant 9.99999974E-6 : f32
    %28 = vector.broadcast %cst_15 : f32 to vector<1x8xf32>
    %29 = arith.addf %26, %28 : vector<1x8xf32>
    %30 = math.rsqrt %29 : vector<1x8xf32>
    %31 = arith.mulf %27, %30 : vector<1x8xf32>
    %c0_16 = arith.constant 0 : index
    %c0_17 = arith.constant 0 : index
    %32 = vector.load %arg56[%c0_16, %c0_17] : memref<1x8xf32, #tpu.memory_space<vmem>>, vector<1x8xf32>
    %33 = arith.mulf %21, %31 : vector<1x8xf32>
    %34 = arith.subf %32, %33 : vector<1x8xf32>
    %35 = tpu.concatenate %31, %34 in 0 : vector<1x8xf32>, vector<1x8xf32> -> vector<2x8xf32>
    %c0_18 = arith.constant 0 : index
    %c0_19 = arith.constant 0 : index
    %36 = vector.load %arg58[%c0_18, %c0_19] : memref<8x128xf32, #tpu.memory_space<vmem>>, vector<8x128xf32>
    %cst_20 = arith.constant dense<0.000000e+00> : vector<2x128xf32>
    %37 = tpu.matmul %35, %36, %cst_20 {dimension_numbers = #tpu.dot_dimension_numbers<[1], [0], [0], [1], [0, 0, 1, 1], [], []>} : vector<2x8xf32>, vector<8x128xf32>, vector<2x128xf32> -> vector<2x128xf32>
    %38 = vector.extract_strided_slice %37 {offsets = [0, 0], sizes = [1, 128], strides = [1, 1]} : vector<2x128xf32> to vector<1x128xf32>
    %39 = vector.broadcast %38 : vector<1x128xf32> to vector<32x128xf32>
    %40 = arith.mulf %12, %39 : vector<32x128xf32>
    %41 = vector.extract_strided_slice %37 {offsets = [1, 0], sizes = [1, 128], strides = [1, 1]} : vector<2x128xf32> to vector<1x128xf32>
    %42 = vector.broadcast %41 : vector<1x128xf32> to vector<32x128xf32>
    %43 = arith.addf %40, %42 : vector<32x128xf32>
    %cst_21 = arith.constant 0.000000e+00 : f32
    %44 = vector.broadcast %cst_21 : f32 to vector<32x128xf32>
    %45 = arith.maximumf %43, %44 : vector<32x128xf32>
    %c1_i32_22 = arith.constant 1 : i32
    %46 = tpu.dynamic_rotate %45 by %c1_i32_22 dim 0 : vector<32x128xf32>, i32 -> vector<32x128xf32>
    %c0_23 = arith.constant 0 : index
    %c0_24 = arith.constant 0 : index
    %47 = vector.load %arg71[%c0_23, %c0_24] : memref<32x1xf32, #tpu.memory_space<vmem>>, vector<32x1xf32>
    %48 = vector.broadcast %47 : vector<32x1xf32> to vector<32x128xf32>
    %49 = arith.mulf %46, %48 : vector<32x128xf32>
    %c31_i32_25 = arith.constant 31 : i32
    %50 = tpu.dynamic_rotate %45 by %c31_i32_25 dim 0 : vector<32x128xf32>, i32 -> vector<32x128xf32>
    %c0_26 = arith.constant 0 : index
    %c0_27 = arith.constant 0 : index
    %51 = vector.load %arg68[%c0_26, %c0_27] : memref<32x1xf32, #tpu.memory_space<vmem>>, vector<32x1xf32>
    %52 = vector.broadcast %51 : vector<32x1xf32> to vector<32x128xf32>
    %53 = arith.mulf %50, %52 : vector<32x128xf32>
    %54 = arith.maximumf %49, %53 : vector<32x128xf32>
    %55 = arith.maximumf %54, %45 : vector<32x128xf32>
    %c0_28 = arith.constant 0 : index
    %c0_29 = arith.constant 0 : index
    %56 = vector.load %arg66[%c0_28, %c0_29] : memref<16x32xf32, #tpu.memory_space<vmem>>, vector<16x32xf32>
    %cst_30 = arith.constant dense<0.000000e+00> : vector<16x128xf32>
    %57 = tpu.matmul %56, %55, %cst_30 {dimension_numbers = #tpu.dot_dimension_numbers<[1], [0], [0], [1], [0, 0, 1, 1], [], []>} : vector<16x32xf32>, vector<32x128xf32>, vector<16x128xf32> -> vector<16x128xf32>
    %c8_i32 = arith.constant 8 : i32
    %58 = tpu.dynamic_rotate %57 by %c8_i32 dim 1 : vector<16x128xf32>, i32 -> vector<16x128xf32>
    %c0_31 = arith.constant 0 : index
    %c0_32 = arith.constant 0 : index
    %59 = vector.load %arg69[%c0_31, %c0_32] : memref<1x128xf32, #tpu.memory_space<vmem>>, vector<1x128xf32>
    %60 = vector.broadcast %59 : vector<1x128xf32> to vector<16x128xf32>
    %61 = arith.mulf %58, %60 : vector<16x128xf32>
    %c120_i32 = arith.constant 120 : i32
    %62 = tpu.dynamic_rotate %57 by %c120_i32 dim 1 : vector<16x128xf32>, i32 -> vector<16x128xf32>
    %c0_33 = arith.constant 0 : index
    %c0_34 = arith.constant 0 : index
    %63 = vector.load %arg70[%c0_33, %c0_34] : memref<1x128xf32, #tpu.memory_space<vmem>>, vector<1x128xf32>
    %64 = vector.broadcast %63 : vector<1x128xf32> to vector<16x128xf32>
    %65 = arith.mulf %62, %64 : vector<16x128xf32>
    %66 = arith.maximumf %61, %65 : vector<16x128xf32>
    %67 = arith.maximumf %66, %57 : vector<16x128xf32>
    %c0_35 = arith.constant 0 : index
    %c0_36 = arith.constant 0 : index
    %68 = vector.load %arg67[%c0_35, %c0_36] : memref<128x64xf32, #tpu.memory_space<vmem>>, vector<128x64xf32>
    %cst_37 = arith.constant dense<0.000000e+00> : vector<16x64xf32>
    %69 = tpu.matmul %67, %68, %cst_37 {dimension_numbers = #tpu.dot_dimension_numbers<[1], [0], [0], [1], [0, 0, 1, 1], [], []>} : vector<16x128xf32>, vector<128x64xf32>, vector<16x64xf32> -> vector<16x64xf32>
    %c1_i32_38 = arith.constant 1 : i32
    %70 = tpu.dynamic_rotate %69 by %c1_i32_38 dim 0 : vector<16x64xf32>, i32 -> vector<16x64xf32>
    %c0_39 = arith.constant 0 : index
    %c0_40 = arith.constant 0 : index
    %71 = vector.load %arg6[%c0_39, %c0_40] : memref<16x1xf32, #tpu.memory_space<vmem>>, vector<16x1xf32>
    %72 = vector.broadcast %71 : vector<16x1xf32> to vector<16x64xf32>
    %73 = arith.mulf %70, %72 : vector<16x64xf32>
    %c15_i32 = arith.constant 15 : i32
    %74 = tpu.dynamic_rotate %69 by %c15_i32 dim 0 : vector<16x64xf32>, i32 -> vector<16x64xf32>
    %c0_41 = arith.constant 0 : index
    %c0_42 = arith.constant 0 : index
    %75 = vector.load %arg5[%c0_41, %c0_42] : memref<16x1xf32, #tpu.memory_space<vmem>>, vector<16x1xf32>
    %76 = vector.broadcast %75 : vector<16x1xf32> to vector<16x64xf32>
    %77 = arith.mulf %74, %76 : vector<16x64xf32>
    %78 = tpu.concatenate %73, %69, %77 in 1 : vector<16x64xf32>, vector<16x64xf32>, vector<16x64xf32> -> vector<16x192xf32>
    %79 = arith.truncf %78 : vector<16x192xf32> to vector<16x192xbf16>
    %c0_43 = arith.constant 0 : index
    %c0_44 = arith.constant 0 : index
    %80 = vector.load %arg7[%c0_43, %c0_44] : memref<192x64xbf16, #tpu.memory_space<vmem>>, vector<192x64xbf16>
    %cst_45 = arith.constant dense<0.000000e+00> : vector<16x64xf32>
    %81 = tpu.matmul %79, %80, %cst_45 {dimension_numbers = #tpu.dot_dimension_numbers<[1], [0], [0], [1], [0, 0, 1, 1], [], []>} : vector<16x192xbf16>, vector<192x64xbf16>, vector<16x64xf32> -> vector<16x64xf32>
    %cst_46 = arith.constant dense<0.000000e+00> : vector<64xf32>
    %82 = vector.multi_reduction <add>, %81, %cst_46 [0] : vector<16x64xf32> to vector<64xf32>
    %83 = vector.shape_cast %82 : vector<64xf32> to vector<1x64xf32>
    %84 = arith.mulf %81, %81 : vector<16x64xf32>
    %cst_47 = arith.constant dense<0.000000e+00> : vector<64xf32>
    %85 = vector.multi_reduction <add>, %84, %cst_47 [0] : vector<16x64xf32> to vector<64xf32>
    %86 = vector.shape_cast %85 : vector<64xf32> to vector<1x64xf32>
    %87 = tpu.concatenate %83, %86 in 0 : vector<1x64xf32>, vector<1x64xf32> -> vector<2x64xf32>
    %c0_48 = arith.constant 0 : index
    %c0_49 = arith.constant 0 : index
    %88 = vector.load %arg4[%c0_48, %c0_49] : memref<64x8xf32, #tpu.memory_space<vmem>>, vector<64x8xf32>
    %cst_50 = arith.constant dense<0.000000e+00> : vector<2x8xf32>
    %89 = tpu.matmul %87, %88, %cst_50 {dimension_numbers = #tpu.dot_dimension_numbers<[1], [0], [0], [1], [0, 0, 1, 1], [], []>} : vector<2x64xf32>, vector<64x8xf32>, vector<2x8xf32> -> vector<2x8xf32>
    %90 = vector.extract_strided_slice %89 {offsets = [0, 0], sizes = [1, 8], strides = [1, 1]} : vector<2x8xf32> to vector<1x8xf32>
    %91 = vector.extract_strided_slice %89 {offsets = [1, 0], sizes = [1, 8], strides = [1, 1]} : vector<2x8xf32> to vector<1x8xf32>
    %92 = arith.mulf %90, %90 : vector<1x8xf32>
    %93 = arith.subf %91, %92 : vector<1x8xf32>
    %cst_51 = arith.constant 0.000000e+00 : f32
    %94 = vector.broadcast %cst_51 : f32 to vector<1x8xf32>
    %95 = arith.maximumf %93, %94 : vector<1x8xf32>
    %c0_52 = arith.constant 0 : index
    %c0_53 = arith.constant 0 : index
    %96 = vector.load %arg2[%c0_52, %c0_53] : memref<1x8xf32, #tpu.memory_space<vmem>>, vector<1x8xf32>
    %cst_54 = arith.constant 9.99999974E-6 : f32
    %97 = vector.broadcast %cst_54 : f32 to vector<1x8xf32>
    %98 = arith.addf %95, %97 : vector<1x8xf32>
    %99 = math.rsqrt %98 : vector<1x8xf32>
    %100 = arith.mulf %96, %99 : vector<1x8xf32>
    %c0_55 = arith.constant 0 : index
    %c0_56 = arith.constant 0 : index
    %101 = vector.load %arg1[%c0_55, %c0_56] : memref<1x8xf32, #tpu.memory_space<vmem>>, vector<1x8xf32>
    %102 = arith.mulf %90, %100 : vector<1x8xf32>
    %103 = arith.subf %101, %102 : vector<1x8xf32>
    %104 = tpu.concatenate %100, %103 in 0 : vector<1x8xf32>, vector<1x8xf32> -> vector<2x8xf32>
    %c0_57 = arith.constant 0 : index
    %c0_58 = arith.constant 0 : index
    %105 = vector.load %arg3[%c0_57, %c0_58] : memref<8x64xf32, #tpu.memory_space<vmem>>, vector<8x64xf32>
    %cst_59 = arith.constant dense<0.000000e+00> : vector<2x64xf32>
    %106 = tpu.matmul %104, %105, %cst_59 {dimension_numbers = #tpu.dot_dimension_numbers<[1], [0], [0], [1], [0, 0, 1, 1], [], []>} : vector<2x8xf32>, vector<8x64xf32>, vector<2x64xf32> -> vector<2x64xf32>
    %107 = vector.extract_strided_slice %106 {offsets = [0, 0], sizes = [1, 64], strides = [1, 1]} : vector<2x64xf32> to vector<1x64xf32>
    %108 = vector.broadcast %107 : vector<1x64xf32> to vector<16x64xf32>
    %109 = arith.mulf %81, %108 : vector<16x64xf32>
    %110 = vector.extract_strided_slice %106 {offsets = [1, 0], sizes = [1, 64], strides = [1, 1]} : vector<2x64xf32> to vector<1x64xf32>
    %111 = vector.broadcast %110 : vector<1x64xf32> to vector<16x64xf32>
    %112 = arith.addf %109, %111 : vector<16x64xf32>
    %cst_60 = arith.constant 0.000000e+00 : f32
    %113 = vector.broadcast %cst_60 : f32 to vector<16x64xf32>
    %114 = arith.maximumf %112, %113 : vector<16x64xf32>
    %c1_i32_61 = arith.constant 1 : i32
    %115 = tpu.dynamic_rotate %114 by %c1_i32_61 dim 0 : vector<16x64xf32>, i32 -> vector<16x64xf32>
    %c0_62 = arith.constant 0 : index
    %c0_63 = arith.constant 0 : index
    %116 = vector.load %arg13[%c0_62, %c0_63] : memref<16x1xf32, #tpu.memory_space<vmem>>, vector<16x1xf32>
    %117 = vector.broadcast %116 : vector<16x1xf32> to vector<16x64xf32>
    %118 = arith.mulf %115, %117 : vector<16x64xf32>
    %c15_i32_64 = arith.constant 15 : i32
    %119 = tpu.dynamic_rotate %114 by %c15_i32_64 dim 0 : vector<16x64xf32>, i32 -> vector<16x64xf32>
    %c0_65 = arith.constant 0 : index
    %c0_66 = arith.constant 0 : index
    %120 = vector.load %arg12[%c0_65, %c0_66] : memref<16x1xf32, #tpu.memory_space<vmem>>, vector<16x1xf32>
    %121 = vector.broadcast %120 : vector<16x1xf32> to vector<16x64xf32>
    %122 = arith.mulf %119, %121 : vector<16x64xf32>
    %123 = tpu.concatenate %118, %114, %122 in 1 : vector<16x64xf32>, vector<16x64xf32>, vector<16x64xf32> -> vector<16x192xf32>
    %124 = arith.truncf %123 : vector<16x192xf32> to vector<16x192xbf16>
    %c0_67 = arith.constant 0 : index
    %c0_68 = arith.constant 0 : index
    %125 = vector.load %arg14[%c0_67, %c0_68] : memref<192x64xbf16, #tpu.memory_space<vmem>>, vector<192x64xbf16>
    %cst_69 = arith.constant dense<0.000000e+00> : vector<16x64xf32>
    %126 = tpu.matmul %124, %125, %cst_69 {dimension_numbers = #tpu.dot_dimension_numbers<[1], [0], [0], [1], [0, 0, 1, 1], [], []>} : vector<16x192xbf16>, vector<192x64xbf16>, vector<16x64xf32> -> vector<16x64xf32>
    %cst_70 = arith.constant dense<0.000000e+00> : vector<64xf32>
    %127 = vector.multi_reduction <add>, %126, %cst_70 [0] : vector<16x64xf32> to vector<64xf32>
    %128 = vector.shape_cast %127 : vector<64xf32> to vector<1x64xf32>
    %129 = arith.mulf %126, %126 : vector<16x64xf32>
    %cst_71 = arith.constant dense<0.000000e+00> : vector<64xf32>
    %130 = vector.multi_reduction <add>, %129, %cst_71 [0] : vector<16x64xf32> to vector<64xf32>
    %131 = vector.shape_cast %130 : vector<64xf32> to vector<1x64xf32>
    %132 = tpu.concatenate %128, %131 in 0 : vector<1x64xf32>, vector<1x64xf32> -> vector<2x64xf32>
    %c0_72 = arith.constant 0 : index
    %c0_73 = arith.constant 0 : index
    %133 = vector.load %arg11[%c0_72, %c0_73] : memref<64x8xf32, #tpu.memory_space<vmem>>, vector<64x8xf32>
    %cst_74 = arith.constant dense<0.000000e+00> : vector<2x8xf32>
    %134 = tpu.matmul %132, %133, %cst_74 {dimension_numbers = #tpu.dot_dimension_numbers<[1], [0], [0], [1], [0, 0, 1, 1], [], []>} : vector<2x64xf32>, vector<64x8xf32>, vector<2x8xf32> -> vector<2x8xf32>
    %135 = vector.extract_strided_slice %134 {offsets = [0, 0], sizes = [1, 8], strides = [1, 1]} : vector<2x8xf32> to vector<1x8xf32>
    %136 = vector.extract_strided_slice %134 {offsets = [1, 0], sizes = [1, 8], strides = [1, 1]} : vector<2x8xf32> to vector<1x8xf32>
    %137 = arith.mulf %135, %135 : vector<1x8xf32>
    %138 = arith.subf %136, %137 : vector<1x8xf32>
    %cst_75 = arith.constant 0.000000e+00 : f32
    %139 = vector.broadcast %cst_75 : f32 to vector<1x8xf32>
    %140 = arith.maximumf %138, %139 : vector<1x8xf32>
    %c0_76 = arith.constant 0 : index
    %c0_77 = arith.constant 0 : index
    %141 = vector.load %arg9[%c0_76, %c0_77] : memref<1x8xf32, #tpu.memory_space<vmem>>, vector<1x8xf32>
    %cst_78 = arith.constant 9.99999974E-6 : f32
    %142 = vector.broadcast %cst_78 : f32 to vector<1x8xf32>
    %143 = arith.addf %140, %142 : vector<1x8xf32>
    %144 = math.rsqrt %143 : vector<1x8xf32>
    %145 = arith.mulf %141, %144 : vector<1x8xf32>
    %c0_79 = arith.constant 0 : index
    %c0_80 = arith.constant 0 : index
    %146 = vector.load %arg8[%c0_79, %c0_80] : memref<1x8xf32, #tpu.memory_space<vmem>>, vector<1x8xf32>
    %147 = arith.mulf %135, %145 : vector<1x8xf32>
    %148 = arith.subf %146, %147 : vector<1x8xf32>
    %149 = tpu.concatenate %145, %148 in 0 : vector<1x8xf32>, vector<1x8xf32> -> vector<2x8xf32>
    %c0_81 = arith.constant 0 : index
    %c0_82 = arith.constant 0 : index
    %150 = vector.load %arg10[%c0_81, %c0_82] : memref<8x64xf32, #tpu.memory_space<vmem>>, vector<8x64xf32>
    %cst_83 = arith.constant dense<0.000000e+00> : vector<2x64xf32>
    %151 = tpu.matmul %149, %150, %cst_83 {dimension_numbers = #tpu.dot_dimension_numbers<[1], [0], [0], [1], [0, 0, 1, 1], [], []>} : vector<2x8xf32>, vector<8x64xf32>, vector<2x64xf32> -> vector<2x64xf32>
    %152 = vector.extract_strided_slice %151 {offsets = [0, 0], sizes = [1, 64], strides = [1, 1]} : vector<2x64xf32> to vector<1x64xf32>
    %153 = vector.broadcast %152 : vector<1x64xf32> to vector<16x64xf32>
    %154 = arith.mulf %126, %153 : vector<16x64xf32>
    %155 = vector.extract_strided_slice %151 {offsets = [1, 0], sizes = [1, 64], strides = [1, 1]} : vector<2x64xf32> to vector<1x64xf32>
    %156 = vector.broadcast %155 : vector<1x64xf32> to vector<16x64xf32>
    %157 = arith.addf %154, %156 : vector<16x64xf32>
    %158 = arith.addf %157, %69 : vector<16x64xf32>
    %cst_84 = arith.constant 0.000000e+00 : f32
    %159 = vector.broadcast %cst_84 : f32 to vector<16x64xf32>
    %160 = arith.maximumf %158, %159 : vector<16x64xf32>
    %c1_i32_85 = arith.constant 1 : i32
    %161 = tpu.dynamic_rotate %160 by %c1_i32_85 dim 0 : vector<16x64xf32>, i32 -> vector<16x64xf32>
    %c0_86 = arith.constant 0 : index
    %c0_87 = arith.constant 0 : index
    %162 = vector.load %arg21[%c0_86, %c0_87] : memref<16x1xf32, #tpu.memory_space<vmem>>, vector<16x1xf32>
    %163 = vector.broadcast %162 : vector<16x1xf32> to vector<16x64xf32>
    %164 = arith.mulf %161, %163 : vector<16x64xf32>
    %c15_i32_88 = arith.constant 15 : i32
    %165 = tpu.dynamic_rotate %160 by %c15_i32_88 dim 0 : vector<16x64xf32>, i32 -> vector<16x64xf32>
    %c0_89 = arith.constant 0 : index
    %c0_90 = arith.constant 0 : index
    %166 = vector.load %arg20[%c0_89, %c0_90] : memref<16x1xf32, #tpu.memory_space<vmem>>, vector<16x1xf32>
    %167 = vector.broadcast %166 : vector<16x1xf32> to vector<16x64xf32>
    %168 = arith.mulf %165, %167 : vector<16x64xf32>
    %169 = tpu.concatenate %164, %160, %168 in 1 : vector<16x64xf32>, vector<16x64xf32>, vector<16x64xf32> -> vector<16x192xf32>
    %170 = arith.truncf %169 : vector<16x192xf32> to vector<16x192xbf16>
    %c0_91 = arith.constant 0 : index
    %c0_92 = arith.constant 0 : index
    %171 = vector.load %arg22[%c0_91, %c0_92] : memref<192x64xbf16, #tpu.memory_space<vmem>>, vector<192x64xbf16>
    %cst_93 = arith.constant dense<0.000000e+00> : vector<16x64xf32>
    %172 = tpu.matmul %170, %171, %cst_93 {dimension_numbers = #tpu.dot_dimension_numbers<[1], [0], [0], [1], [0, 0, 1, 1], [], []>} : vector<16x192xbf16>, vector<192x64xbf16>, vector<16x64xf32> -> vector<16x64xf32>
    %c0_94 = arith.constant 0 : index
    %c0_95 = arith.constant 0 : index
    %173 = vector.load %arg16[%c0_94, %c0_95] : memref<8x16xf32, #tpu.memory_space<vmem>>, vector<8x16xf32>
    %cst_96 = arith.constant dense<0.000000e+00> : vector<8x64xf32>
    %174 = tpu.matmul %173, %172, %cst_96 {dimension_numbers = #tpu.dot_dimension_numbers<[1], [0], [0], [1], [0, 0, 1, 1], [], []>} : vector<8x16xf32>, vector<16x64xf32>, vector<8x64xf32> -> vector<8x64xf32>
    %cst_97 = arith.constant dense<0.000000e+00> : vector<64xf32>
    %175 = vector.multi_reduction <add>, %174, %cst_97 [0] : vector<8x64xf32> to vector<64xf32>
    %176 = vector.shape_cast %175 : vector<64xf32> to vector<1x64xf32>
    %177 = arith.mulf %174, %174 : vector<8x64xf32>
    %cst_98 = arith.constant dense<0.000000e+00> : vector<64xf32>
    %178 = vector.multi_reduction <add>, %177, %cst_98 [0] : vector<8x64xf32> to vector<64xf32>
    %179 = vector.shape_cast %178 : vector<64xf32> to vector<1x64xf32>
    %180 = tpu.concatenate %176, %179 in 0 : vector<1x64xf32>, vector<1x64xf32> -> vector<2x64xf32>
    %c0_99 = arith.constant 0 : index
    %c0_100 = arith.constant 0 : index
    %181 = vector.load %arg19[%c0_99, %c0_100] : memref<64x16xf32, #tpu.memory_space<vmem>>, vector<64x16xf32>
    %cst_101 = arith.constant dense<0.000000e+00> : vector<2x16xf32>
    %182 = tpu.matmul %180, %181, %cst_101 {dimension_numbers = #tpu.dot_dimension_numbers<[1], [0], [0], [1], [0, 0, 1, 1], [], []>} : vector<2x64xf32>, vector<64x16xf32>, vector<2x16xf32> -> vector<2x16xf32>
    %183 = vector.extract_strided_slice %182 {offsets = [0, 0], sizes = [1, 16], strides = [1, 1]} : vector<2x16xf32> to vector<1x16xf32>
    %184 = vector.extract_strided_slice %182 {offsets = [1, 0], sizes = [1, 16], strides = [1, 1]} : vector<2x16xf32> to vector<1x16xf32>
    %185 = arith.mulf %183, %183 : vector<1x16xf32>
    %186 = arith.subf %184, %185 : vector<1x16xf32>
    %cst_102 = arith.constant 0.000000e+00 : f32
    %187 = vector.broadcast %cst_102 : f32 to vector<1x16xf32>
    %188 = arith.maximumf %186, %187 : vector<1x16xf32>
    %c0_103 = arith.constant 0 : index
    %c0_104 = arith.constant 0 : index
    %189 = vector.load %arg17[%c0_103, %c0_104] : memref<1x16xf32, #tpu.memory_space<vmem>>, vector<1x16xf32>
    %cst_105 = arith.constant 9.99999974E-6 : f32
    %190 = vector.broadcast %cst_105 : f32 to vector<1x16xf32>
    %191 = arith.addf %188, %190 : vector<1x16xf32>
    %192 = math.rsqrt %191 : vector<1x16xf32>
    %193 = arith.mulf %189, %192 : vector<1x16xf32>
    %c0_106 = arith.constant 0 : index
    %c0_107 = arith.constant 0 : index
    %194 = vector.load %arg15[%c0_106, %c0_107] : memref<1x16xf32, #tpu.memory_space<vmem>>, vector<1x16xf32>
    %195 = arith.mulf %183, %193 : vector<1x16xf32>
    %196 = arith.subf %194, %195 : vector<1x16xf32>
    %197 = tpu.concatenate %193, %196 in 0 : vector<1x16xf32>, vector<1x16xf32> -> vector<2x16xf32>
    %c0_108 = arith.constant 0 : index
    %c0_109 = arith.constant 0 : index
    %198 = vector.load %arg18[%c0_108, %c0_109] : memref<16x64xf32, #tpu.memory_space<vmem>>, vector<16x64xf32>
    %cst_110 = arith.constant dense<0.000000e+00> : vector<2x64xf32>
    %199 = tpu.matmul %197, %198, %cst_110 {dimension_numbers = #tpu.dot_dimension_numbers<[1], [0], [0], [1], [0, 0, 1, 1], [], []>} : vector<2x16xf32>, vector<16x64xf32>, vector<2x64xf32> -> vector<2x64xf32>
    %200 = vector.extract_strided_slice %199 {offsets = [0, 0], sizes = [1, 64], strides = [1, 1]} : vector<2x64xf32> to vector<1x64xf32>
    %201 = vector.broadcast %200 : vector<1x64xf32> to vector<8x64xf32>
    %202 = arith.mulf %174, %201 : vector<8x64xf32>
    %203 = vector.extract_strided_slice %199 {offsets = [1, 0], sizes = [1, 64], strides = [1, 1]} : vector<2x64xf32> to vector<1x64xf32>
    %204 = vector.broadcast %203 : vector<1x64xf32> to vector<8x64xf32>
    %205 = arith.addf %202, %204 : vector<8x64xf32>
    %cst_111 = arith.constant 0.000000e+00 : f32
    %206 = vector.broadcast %cst_111 : f32 to vector<8x64xf32>
    %207 = arith.maximumf %205, %206 : vector<8x64xf32>
    %c1_i32_112 = arith.constant 1 : i32
    %208 = tpu.dynamic_rotate %207 by %c1_i32_112 dim 0 : vector<8x64xf32>, i32 -> vector<8x64xf32>
    %c0_113 = arith.constant 0 : index
    %c0_114 = arith.constant 0 : index
    %209 = vector.load %arg28[%c0_113, %c0_114] : memref<8x1xf32, #tpu.memory_space<vmem>>, vector<8x1xf32>
    %210 = vector.broadcast %209 : vector<8x1xf32> to vector<8x64xf32>
    %211 = arith.mulf %208, %210 : vector<8x64xf32>
    %c7_i32 = arith.constant 7 : i32
    %212 = tpu.dynamic_rotate %207 by %c7_i32 dim 0 : vector<8x64xf32>, i32 -> vector<8x64xf32>
    %c0_115 = arith.constant 0 : index
    %c0_116 = arith.constant 0 : index
    %213 = vector.load %arg27[%c0_115, %c0_116] : memref<8x1xf32, #tpu.memory_space<vmem>>, vector<8x1xf32>
    %214 = vector.broadcast %213 : vector<8x1xf32> to vector<8x64xf32>
    %215 = arith.mulf %212, %214 : vector<8x64xf32>
    %216 = tpu.concatenate %211, %207, %215 in 1 : vector<8x64xf32>, vector<8x64xf32>, vector<8x64xf32> -> vector<8x192xf32>
    %217 = arith.truncf %216 : vector<8x192xf32> to vector<8x192xbf16>
    %c0_117 = arith.constant 0 : index
    %c0_118 = arith.constant 0 : index
    %218 = vector.load %arg29[%c0_117, %c0_118] : memref<192x64xbf16, #tpu.memory_space<vmem>>, vector<192x64xbf16>
    %cst_119 = arith.constant dense<0.000000e+00> : vector<8x64xf32>
    %219 = tpu.matmul %217, %218, %cst_119 {dimension_numbers = #tpu.dot_dimension_numbers<[1], [0], [0], [1], [0, 0, 1, 1], [], []>} : vector<8x192xbf16>, vector<192x64xbf16>, vector<8x64xf32> -> vector<8x64xf32>
    %cst_120 = arith.constant dense<0.000000e+00> : vector<64xf32>
    %220 = vector.multi_reduction <add>, %219, %cst_120 [0] : vector<8x64xf32> to vector<64xf32>
    %221 = vector.shape_cast %220 : vector<64xf32> to vector<1x64xf32>
    %222 = arith.mulf %219, %219 : vector<8x64xf32>
    %cst_121 = arith.constant dense<0.000000e+00> : vector<64xf32>
    %223 = vector.multi_reduction <add>, %222, %cst_121 [0] : vector<8x64xf32> to vector<64xf32>
    %224 = vector.shape_cast %223 : vector<64xf32> to vector<1x64xf32>
    %225 = tpu.concatenate %221, %224 in 0 : vector<1x64xf32>, vector<1x64xf32> -> vector<2x64xf32>
    %c0_122 = arith.constant 0 : index
    %c0_123 = arith.constant 0 : index
    %226 = vector.load %arg26[%c0_122, %c0_123] : memref<64x16xf32, #tpu.memory_space<vmem>>, vector<64x16xf32>
    %cst_124 = arith.constant dense<0.000000e+00> : vector<2x16xf32>
    %227 = tpu.matmul %225, %226, %cst_124 {dimension_numbers = #tpu.dot_dimension_numbers<[1], [0], [0], [1], [0, 0, 1, 1], [], []>} : vector<2x64xf32>, vector<64x16xf32>, vector<2x16xf32> -> vector<2x16xf32>
    %228 = vector.extract_strided_slice %227 {offsets = [0, 0], sizes = [1, 16], strides = [1, 1]} : vector<2x16xf32> to vector<1x16xf32>
    %229 = vector.extract_strided_slice %227 {offsets = [1, 0], sizes = [1, 16], strides = [1, 1]} : vector<2x16xf32> to vector<1x16xf32>
    %230 = arith.mulf %228, %228 : vector<1x16xf32>
    %231 = arith.subf %229, %230 : vector<1x16xf32>
    %cst_125 = arith.constant 0.000000e+00 : f32
    %232 = vector.broadcast %cst_125 : f32 to vector<1x16xf32>
    %233 = arith.maximumf %231, %232 : vector<1x16xf32>
    %c0_126 = arith.constant 0 : index
    %c0_127 = arith.constant 0 : index
    %234 = vector.load %arg24[%c0_126, %c0_127] : memref<1x16xf32, #tpu.memory_space<vmem>>, vector<1x16xf32>
    %cst_128 = arith.constant 9.99999974E-6 : f32
    %235 = vector.broadcast %cst_128 : f32 to vector<1x16xf32>
    %236 = arith.addf %233, %235 : vector<1x16xf32>
    %237 = math.rsqrt %236 : vector<1x16xf32>
    %238 = arith.mulf %234, %237 : vector<1x16xf32>
    %c0_129 = arith.constant 0 : index
    %c0_130 = arith.constant 0 : index
    %239 = vector.load %arg23[%c0_129, %c0_130] : memref<1x16xf32, #tpu.memory_space<vmem>>, vector<1x16xf32>
    %240 = arith.mulf %228, %238 : vector<1x16xf32>
    %241 = arith.subf %239, %240 : vector<1x16xf32>
    %242 = tpu.concatenate %238, %241 in 0 : vector<1x16xf32>, vector<1x16xf32> -> vector<2x16xf32>
    %c0_131 = arith.constant 0 : index
    %c0_132 = arith.constant 0 : index
    %243 = vector.load %arg25[%c0_131, %c0_132] : memref<16x64xf32, #tpu.memory_space<vmem>>, vector<16x64xf32>
    %cst_133 = arith.constant dense<0.000000e+00> : vector<2x64xf32>
    %244 = tpu.matmul %242, %243, %cst_133 {dimension_numbers = #tpu.dot_dimension_numbers<[1], [0], [0], [1], [0, 0, 1, 1], [], []>} : vector<2x16xf32>, vector<16x64xf32>, vector<2x64xf32> -> vector<2x64xf32>
    %245 = vector.extract_strided_slice %244 {offsets = [0, 0], sizes = [1, 64], strides = [1, 1]} : vector<2x64xf32> to vector<1x64xf32>
    %246 = vector.broadcast %245 : vector<1x64xf32> to vector<8x64xf32>
    %247 = arith.mulf %219, %246 : vector<8x64xf32>
    %248 = vector.extract_strided_slice %244 {offsets = [1, 0], sizes = [1, 64], strides = [1, 1]} : vector<2x64xf32> to vector<1x64xf32>
    %249 = vector.broadcast %248 : vector<1x64xf32> to vector<8x64xf32>
    %250 = arith.addf %247, %249 : vector<8x64xf32>
    %251 = arith.truncf %160 : vector<16x64xf32> to vector<16x64xbf16>
    %c0_134 = arith.constant 0 : index
    %c0_135 = arith.constant 0 : index
    %252 = vector.load %arg35[%c0_134, %c0_135] : memref<64x64xbf16, #tpu.memory_space<vmem>>, vector<64x64xbf16>
    %cst_136 = arith.constant dense<0.000000e+00> : vector<16x64xf32>
    %253 = tpu.matmul %251, %252, %cst_136 {dimension_numbers = #tpu.dot_dimension_numbers<[1], [0], [0], [1], [0, 0, 1, 1], [], []>} : vector<16x64xbf16>, vector<64x64xbf16>, vector<16x64xf32> -> vector<16x64xf32>
    %c0_137 = arith.constant 0 : index
    %c0_138 = arith.constant 0 : index
    %254 = vector.load %arg31[%c0_137, %c0_138] : memref<8x16xf32, #tpu.memory_space<vmem>>, vector<8x16xf32>
    %cst_139 = arith.constant dense<0.000000e+00> : vector<8x64xf32>
    %255 = tpu.matmul %254, %253, %cst_139 {dimension_numbers = #tpu.dot_dimension_numbers<[1], [0], [0], [1], [0, 0, 1, 1], [], []>} : vector<8x16xf32>, vector<16x64xf32>, vector<8x64xf32> -> vector<8x64xf32>
    %cst_140 = arith.constant dense<0.000000e+00> : vector<64xf32>
    %256 = vector.multi_reduction <add>, %255, %cst_140 [0] : vector<8x64xf32> to vector<64xf32>
    %257 = vector.shape_cast %256 : vector<64xf32> to vector<1x64xf32>
    %258 = arith.mulf %255, %255 : vector<8x64xf32>
    %cst_141 = arith.constant dense<0.000000e+00> : vector<64xf32>
    %259 = vector.multi_reduction <add>, %258, %cst_141 [0] : vector<8x64xf32> to vector<64xf32>
    %260 = vector.shape_cast %259 : vector<64xf32> to vector<1x64xf32>
    %261 = tpu.concatenate %257, %260 in 0 : vector<1x64xf32>, vector<1x64xf32> -> vector<2x64xf32>
    %c0_142 = arith.constant 0 : index
    %c0_143 = arith.constant 0 : index
    %262 = vector.load %arg34[%c0_142, %c0_143] : memref<64x16xf32, #tpu.memory_space<vmem>>, vector<64x16xf32>
    %cst_144 = arith.constant dense<0.000000e+00> : vector<2x16xf32>
    %263 = tpu.matmul %261, %262, %cst_144 {dimension_numbers = #tpu.dot_dimension_numbers<[1], [0], [0], [1], [0, 0, 1, 1], [], []>} : vector<2x64xf32>, vector<64x16xf32>, vector<2x16xf32> -> vector<2x16xf32>
    %264 = vector.extract_strided_slice %263 {offsets = [0, 0], sizes = [1, 16], strides = [1, 1]} : vector<2x16xf32> to vector<1x16xf32>
    %265 = vector.extract_strided_slice %263 {offsets = [1, 0], sizes = [1, 16], strides = [1, 1]} : vector<2x16xf32> to vector<1x16xf32>
    %266 = arith.mulf %264, %264 : vector<1x16xf32>
    %267 = arith.subf %265, %266 : vector<1x16xf32>
    %cst_145 = arith.constant 0.000000e+00 : f32
    %268 = vector.broadcast %cst_145 : f32 to vector<1x16xf32>
    %269 = arith.maximumf %267, %268 : vector<1x16xf32>
    %c0_146 = arith.constant 0 : index
    %c0_147 = arith.constant 0 : index
    %270 = vector.load %arg32[%c0_146, %c0_147] : memref<1x16xf32, #tpu.memory_space<vmem>>, vector<1x16xf32>
    %cst_148 = arith.constant 9.99999974E-6 : f32
    %271 = vector.broadcast %cst_148 : f32 to vector<1x16xf32>
    %272 = arith.addf %269, %271 : vector<1x16xf32>
    %273 = math.rsqrt %272 : vector<1x16xf32>
    %274 = arith.mulf %270, %273 : vector<1x16xf32>
    %c0_149 = arith.constant 0 : index
    %c0_150 = arith.constant 0 : index
    %275 = vector.load %arg30[%c0_149, %c0_150] : memref<1x16xf32, #tpu.memory_space<vmem>>, vector<1x16xf32>
    %276 = arith.mulf %264, %274 : vector<1x16xf32>
    %277 = arith.subf %275, %276 : vector<1x16xf32>
    %278 = tpu.concatenate %274, %277 in 0 : vector<1x16xf32>, vector<1x16xf32> -> vector<2x16xf32>
    %c0_151 = arith.constant 0 : index
    %c0_152 = arith.constant 0 : index
    %279 = vector.load %arg33[%c0_151, %c0_152] : memref<16x64xf32, #tpu.memory_space<vmem>>, vector<16x64xf32>
    %cst_153 = arith.constant dense<0.000000e+00> : vector<2x64xf32>
    %280 = tpu.matmul %278, %279, %cst_153 {dimension_numbers = #tpu.dot_dimension_numbers<[1], [0], [0], [1], [0, 0, 1, 1], [], []>} : vector<2x16xf32>, vector<16x64xf32>, vector<2x64xf32> -> vector<2x64xf32>
    %281 = vector.extract_strided_slice %280 {offsets = [0, 0], sizes = [1, 64], strides = [1, 1]} : vector<2x64xf32> to vector<1x64xf32>
    %282 = vector.broadcast %281 : vector<1x64xf32> to vector<8x64xf32>
    %283 = arith.mulf %255, %282 : vector<8x64xf32>
    %284 = vector.extract_strided_slice %280 {offsets = [1, 0], sizes = [1, 64], strides = [1, 1]} : vector<2x64xf32> to vector<1x64xf32>
    %285 = vector.broadcast %284 : vector<1x64xf32> to vector<8x64xf32>
    %286 = arith.addf %283, %285 : vector<8x64xf32>
    %287 = arith.addf %250, %286 : vector<8x64xf32>
    %cst_154 = arith.constant 0.000000e+00 : f32
    %288 = vector.broadcast %cst_154 : f32 to vector<8x64xf32>
    %289 = arith.maximumf %287, %288 : vector<8x64xf32>
    %c1_i32_155 = arith.constant 1 : i32
    %290 = tpu.dynamic_rotate %289 by %c1_i32_155 dim 0 : vector<8x64xf32>, i32 -> vector<8x64xf32>
    %c0_156 = arith.constant 0 : index
    %c0_157 = arith.constant 0 : index
    %291 = vector.load %arg42[%c0_156, %c0_157] : memref<8x1xf32, #tpu.memory_space<vmem>>, vector<8x1xf32>
    %292 = vector.broadcast %291 : vector<8x1xf32> to vector<8x64xf32>
    %293 = arith.mulf %290, %292 : vector<8x64xf32>
    %c7_i32_158 = arith.constant 7 : i32
    %294 = tpu.dynamic_rotate %289 by %c7_i32_158 dim 0 : vector<8x64xf32>, i32 -> vector<8x64xf32>
    %c0_159 = arith.constant 0 : index
    %c0_160 = arith.constant 0 : index
    %295 = vector.load %arg41[%c0_159, %c0_160] : memref<8x1xf32, #tpu.memory_space<vmem>>, vector<8x1xf32>
    %296 = vector.broadcast %295 : vector<8x1xf32> to vector<8x64xf32>
    %297 = arith.mulf %294, %296 : vector<8x64xf32>
    %298 = tpu.concatenate %293, %289, %297 in 1 : vector<8x64xf32>, vector<8x64xf32>, vector<8x64xf32> -> vector<8x192xf32>
    %299 = arith.truncf %298 : vector<8x192xf32> to vector<8x192xbf16>
    %c0_161 = arith.constant 0 : index
    %c0_162 = arith.constant 0 : index
    %300 = vector.load %arg43[%c0_161, %c0_162] : memref<192x64xbf16, #tpu.memory_space<vmem>>, vector<192x64xbf16>
    %cst_163 = arith.constant dense<0.000000e+00> : vector<8x64xf32>
    %301 = tpu.matmul %299, %300, %cst_163 {dimension_numbers = #tpu.dot_dimension_numbers<[1], [0], [0], [1], [0, 0, 1, 1], [], []>} : vector<8x192xbf16>, vector<192x64xbf16>, vector<8x64xf32> -> vector<8x64xf32>
    %c0_164 = arith.constant 0 : index
    %c0_165 = arith.constant 0 : index
    %302 = vector.load %arg37[%c0_164, %c0_165] : memref<4x8xf32, #tpu.memory_space<vmem>>, vector<4x8xf32>
    %cst_166 = arith.constant dense<0.000000e+00> : vector<4x64xf32>
    %303 = tpu.matmul %302, %301, %cst_166 {dimension_numbers = #tpu.dot_dimension_numbers<[1], [0], [0], [1], [0, 0, 1, 1], [], []>} : vector<4x8xf32>, vector<8x64xf32>, vector<4x64xf32> -> vector<4x64xf32>
    %cst_167 = arith.constant dense<0.000000e+00> : vector<64xf32>
    %304 = vector.multi_reduction <add>, %303, %cst_167 [0] : vector<4x64xf32> to vector<64xf32>
    %305 = vector.shape_cast %304 : vector<64xf32> to vector<1x64xf32>
    %306 = arith.mulf %303, %303 : vector<4x64xf32>
    %cst_168 = arith.constant dense<0.000000e+00> : vector<64xf32>
    %307 = vector.multi_reduction <add>, %306, %cst_168 [0] : vector<4x64xf32> to vector<64xf32>
    %308 = vector.shape_cast %307 : vector<64xf32> to vector<1x64xf32>
    %309 = tpu.concatenate %305, %308 in 0 : vector<1x64xf32>, vector<1x64xf32> -> vector<2x64xf32>
    %c0_169 = arith.constant 0 : index
    %c0_170 = arith.constant 0 : index
    %310 = vector.load %arg40[%c0_169, %c0_170] : memref<64x32xf32, #tpu.memory_space<vmem>>, vector<64x32xf32>
    %cst_171 = arith.constant dense<0.000000e+00> : vector<2x32xf32>
    %311 = tpu.matmul %309, %310, %cst_171 {dimension_numbers = #tpu.dot_dimension_numbers<[1], [0], [0], [1], [0, 0, 1, 1], [], []>} : vector<2x64xf32>, vector<64x32xf32>, vector<2x32xf32> -> vector<2x32xf32>
    %312 = vector.extract_strided_slice %311 {offsets = [0, 0], sizes = [1, 32], strides = [1, 1]} : vector<2x32xf32> to vector<1x32xf32>
    %313 = vector.extract_strided_slice %311 {offsets = [1, 0], sizes = [1, 32], strides = [1, 1]} : vector<2x32xf32> to vector<1x32xf32>
    %314 = arith.mulf %312, %312 : vector<1x32xf32>
    %315 = arith.subf %313, %314 : vector<1x32xf32>
    %cst_172 = arith.constant 0.000000e+00 : f32
    %316 = vector.broadcast %cst_172 : f32 to vector<1x32xf32>
    %317 = arith.maximumf %315, %316 : vector<1x32xf32>
    %c0_173 = arith.constant 0 : index
    %c0_174 = arith.constant 0 : index
    %318 = vector.load %arg38[%c0_173, %c0_174] : memref<1x32xf32, #tpu.memory_space<vmem>>, vector<1x32xf32>
    %cst_175 = arith.constant 9.99999974E-6 : f32
    %319 = vector.broadcast %cst_175 : f32 to vector<1x32xf32>
    %320 = arith.addf %317, %319 : vector<1x32xf32>
    %321 = math.rsqrt %320 : vector<1x32xf32>
    %322 = arith.mulf %318, %321 : vector<1x32xf32>
    %c0_176 = arith.constant 0 : index
    %c0_177 = arith.constant 0 : index
    %323 = vector.load %arg36[%c0_176, %c0_177] : memref<1x32xf32, #tpu.memory_space<vmem>>, vector<1x32xf32>
    %324 = arith.mulf %312, %322 : vector<1x32xf32>
    %325 = arith.subf %323, %324 : vector<1x32xf32>
    %326 = tpu.concatenate %322, %325 in 0 : vector<1x32xf32>, vector<1x32xf32> -> vector<2x32xf32>
    %c0_178 = arith.constant 0 : index
    %c0_179 = arith.constant 0 : index
    %327 = vector.load %arg39[%c0_178, %c0_179] : memref<32x64xf32, #tpu.memory_space<vmem>>, vector<32x64xf32>
    %cst_180 = arith.constant dense<0.000000e+00> : vector<2x64xf32>
    %328 = tpu.matmul %326, %327, %cst_180 {dimension_numbers = #tpu.dot_dimension_numbers<[1], [0], [0], [1], [0, 0, 1, 1], [], []>} : vector<2x32xf32>, vector<32x64xf32>, vector<2x64xf32> -> vector<2x64xf32>
    %329 = vector.extract_strided_slice %328 {offsets = [0, 0], sizes = [1, 64], strides = [1, 1]} : vector<2x64xf32> to vector<1x64xf32>
    %330 = vector.broadcast %329 : vector<1x64xf32> to vector<4x64xf32>
    %331 = arith.mulf %303, %330 : vector<4x64xf32>
    %332 = vector.extract_strided_slice %328 {offsets = [1, 0], sizes = [1, 64], strides = [1, 1]} : vector<2x64xf32> to vector<1x64xf32>
    %333 = vector.broadcast %332 : vector<1x64xf32> to vector<4x64xf32>
    %334 = arith.addf %331, %333 : vector<4x64xf32>
    %cst_181 = arith.constant 0.000000e+00 : f32
    %335 = vector.broadcast %cst_181 : f32 to vector<4x64xf32>
    %336 = arith.maximumf %334, %335 : vector<4x64xf32>
    %c0_182 = arith.constant 0 : index
    %c0_183 = arith.constant 0 : index
    %c0_184 = arith.constant 0 : index
    %337 = vector.load %arg48[%c0_182, %c0_183, %c0_184] : memref<2x4x4xf32, #tpu.memory_space<vmem>>, vector<1x4x4xf32>
    %338 = vector.shape_cast %337 : vector<1x4x4xf32> to vector<4x4xf32>
    %cst_185 = arith.constant dense<0.000000e+00> : vector<4x64xf32>
    %339 = tpu.matmul %338, %336, %cst_185 {dimension_numbers = #tpu.dot_dimension_numbers<[1], [0], [0], [1], [0, 0, 1, 1], [], []>} : vector<4x4xf32>, vector<4x64xf32>, vector<4x64xf32> -> vector<4x64xf32>
    %c1 = arith.constant 1 : index
    %c0_186 = arith.constant 0 : index
    %c0_187 = arith.constant 0 : index
    %340 = vector.load %arg48[%c1, %c0_186, %c0_187] : memref<2x4x4xf32, #tpu.memory_space<vmem>>, vector<1x4x4xf32>
    %341 = vector.shape_cast %340 : vector<1x4x4xf32> to vector<4x4xf32>
    %cst_188 = arith.constant dense<0.000000e+00> : vector<4x64xf32>
    %342 = tpu.matmul %341, %336, %cst_188 {dimension_numbers = #tpu.dot_dimension_numbers<[1], [0], [0], [1], [0, 0, 1, 1], [], []>} : vector<4x4xf32>, vector<4x64xf32>, vector<4x64xf32> -> vector<4x64xf32>
    %343 = tpu.concatenate %339, %336, %342 in 1 : vector<4x64xf32>, vector<4x64xf32>, vector<4x64xf32> -> vector<4x192xf32>
    %344 = arith.truncf %343 : vector<4x192xf32> to vector<4x192xbf16>
    %c0_189 = arith.constant 0 : index
    %c0_190 = arith.constant 0 : index
    %345 = vector.load %arg49[%c0_189, %c0_190] : memref<192x64xbf16, #tpu.memory_space<vmem>>, vector<192x64xbf16>
    %cst_191 = arith.constant dense<0.000000e+00> : vector<4x64xf32>
    %346 = tpu.matmul %344, %345, %cst_191 {dimension_numbers = #tpu.dot_dimension_numbers<[1], [0], [0], [1], [0, 0, 1, 1], [], []>} : vector<4x192xbf16>, vector<192x64xbf16>, vector<4x64xf32> -> vector<4x64xf32>
    %cst_192 = arith.constant dense<0.000000e+00> : vector<64xf32>
    %347 = vector.multi_reduction <add>, %346, %cst_192 [0] : vector<4x64xf32> to vector<64xf32>
    %348 = vector.shape_cast %347 : vector<64xf32> to vector<1x64xf32>
    %349 = arith.mulf %346, %346 : vector<4x64xf32>
    %cst_193 = arith.constant dense<0.000000e+00> : vector<64xf32>
    %350 = vector.multi_reduction <add>, %349, %cst_193 [0] : vector<4x64xf32> to vector<64xf32>
    %351 = vector.shape_cast %350 : vector<64xf32> to vector<1x64xf32>
    %352 = tpu.concatenate %348, %351 in 0 : vector<1x64xf32>, vector<1x64xf32> -> vector<2x64xf32>
    %c0_194 = arith.constant 0 : index
    %c0_195 = arith.constant 0 : index
    %353 = vector.load %arg47[%c0_194, %c0_195] : memref<64x32xf32, #tpu.memory_space<vmem>>, vector<64x32xf32>
    %cst_196 = arith.constant dense<0.000000e+00> : vector<2x32xf32>
    %354 = tpu.matmul %352, %353, %cst_196 {dimension_numbers = #tpu.dot_dimension_numbers<[1], [0], [0], [1], [0, 0, 1, 1], [], []>} : vector<2x64xf32>, vector<64x32xf32>, vector<2x32xf32> -> vector<2x32xf32>
    %355 = vector.extract_strided_slice %354 {offsets = [0, 0], sizes = [1, 32], strides = [1, 1]} : vector<2x32xf32> to vector<1x32xf32>
    %356 = vector.extract_strided_slice %354 {offsets = [1, 0], sizes = [1, 32], strides = [1, 1]} : vector<2x32xf32> to vector<1x32xf32>
    %357 = arith.mulf %355, %355 : vector<1x32xf32>
    %358 = arith.subf %356, %357 : vector<1x32xf32>
    %cst_197 = arith.constant 0.000000e+00 : f32
    %359 = vector.broadcast %cst_197 : f32 to vector<1x32xf32>
    %360 = arith.maximumf %358, %359 : vector<1x32xf32>
    %c0_198 = arith.constant 0 : index
    %c0_199 = arith.constant 0 : index
    %361 = vector.load %arg45[%c0_198, %c0_199] : memref<1x32xf32, #tpu.memory_space<vmem>>, vector<1x32xf32>
    %cst_200 = arith.constant 9.99999974E-6 : f32
    %362 = vector.broadcast %cst_200 : f32 to vector<1x32xf32>
    %363 = arith.addf %360, %362 : vector<1x32xf32>
    %364 = math.rsqrt %363 : vector<1x32xf32>
    %365 = arith.mulf %361, %364 : vector<1x32xf32>
    %c0_201 = arith.constant 0 : index
    %c0_202 = arith.constant 0 : index
    %366 = vector.load %arg44[%c0_201, %c0_202] : memref<1x32xf32, #tpu.memory_space<vmem>>, vector<1x32xf32>
    %367 = arith.mulf %355, %365 : vector<1x32xf32>
    %368 = arith.subf %366, %367 : vector<1x32xf32>
    %369 = tpu.concatenate %365, %368 in 0 : vector<1x32xf32>, vector<1x32xf32> -> vector<2x32xf32>
    %c0_203 = arith.constant 0 : index
    %c0_204 = arith.constant 0 : index
    %370 = vector.load %arg46[%c0_203, %c0_204] : memref<32x64xf32, #tpu.memory_space<vmem>>, vector<32x64xf32>
    %cst_205 = arith.constant dense<0.000000e+00> : vector<2x64xf32>
    %371 = tpu.matmul %369, %370, %cst_205 {dimension_numbers = #tpu.dot_dimension_numbers<[1], [0], [0], [1], [0, 0, 1, 1], [], []>} : vector<2x32xf32>, vector<32x64xf32>, vector<2x64xf32> -> vector<2x64xf32>
    %372 = vector.extract_strided_slice %371 {offsets = [0, 0], sizes = [1, 64], strides = [1, 1]} : vector<2x64xf32> to vector<1x64xf32>
    %373 = vector.broadcast %372 : vector<1x64xf32> to vector<4x64xf32>
    %374 = arith.mulf %346, %373 : vector<4x64xf32>
    %375 = vector.extract_strided_slice %371 {offsets = [1, 0], sizes = [1, 64], strides = [1, 1]} : vector<2x64xf32> to vector<1x64xf32>
    %376 = vector.broadcast %375 : vector<1x64xf32> to vector<4x64xf32>
    %377 = arith.addf %374, %376 : vector<4x64xf32>
    %378 = arith.truncf %289 : vector<8x64xf32> to vector<8x64xbf16>
    %c0_206 = arith.constant 0 : index
    %c0_207 = arith.constant 0 : index
    %379 = vector.load %arg55[%c0_206, %c0_207] : memref<64x64xbf16, #tpu.memory_space<vmem>>, vector<64x64xbf16>
    %cst_208 = arith.constant dense<0.000000e+00> : vector<8x64xf32>
    %380 = tpu.matmul %378, %379, %cst_208 {dimension_numbers = #tpu.dot_dimension_numbers<[1], [0], [0], [1], [0, 0, 1, 1], [], []>} : vector<8x64xbf16>, vector<64x64xbf16>, vector<8x64xf32> -> vector<8x64xf32>
    %c0_209 = arith.constant 0 : index
    %c0_210 = arith.constant 0 : index
    %381 = vector.load %arg51[%c0_209, %c0_210] : memref<4x8xf32, #tpu.memory_space<vmem>>, vector<4x8xf32>
    %cst_211 = arith.constant dense<0.000000e+00> : vector<4x64xf32>
    %382 = tpu.matmul %381, %380, %cst_211 {dimension_numbers = #tpu.dot_dimension_numbers<[1], [0], [0], [1], [0, 0, 1, 1], [], []>} : vector<4x8xf32>, vector<8x64xf32>, vector<4x64xf32> -> vector<4x64xf32>
    %cst_212 = arith.constant dense<0.000000e+00> : vector<64xf32>
    %383 = vector.multi_reduction <add>, %382, %cst_212 [0] : vector<4x64xf32> to vector<64xf32>
    %384 = vector.shape_cast %383 : vector<64xf32> to vector<1x64xf32>
    %385 = arith.mulf %382, %382 : vector<4x64xf32>
    %cst_213 = arith.constant dense<0.000000e+00> : vector<64xf32>
    %386 = vector.multi_reduction <add>, %385, %cst_213 [0] : vector<4x64xf32> to vector<64xf32>
    %387 = vector.shape_cast %386 : vector<64xf32> to vector<1x64xf32>
    %388 = tpu.concatenate %384, %387 in 0 : vector<1x64xf32>, vector<1x64xf32> -> vector<2x64xf32>
    %c0_214 = arith.constant 0 : index
    %c0_215 = arith.constant 0 : index
    %389 = vector.load %arg54[%c0_214, %c0_215] : memref<64x32xf32, #tpu.memory_space<vmem>>, vector<64x32xf32>
    %cst_216 = arith.constant dense<0.000000e+00> : vector<2x32xf32>
    %390 = tpu.matmul %388, %389, %cst_216 {dimension_numbers = #tpu.dot_dimension_numbers<[1], [0], [0], [1], [0, 0, 1, 1], [], []>} : vector<2x64xf32>, vector<64x32xf32>, vector<2x32xf32> -> vector<2x32xf32>
    %391 = vector.extract_strided_slice %390 {offsets = [0, 0], sizes = [1, 32], strides = [1, 1]} : vector<2x32xf32> to vector<1x32xf32>
    %392 = vector.extract_strided_slice %390 {offsets = [1, 0], sizes = [1, 32], strides = [1, 1]} : vector<2x32xf32> to vector<1x32xf32>
    %393 = arith.mulf %391, %391 : vector<1x32xf32>
    %394 = arith.subf %392, %393 : vector<1x32xf32>
    %cst_217 = arith.constant 0.000000e+00 : f32
    %395 = vector.broadcast %cst_217 : f32 to vector<1x32xf32>
    %396 = arith.maximumf %394, %395 : vector<1x32xf32>
    %c0_218 = arith.constant 0 : index
    %c0_219 = arith.constant 0 : index
    %397 = vector.load %arg52[%c0_218, %c0_219] : memref<1x32xf32, #tpu.memory_space<vmem>>, vector<1x32xf32>
    %cst_220 = arith.constant 9.99999974E-6 : f32
    %398 = vector.broadcast %cst_220 : f32 to vector<1x32xf32>
    %399 = arith.addf %396, %398 : vector<1x32xf32>
    %400 = math.rsqrt %399 : vector<1x32xf32>
    %401 = arith.mulf %397, %400 : vector<1x32xf32>
    %c0_221 = arith.constant 0 : index
    %c0_222 = arith.constant 0 : index
    %402 = vector.load %arg50[%c0_221, %c0_222] : memref<1x32xf32, #tpu.memory_space<vmem>>, vector<1x32xf32>
    %403 = arith.mulf %391, %401 : vector<1x32xf32>
    %404 = arith.subf %402, %403 : vector<1x32xf32>
    %405 = tpu.concatenate %401, %404 in 0 : vector<1x32xf32>, vector<1x32xf32> -> vector<2x32xf32>
    %c0_223 = arith.constant 0 : index
    %c0_224 = arith.constant 0 : index
    %406 = vector.load %arg53[%c0_223, %c0_224] : memref<32x64xf32, #tpu.memory_space<vmem>>, vector<32x64xf32>
    %cst_225 = arith.constant dense<0.000000e+00> : vector<2x64xf32>
    %407 = tpu.matmul %405, %406, %cst_225 {dimension_numbers = #tpu.dot_dimension_numbers<[1], [0], [0], [1], [0, 0, 1, 1], [], []>} : vector<2x32xf32>, vector<32x64xf32>, vector<2x64xf32> -> vector<2x64xf32>
    %408 = vector.extract_strided_slice %407 {offsets = [0, 0], sizes = [1, 64], strides = [1, 1]} : vector<2x64xf32> to vector<1x64xf32>
    %409 = vector.broadcast %408 : vector<1x64xf32> to vector<4x64xf32>
    %410 = arith.mulf %382, %409 : vector<4x64xf32>
    %411 = vector.extract_strided_slice %407 {offsets = [1, 0], sizes = [1, 64], strides = [1, 1]} : vector<2x64xf32> to vector<1x64xf32>
    %412 = vector.broadcast %411 : vector<1x64xf32> to vector<4x64xf32>
    %413 = arith.addf %410, %412 : vector<4x64xf32>
    %414 = arith.addf %377, %413 : vector<4x64xf32>
    %cst_226 = arith.constant 0.000000e+00 : f32
    %415 = vector.broadcast %cst_226 : f32 to vector<4x64xf32>
    %416 = arith.maximumf %414, %415 : vector<4x64xf32>
    %c0_227 = arith.constant 0 : index
    %c0_228 = arith.constant 0 : index
    %417 = vector.load %arg65[%c0_227, %c0_228] : memref<2x4xf32, #tpu.memory_space<vmem>>, vector<2x4xf32>
    %cst_229 = arith.constant dense<0.000000e+00> : vector<2x64xf32>
    %418 = tpu.matmul %417, %416, %cst_229 {dimension_numbers = #tpu.dot_dimension_numbers<[1], [0], [0], [1], [0, 0, 1, 1], [], []>} : vector<2x4xf32>, vector<4x64xf32>, vector<2x64xf32> -> vector<2x64xf32>
    %c0_230 = arith.constant 0 : index
    %c0_231 = arith.constant 0 : index
    %419 = vector.load %arg63[%c0_230, %c0_231] : memref<64x10xf32, #tpu.memory_space<vmem>>, vector<64x10xf32>
    %cst_232 = arith.constant dense<0.000000e+00> : vector<2x10xf32>
    %420 = tpu.matmul %418, %419, %cst_232 {dimension_numbers = #tpu.dot_dimension_numbers<[1], [0], [0], [1], [0, 0, 1, 1], [], []>} : vector<2x64xf32>, vector<64x10xf32>, vector<2x10xf32> -> vector<2x10xf32>
    %c0_233 = arith.constant 0 : index
    %c0_234 = arith.constant 0 : index
    %421 = vector.load %arg64[%c0_233, %c0_234] : memref<1x10xf32, #tpu.memory_space<vmem>>, vector<1x10xf32>
    %422 = vector.broadcast %421 : vector<1x10xf32> to vector<2x10xf32>
    %423 = arith.addf %420, %422 : vector<2x10xf32>
    %c0_235 = arith.constant 0 : index
    %c0_236 = arith.constant 0 : index
    %424 = vector.load %arg72[%c0_235, %c0_236] : memref<2x10xf32, #tpu.memory_space<vmem>>, vector<2x10xf32>
    tpu.vector_store %arg72[%c0_235, %c0_236], %423 {strides = array<i32>} : memref<2x10xf32, #tpu.memory_space<vmem>>, vector<2x10xf32>,
    return
  }
}

</mosaic_0001>

<llo_original>
// kernel: resnet8_forward.1
$region0: #{resnet8_forward.1}
  #allocation0 [shape = 'u32[]', space=smem, size = 0x4, offset = 0x4, fixed_abs, tag = 'smem constant byte address 0x4 - core index']
  #allocation1 [shape = 'u32[144,128]{1,0:T(1,128)}', space=vmem, size = 0x12000, scoped, tag = 'internal scratch']
  %s0 = inlined_call_operand.smem [shape: u32[73], index: -1, kind: input, shape index: {}]
  %s1 = sld [smem:[%s0]]
  %s2 = scalar_lea.smem %s0, 1
  %s3 = sld [smem:[%s2]]
  %s4 = scalar_lea.smem %s0, 2
  %s5 = sld [smem:[%s4]]
  %s6 = scalar_lea.smem %s0, 3
  %s7 = sld [smem:[%s6]]
  %s8 = scalar_lea.smem %s0, 4
  %s9 = sld [smem:[%s8]]
  %s10 = scalar_lea.smem %s0, 5
  %s11 = sld [smem:[%s10]]
  %s12 = scalar_lea.smem %s0, 6
  %s13 = sld [smem:[%s12]]
  %s14 = scalar_lea.smem %s0, 7
  %s15 = sld [smem:[%s14]]
  %s16 = scalar_lea.smem %s0, 8
  %s17 = sld [smem:[%s16]]
  %s18 = scalar_lea.smem %s0, 9
  %s19 = sld [smem:[%s18]]
  %s20 = scalar_lea.smem %s0, 10
  %s21 = sld [smem:[%s20]]
  %s22 = scalar_lea.smem %s0, 11
  %s23 = sld [smem:[%s22]]
  %s24 = scalar_lea.smem %s0, 12
  %s25 = sld [smem:[%s24]]
  %s26 = scalar_lea.smem %s0, 13
  %s27 = sld [smem:[%s26]]
  %s28 = scalar_lea.smem %s0, 14
  %s29 = sld [smem:[%s28]]
  %s30 = scalar_lea.smem %s0, 15
  %s31 = sld [smem:[%s30]]
  %s32 = scalar_lea.smem %s0, 16
  %s33 = sld [smem:[%s32]]
  %s34 = scalar_lea.smem %s0, 17
  %s35 = sld [smem:[%s34]]
  %s36 = scalar_lea.smem %s0, 18
  %s37 = sld [smem:[%s36]]
  %s38 = scalar_lea.smem %s0, 19
  %s39 = sld [smem:[%s38]]
  %s40 = scalar_lea.smem %s0, 20
  %s41 = sld [smem:[%s40]]
  %s42 = scalar_lea.smem %s0, 21
  %s43 = sld [smem:[%s42]]
  %s44 = scalar_lea.smem %s0, 22
  %s45 = sld [smem:[%s44]]
  %s46 = scalar_lea.smem %s0, 23
  %s47 = sld [smem:[%s46]]
  %s48 = scalar_lea.smem %s0, 24
  %s49 = sld [smem:[%s48]]
  %s50 = scalar_lea.smem %s0, 25
  %s51 = sld [smem:[%s50]]
  %s52 = scalar_lea.smem %s0, 26
  %s53 = sld [smem:[%s52]]
  %s54 = scalar_lea.smem %s0, 27
  %s55 = sld [smem:[%s54]]
  %s56 = scalar_lea.smem %s0, 28
  %s57 = sld [smem:[%s56]]
  %s58 = scalar_lea.smem %s0, 29
  %s59 = sld [smem:[%s58]]
  %s60 = scalar_lea.smem %s0, 30
  %s61 = sld [smem:[%s60]]
  %s62 = scalar_lea.smem %s0, 31
  %s63 = sld [smem:[%s62]]
  %s64 = scalar_lea.smem %s0, 32
  %s65 = sld [smem:[%s64]]
  %s66 = scalar_lea.smem %s0, 33
  %s67 = sld [smem:[%s66]]
  %s68 = scalar_lea.smem %s0, 34
  %s69 = sld [smem:[%s68]]
  %s70 = scalar_lea.smem %s0, 35
  %s71 = sld [smem:[%s70]]
  %s72 = scalar_lea.smem %s0, 36
  %s73 = sld [smem:[%s72]]
  %s74 = scalar_lea.smem %s0, 37
  %s75 = sld [smem:[%s74]]
  %s76 = scalar_lea.smem %s0, 38
  %s77 = sld [smem:[%s76]]
  %s78 = scalar_lea.smem %s0, 39
  %s79 = sld [smem:[%s78]]
  %s80 = scalar_lea.smem %s0, 40
  %s81 = sld [smem:[%s80]]
  %s82 = scalar_lea.smem %s0, 41
  %s83 = sld [smem:[%s82]]
  %s84 = scalar_lea.smem %s0, 42
  %s85 = sld [smem:[%s84]]
  %s86 = scalar_lea.smem %s0, 43
  %s87 = sld [smem:[%s86]]
  %s88 = scalar_lea.smem %s0, 44
  %s89 = sld [smem:[%s88]]
  %s90 = scalar_lea.smem %s0, 45
  %s91 = sld [smem:[%s90]]
  %s92 = scalar_lea.smem %s0, 46
  %s93 = sld [smem:[%s92]]
  %s94 = scalar_lea.smem %s0, 47
  %s95 = sld [smem:[%s94]]
  %s96 = scalar_lea.smem %s0, 48
  %s97 = sld [smem:[%s96]]
  %s98 = scalar_lea.smem %s0, 49
  %s99 = sld [smem:[%s98]]
  %s100 = scalar_lea.smem %s0, 50
  %s101 = sld [smem:[%s100]]
  %s102 = scalar_lea.smem %s0, 51
  %s103 = sld [smem:[%s102]]
  %s104 = scalar_lea.smem %s0, 52
  %s105 = sld [smem:[%s104]]
  %s106 = scalar_lea.smem %s0, 53
  %s107 = sld [smem:[%s106]]
  %s108 = scalar_lea.smem %s0, 54
  %s109 = sld [smem:[%s108]]
  %s110 = scalar_lea.smem %s0, 55
  %s111 = sld [smem:[%s110]]
  %s112 = scalar_lea.smem %s0, 56
  %s113 = sld [smem:[%s112]]
  %s114 = scalar_lea.smem %s0, 57
  %s115 = sld [smem:[%s114]]
  %s116 = scalar_lea.smem %s0, 58
  %s117 = sld [smem:[%s116]]
  %s118 = scalar_lea.smem %s0, 59
  %s119 = sld [smem:[%s118]]
  %s120 = scalar_lea.smem %s0, 60
  %s121 = sld [smem:[%s120]]
  %s122 = scalar_lea.smem %s0, 61
  %s123 = sld [smem:[%s122]]
  %s124 = scalar_lea.smem %s0, 62
  %s125 = sld [smem:[%s124]]
  %s126 = scalar_lea.smem %s0, 63
  %s127 = sld [smem:[%s126]]
  %s128 = scalar_lea.smem %s0, 64
  %s129 = sld [smem:[%s128]]
  %s130 = scalar_lea.smem %s0, 65
  %s131 = sld [smem:[%s130]]
  %s132 = scalar_lea.smem %s0, 66
  %s133 = sld [smem:[%s132]]
  %s134 = scalar_lea.smem %s0, 67
  %s135 = sld [smem:[%s134]]
  %s136 = scalar_lea.smem %s0, 68
  %s137 = sld [smem:[%s136]]
  %s138 = scalar_lea.smem %s0, 69
  %s139 = sld [smem:[%s138]]
  %s140 = scalar_lea.smem %s0, 70
  %s141 = sld [smem:[%s140]]
  %s142 = scalar_lea.smem %s0, 71
  %s143 = sld [smem:[%s142]]
  %s144 = scalar_lea.smem %s0, 72
  %s145 = sld [smem:[%s144]]
  %s146 = sld [smem:[#allocation0]]
  $region314: #{resnet8_forward.1} parent=0
    _
  %s148 = ssub.s32 1, %s146
  %s149 = scalar_select 0, %s148, %s146
  $region1: #{resnet8_forward.1} parent=0
    #allocation2 [shape = 'u8[512]{0}', space=vmem, size = 0x400, scoped, tag = 'input window, operand 57, single buffered']
    #allocation3 [shape = 's32[1]{0}', space=sflag, size = 0x4, scoped, tag = 'scoped memory for resnet8_forward.1']
    #allocation4 [shape = 's32[1]{0}', space=sflag, size = 0x4, scoped, tag = 'scoped memory for resnet8_forward.1']
    #allocation5 [shape = 'u8[512]{0}', space=vmem, size = 0x400, scoped, tag = 'input window, operand 64, single buffered']
    #allocation6 [shape = 's32[1]{0}', space=sflag, size = 0x4, scoped, tag = 'scoped memory for resnet8_forward.1']
    #allocation7 [shape = 'u8[512]{0}', space=vmem, size = 0x400, scoped, tag = 'input window, operand 69, single buffered']
    #allocation8 [shape = 'u8[512]{0}', space=vmem, size = 0x400, scoped, tag = 'input window, operand 70, single buffered']
    #allocation9 [shape = 's32[1]{0}', space=sflag, size = 0x4, scoped, tag = 'scoped memory for resnet8_forward.1']
    #allocation10 [shape = 'u8[1024]{0}', space=vmem, size = 0x400, scoped, tag = 'output window, operand 0, single buffered']
    %150 = vsyncpa [#allocation3], 0
    %151 = vsyncpa [#allocation6], 0
    %152 = vsyncpa [#allocation9], 0
    %153 = vsyncpa [#allocation4], 0
    // Predicated region
    $region2: #{resnet8_forward.1} parent=1 // pred_check
      _
    $region3: #{resnet8_forward.1} parent=1 // pred_check_branch
      %155 = sbr.rel (0) target = $region5
    $region4: #{resnet8_forward.1} parent=1 // pred_region
      _
    $region5: #{resnet8_forward.1} parent=1 // pred_fallthru
      _
    // Predicated region
    $region6: #{resnet8_forward.1} parent=1 // pred_check
      _
    $region7: #{resnet8_forward.1} parent=1 // pred_check_branch
      %157 = sbr.rel (0) target = $region9
    $region8: #{resnet8_forward.1} parent=1 // pred_region
      _
    $region9: #{resnet8_forward.1} parent=1 // pred_fallthru
      _
    // Predicated region
    $region10: #{resnet8_forward.1} parent=1 // pred_check
      _
    $region11: #{resnet8_forward.1} parent=1 // pred_check_branch
      %159 = sbr.rel (0) target = $region13
    $region12: #{resnet8_forward.1} parent=1 // pred_region
      _
    $region13: #{resnet8_forward.1} parent=1 // pred_fallthru
      _
    // Predicated region
    $region14: #{resnet8_forward.1} parent=1 // pred_check
      _
    $region15: #{resnet8_forward.1} parent=1 // pred_check_branch
      %161 = sbr.rel (0) target = $region17
    $region16: #{resnet8_forward.1} parent=1 // pred_region
      _
    $region17: #{resnet8_forward.1} parent=1 // pred_fallthru
      _
    // Predicated region
    $region18: #{resnet8_forward.1} parent=1 // pred_check
      _
    $region19: #{resnet8_forward.1} parent=1 // pred_check_branch
      %163 = sbr.rel (0) target = $region21
    $region20: #{resnet8_forward.1} parent=1 // pred_region
      _
    $region21: #{resnet8_forward.1} parent=1 // pred_fallthru
      _
    // Predicated region
    $region22: #{resnet8_forward.1} parent=1 // pred_check
      _
    $region23: #{resnet8_forward.1} parent=1 // pred_check_branch
      %165 = sbr.rel (0) target = $region25
    $region24: #{resnet8_forward.1} parent=1 // pred_region
      _
    $region25: #{resnet8_forward.1} parent=1 // pred_fallthru
      _
    // Predicated region
    $region26: #{resnet8_forward.1} parent=1 // pred_check
      _
    $region27: #{resnet8_forward.1} parent=1 // pred_check_branch
      %167 = sbr.rel (0) target = $region29
    $region28: #{resnet8_forward.1} parent=1 // pred_region
      _
    $region29: #{resnet8_forward.1} parent=1 // pred_fallthru
      _
    // Predicated region
    $region30: #{resnet8_forward.1} parent=1 // pred_check
      _
    $region31: #{resnet8_forward.1} parent=1 // pred_check_branch
      %169 = sbr.rel (0) target = $region33
    $region32: #{resnet8_forward.1} parent=1 // pred_region
      _
    $region33: #{resnet8_forward.1} parent=1 // pred_fallthru
      _
    // Predicated region
    $region34: #{resnet8_forward.1} parent=1 // pred_check
      _
    $region35: #{resnet8_forward.1} parent=1 // pred_check_branch
      %171 = sbr.rel (0) target = $region37
    $region36: #{resnet8_forward.1} parent=1 // pred_region
      _
    $region37: #{resnet8_forward.1} parent=1 // pred_fallthru
      _
    // Predicated region
    $region38: #{resnet8_forward.1} parent=1 // pred_check
      _
    $region39: #{resnet8_forward.1} parent=1 // pred_check_branch
      %173 = sbr.rel (0) target = $region41
    $region40: #{resnet8_forward.1} parent=1 // pred_region
      _
    $region41: #{resnet8_forward.1} parent=1 // pred_fallthru
      _
    // Predicated region
    $region42: #{resnet8_forward.1} parent=1 // pred_check
      _
    $region43: #{resnet8_forward.1} parent=1 // pred_check_branch
      %175 = sbr.rel (0) target = $region45
    $region44: #{resnet8_forward.1} parent=1 // pred_region
      _
    $region45: #{resnet8_forward.1} parent=1 // pred_fallthru
      _
    // Predicated region
    $region46: #{resnet8_forward.1} parent=1 // pred_check
      _
    $region47: #{resnet8_forward.1} parent=1 // pred_check_branch
      %177 = sbr.rel (0) target = $region49
    $region48: #{resnet8_forward.1} parent=1 // pred_region
      _
    $region49: #{resnet8_forward.1} parent=1 // pred_fallthru
      _
    // Predicated region
    $region50: #{resnet8_forward.1} parent=1 // pred_check
      _
    $region51: #{resnet8_forward.1} parent=1 // pred_check_branch
      %179 = sbr.rel (0) target = $region53
    $region52: #{resnet8_forward.1} parent=1 // pred_region
      _
    $region53: #{resnet8_forward.1} parent=1 // pred_fallthru
      _
    // Predicated region
    $region54: #{resnet8_forward.1} parent=1 // pred_check
      _
    $region55: #{resnet8_forward.1} parent=1 // pred_check_branch
      %181 = sbr.rel (0) target = $region57
    $region56: #{resnet8_forward.1} parent=1 // pred_region
      _
    $region57: #{resnet8_forward.1} parent=1 // pred_fallthru
      _
    // Predicated region
    $region58: #{resnet8_forward.1} parent=1 // pred_check
      _
    $region59: #{resnet8_forward.1} parent=1 // pred_check_branch
      %183 = sbr.rel (0) target = $region61
    $region60: #{resnet8_forward.1} parent=1 // pred_region
      _
    $region61: #{resnet8_forward.1} parent=1 // pred_fallthru
      _
    // Predicated region
    $region62: #{resnet8_forward.1} parent=1 // pred_check
      _
    $region63: #{resnet8_forward.1} parent=1 // pred_check_branch
      %185 = sbr.rel (0) target = $region65
    $region64: #{resnet8_forward.1} parent=1 // pred_region
      _
    $region65: #{resnet8_forward.1} parent=1 // pred_fallthru
      _
    // Predicated region
    $region66: #{resnet8_forward.1} parent=1 // pred_check
      _
    $region67: #{resnet8_forward.1} parent=1 // pred_check_branch
      %187 = sbr.rel (0) target = $region69
    $region68: #{resnet8_forward.1} parent=1 // pred_region
      _
    $region69: #{resnet8_forward.1} parent=1 // pred_fallthru
      _
    // Predicated region
    $region70: #{resnet8_forward.1} parent=1 // pred_check
      _
    $region71: #{resnet8_forward.1} parent=1 // pred_check_branch
      %189 = sbr.rel (0) target = $region73
    $region72: #{resnet8_forward.1} parent=1 // pred_region
      _
    $region73: #{resnet8_forward.1} parent=1 // pred_fallthru
      _
    // Predicated region
    $region74: #{resnet8_forward.1} parent=1 // pred_check
      _
    $region75: #{resnet8_forward.1} parent=1 // pred_check_branch
      %191 = sbr.rel (0) target = $region77
    $region76: #{resnet8_forward.1} parent=1 // pred_region
      _
    $region77: #{resnet8_forward.1} parent=1 // pred_fallthru
      _
    // Predicated region
    $region78: #{resnet8_forward.1} parent=1 // pred_check
      _
    $region79: #{resnet8_forward.1} parent=1 // pred_check_branch
      %193 = sbr.rel (0) target = $region81
    $region80: #{resnet8_forward.1} parent=1 // pred_region
      _
    $region81: #{resnet8_forward.1} parent=1 // pred_fallthru
      _
    // Predicated region
    $region82: #{resnet8_forward.1} parent=1 // pred_check
      _
    $region83: #{resnet8_forward.1} parent=1 // pred_check_branch
      %195 = sbr.rel (0) target = $region85
    $region84: #{resnet8_forward.1} parent=1 // pred_region
      _
    $region85: #{resnet8_forward.1} parent=1 // pred_fallthru
      _
    // Predicated region
    $region86: #{resnet8_forward.1} parent=1 // pred_check
      _
    $region87: #{resnet8_forward.1} parent=1 // pred_check_branch
      %197 = sbr.rel (0) target = $region89
    $region88: #{resnet8_forward.1} parent=1 // pred_region
      _
    $region89: #{resnet8_forward.1} parent=1 // pred_fallthru
      _
    // Predicated region
    $region90: #{resnet8_forward.1} parent=1 // pred_check
      _
    $region91: #{resnet8_forward.1} parent=1 // pred_check_branch
      %199 = sbr.rel (0) target = $region93
    $region92: #{resnet8_forward.1} parent=1 // pred_region
      _
    $region93: #{resnet8_forward.1} parent=1 // pred_fallthru
      _
    // Predicated region
    $region94: #{resnet8_forward.1} parent=1 // pred_check
      _
    $region95: #{resnet8_forward.1} parent=1 // pred_check_branch
      %201 = sbr.rel (0) target = $region97
    $region96: #{resnet8_forward.1} parent=1 // pred_region
      _
    $region97: #{resnet8_forward.1} parent=1 // pred_fallthru
      _
    // Predicated region
    $region98: #{resnet8_forward.1} parent=1 // pred_check
      _
    $region99: #{resnet8_forward.1} parent=1 // pred_check_branch
      %203 = sbr.rel (0) target = $region101
    $region100: #{resnet8_forward.1} parent=1 // pred_region
      _
    $region101: #{resnet8_forward.1} parent=1 // pred_fallthru
      _
    // Predicated region
    $region102: #{resnet8_forward.1} parent=1 // pred_check
      _
    $region103: #{resnet8_forward.1} parent=1 // pred_check_branch
      %205 = sbr.rel (0) target = $region105
    $region104: #{resnet8_forward.1} parent=1 // pred_region
      _
    $region105: #{resnet8_forward.1} parent=1 // pred_fallthru
      _
    // Predicated region
    $region106: #{resnet8_forward.1} parent=1 // pred_check
      _
    $region107: #{resnet8_forward.1} parent=1 // pred_check_branch
      %207 = sbr.rel (0) target = $region109
    $region108: #{resnet8_forward.1} parent=1 // pred_region
      _
    $region109: #{resnet8_forward.1} parent=1 // pred_fallthru
      _
    // Predicated region
    $region110: #{resnet8_forward.1} parent=1 // pred_check
      _
    $region111: #{resnet8_forward.1} parent=1 // pred_check_branch
      %209 = sbr.rel (0) target = $region113
    $region112: #{resnet8_forward.1} parent=1 // pred_region
      _
    $region113: #{resnet8_forward.1} parent=1 // pred_fallthru
      _
    // Predicated region
    $region114: #{resnet8_forward.1} parent=1 // pred_check
      _
    $region115: #{resnet8_forward.1} parent=1 // pred_check_branch
      %211 = sbr.rel (0) target = $region117
    $region116: #{resnet8_forward.1} parent=1 // pred_region
      _
    $region117: #{resnet8_forward.1} parent=1 // pred_fallthru
      _
    // Predicated region
    $region118: #{resnet8_forward.1} parent=1 // pred_check
      _
    $region119: #{resnet8_forward.1} parent=1 // pred_check_branch
      %213 = sbr.rel (0) target = $region121
    $region120: #{resnet8_forward.1} parent=1 // pred_region
      _
    $region121: #{resnet8_forward.1} parent=1 // pred_fallthru
      _
    // Predicated region
    $region122: #{resnet8_forward.1} parent=1 // pred_check
      _
    $region123: #{resnet8_forward.1} parent=1 // pred_check_branch
      %215 = sbr.rel (0) target = $region125
    $region124: #{resnet8_forward.1} parent=1 // pred_region
      _
    $region125: #{resnet8_forward.1} parent=1 // pred_fallthru
      _
    // Predicated region
    $region126: #{resnet8_forward.1} parent=1 // pred_check
      _
    $region127: #{resnet8_forward.1} parent=1 // pred_check_branch
      %217 = sbr.rel (0) target = $region129
    $region128: #{resnet8_forward.1} parent=1 // pred_region
      _
    $region129: #{resnet8_forward.1} parent=1 // pred_fallthru
      _
    // Predicated region
    $region130: #{resnet8_forward.1} parent=1 // pred_check
      _
    $region131: #{resnet8_forward.1} parent=1 // pred_check_branch
      %219 = sbr.rel (0) target = $region133
    $region132: #{resnet8_forward.1} parent=1 // pred_region
      _
    $region133: #{resnet8_forward.1} parent=1 // pred_fallthru
      _
    // Predicated region
    $region134: #{resnet8_forward.1} parent=1 // pred_check
      _
    $region135: #{resnet8_forward.1} parent=1 // pred_check_branch
      %221 = sbr.rel (0) target = $region137
    $region136: #{resnet8_forward.1} parent=1 // pred_region
      _
    $region137: #{resnet8_forward.1} parent=1 // pred_fallthru
      _
    // Predicated region
    $region138: #{resnet8_forward.1} parent=1 // pred_check
      _
    $region139: #{resnet8_forward.1} parent=1 // pred_check_branch
      %223 = sbr.rel (0) target = $region141
    $region140: #{resnet8_forward.1} parent=1 // pred_region
      _
    $region141: #{resnet8_forward.1} parent=1 // pred_fallthru
      _
    // Predicated region
    $region142: #{resnet8_forward.1} parent=1 // pred_check
      _
    $region143: #{resnet8_forward.1} parent=1 // pred_check_branch
      %225 = sbr.rel (0) target = $region145
    $region144: #{resnet8_forward.1} parent=1 // pred_region
      _
    $region145: #{resnet8_forward.1} parent=1 // pred_fallthru
      _
    // Predicated region
    $region146: #{resnet8_forward.1} parent=1 // pred_check
      _
    $region147: #{resnet8_forward.1} parent=1 // pred_check_branch
      %227 = sbr.rel (0) target = $region149
    $region148: #{resnet8_forward.1} parent=1 // pred_region
      _
    $region149: #{resnet8_forward.1} parent=1 // pred_fallthru
      _
    // Predicated region
    $region150: #{resnet8_forward.1} parent=1 // pred_check
      _
    $region151: #{resnet8_forward.1} parent=1 // pred_check_branch
      %229 = sbr.rel (0) target = $region153
    $region152: #{resnet8_forward.1} parent=1 // pred_region
      _
    $region153: #{resnet8_forward.1} parent=1 // pred_fallthru
      _
    // Predicated region
    $region154: #{resnet8_forward.1} parent=1 // pred_check
      _
    $region155: #{resnet8_forward.1} parent=1 // pred_check_branch
      %231 = sbr.rel (0) target = $region157
    $region156: #{resnet8_forward.1} parent=1 // pred_region
      _
    $region157: #{resnet8_forward.1} parent=1 // pred_fallthru
      _
    // Predicated region
    $region158: #{resnet8_forward.1} parent=1 // pred_check
      _
    $region159: #{resnet8_forward.1} parent=1 // pred_check_branch
      %233 = sbr.rel (0) target = $region161
    $region160: #{resnet8_forward.1} parent=1 // pred_region
      _
    $region161: #{resnet8_forward.1} parent=1 // pred_fallthru
      _
    // Predicated region
    $region162: #{resnet8_forward.1} parent=1 // pred_check
      _
    $region163: #{resnet8_forward.1} parent=1 // pred_check_branch
      %235 = sbr.rel (0) target = $region165
    $region164: #{resnet8_forward.1} parent=1 // pred_region
      _
    $region165: #{resnet8_forward.1} parent=1 // pred_fallthru
      _
    // Predicated region
    $region166: #{resnet8_forward.1} parent=1 // pred_check
      _
    $region167: #{resnet8_forward.1} parent=1 // pred_check_branch
      %237 = sbr.rel (0) target = $region169
    $region168: #{resnet8_forward.1} parent=1 // pred_region
      _
    $region169: #{resnet8_forward.1} parent=1 // pred_fallthru
      _
    // Predicated region
    $region170: #{resnet8_forward.1} parent=1 // pred_check
      _
    $region171: #{resnet8_forward.1} parent=1 // pred_check_branch
      %239 = sbr.rel (0) target = $region173
    $region172: #{resnet8_forward.1} parent=1 // pred_region
      _
    $region173: #{resnet8_forward.1} parent=1 // pred_fallthru
      _
    // Predicated region
    $region174: #{resnet8_forward.1} parent=1 // pred_check
      _
    $region175: #{resnet8_forward.1} parent=1 // pred_check_branch
      %241 = sbr.rel (0) target = $region177
    $region176: #{resnet8_forward.1} parent=1 // pred_region
      _
    $region177: #{resnet8_forward.1} parent=1 // pred_fallthru
      _
    // Predicated region
    $region178: #{resnet8_forward.1} parent=1 // pred_check
      _
    $region179: #{resnet8_forward.1} parent=1 // pred_check_branch
      %243 = sbr.rel (0) target = $region181
    $region180: #{resnet8_forward.1} parent=1 // pred_region
      _
    $region181: #{resnet8_forward.1} parent=1 // pred_fallthru
      _
    // Predicated region
    $region182: #{resnet8_forward.1} parent=1 // pred_check
      _
    $region183: #{resnet8_forward.1} parent=1 // pred_check_branch
      %245 = sbr.rel (0) target = $region185
    $region184: #{resnet8_forward.1} parent=1 // pred_region
      _
    $region185: #{resnet8_forward.1} parent=1 // pred_fallthru
      _
    // Predicated region
    $region186: #{resnet8_forward.1} parent=1 // pred_check
      _
    $region187: #{resnet8_forward.1} parent=1 // pred_check_branch
      %247 = sbr.rel (0) target = $region189
    $region188: #{resnet8_forward.1} parent=1 // pred_region
      _
    $region189: #{resnet8_forward.1} parent=1 // pred_fallthru
      _
    // Predicated region
    $region190: #{resnet8_forward.1} parent=1 // pred_check
      _
    $region191: #{resnet8_forward.1} parent=1 // pred_check_branch
      %249 = sbr.rel (0) target = $region193
    $region192: #{resnet8_forward.1} parent=1 // pred_region
      _
    $region193: #{resnet8_forward.1} parent=1 // pred_fallthru
      _
    // Predicated region
    $region194: #{resnet8_forward.1} parent=1 // pred_check
      _
    $region195: #{resnet8_forward.1} parent=1 // pred_check_branch
      %251 = sbr.rel (0) target = $region197
    $region196: #{resnet8_forward.1} parent=1 // pred_region
      _
    $region197: #{resnet8_forward.1} parent=1 // pred_fallthru
      _
    // Predicated region
    $region198: #{resnet8_forward.1} parent=1 // pred_check
      _
    $region199: #{resnet8_forward.1} parent=1 // pred_check_branch
      %253 = sbr.rel (0) target = $region201
    $region200: #{resnet8_forward.1} parent=1 // pred_region
      _
    $region201: #{resnet8_forward.1} parent=1 // pred_fallthru
      _
    // Predicated region
    $region202: #{resnet8_forward.1} parent=1 // pred_check
      _
    $region203: #{resnet8_forward.1} parent=1 // pred_check_branch
      %255 = sbr.rel (0) target = $region205
    $region204: #{resnet8_forward.1} parent=1 // pred_region
      _
    $region205: #{resnet8_forward.1} parent=1 // pred_fallthru
      _
    // Predicated region
    $region206: #{resnet8_forward.1} parent=1 // pred_check
      _
    $region207: #{resnet8_forward.1} parent=1 // pred_check_branch
      %257 = sbr.rel (0) target = $region209
    $region208: #{resnet8_forward.1} parent=1 // pred_region
      _
    $region209: #{resnet8_forward.1} parent=1 // pred_fallthru
      _
    // Predicated region
    $region210: #{resnet8_forward.1} parent=1 // pred_check
      _
    $region211: #{resnet8_forward.1} parent=1 // pred_check_branch
      %259 = sbr.rel (0) target = $region213
    $region212: #{resnet8_forward.1} parent=1 // pred_region
      _
    $region213: #{resnet8_forward.1} parent=1 // pred_fallthru
      _
    // Predicated region
    $region214: #{resnet8_forward.1} parent=1 // pred_check
      _
    $region215: #{resnet8_forward.1} parent=1 // pred_check_branch
      %261 = sbr.rel (0) target = $region217
    $region216: #{resnet8_forward.1} parent=1 // pred_region
      _
    $region217: #{resnet8_forward.1} parent=1 // pred_fallthru
      _
    // Predicated region
    $region218: #{resnet8_forward.1} parent=1 // pred_check
      _
    $region219: #{resnet8_forward.1} parent=1 // pred_check_branch
      %263 = sbr.rel (0) target = $region221
    $region220: #{resnet8_forward.1} parent=1 // pred_region
      _
    $region221: #{resnet8_forward.1} parent=1 // pred_fallthru
      _
    // Predicated region
    $region222: #{resnet8_forward.1} parent=1 // pred_check
      _
    $region223: #{resnet8_forward.1} parent=1 // pred_check_branch
      %265 = sbr.rel (0) target = $region225
    $region224: #{resnet8_forward.1} parent=1 // pred_region
      _
    $region225: #{resnet8_forward.1} parent=1 // pred_fallthru
      _
    // Predicated region
    $region226: #{resnet8_forward.1} parent=1 // pred_check
      _
    $region227: #{resnet8_forward.1} parent=1 // pred_check_branch
      %267 = sbr.rel (0) target = $region229
    $region228: #{resnet8_forward.1} parent=1 // pred_region
      _
    $region229: #{resnet8_forward.1} parent=1 // pred_fallthru
      _
    // Predicated region
    $region230: #{resnet8_forward.1} parent=1 // pred_check
      _
    $region231: #{resnet8_forward.1} parent=1 // pred_check_branch
      %269 = sbr.rel (0) target = $region233
    $region232: #{resnet8_forward.1} parent=1 // pred_region
      %s271 = ssub.s32 16, 16
      %272 = vsyncadd [#allocation3], %s271
      %s274 = sshll.u32 [#allocation2], 4
      %s275 = int_to_ptr.vmem [resolvable:$true] %s274
      %277 = dma.hbm_to_vmem [thread:$0]  %s115, 16, %s275, [#allocation3]
    $region233: #{resnet8_forward.1} parent=1 // pred_fallthru
      _
    // Predicated region
    $region234: #{resnet8_forward.1} parent=1 // pred_check
      _
    $region235: #{resnet8_forward.1} parent=1 // pred_check_branch
      %279 = sbr.rel (0) target = $region237
    $region236: #{resnet8_forward.1} parent=1 // pred_region
      _
    $region237: #{resnet8_forward.1} parent=1 // pred_fallthru
      _
    // Predicated region
    $region238: #{resnet8_forward.1} parent=1 // pred_check
      _
    $region239: #{resnet8_forward.1} parent=1 // pred_check_branch
      %281 = sbr.rel (0) target = $region241
    $region240: #{resnet8_forward.1} parent=1 // pred_region
      _
    $region241: #{resnet8_forward.1} parent=1 // pred_fallthru
      _
    // Predicated region
    $region242: #{resnet8_forward.1} parent=1 // pred_check
      _
    $region243: #{resnet8_forward.1} parent=1 // pred_check_branch
      %283 = sbr.rel (0) target = $region245
    $region244: #{resnet8_forward.1} parent=1 // pred_region
      _
    $region245: #{resnet8_forward.1} parent=1 // pred_fallthru
      _
    // Predicated region
    $region246: #{resnet8_forward.1} parent=1 // pred_check
      _
    $region247: #{resnet8_forward.1} parent=1 // pred_check_branch
      %285 = sbr.rel (0) target = $region249
    $region248: #{resnet8_forward.1} parent=1 // pred_region
      _
    $region249: #{resnet8_forward.1} parent=1 // pred_fallthru
      _
    // Predicated region
    $region250: #{resnet8_forward.1} parent=1 // pred_check
      _
    $region251: #{resnet8_forward.1} parent=1 // pred_check_branch
      %287 = sbr.rel (0) target = $region253
    $region252: #{resnet8_forward.1} parent=1 // pred_region
      _
    $region253: #{resnet8_forward.1} parent=1 // pred_fallthru
      _
    // Predicated region
    $region254: #{resnet8_forward.1} parent=1 // pred_check
      _
    $region255: #{resnet8_forward.1} parent=1 // pred_check_branch
      %289 = sbr.rel (0) target = $region257
    $region256: #{resnet8_forward.1} parent=1 // pred_region
      _
    $region257: #{resnet8_forward.1} parent=1 // pred_fallthru
      _
    // Predicated region
    $region258: #{resnet8_forward.1} parent=1 // pred_check
      _
    $region259: #{resnet8_forward.1} parent=1 // pred_check_branch
      %291 = sbr.rel (0) target = $region261
    $region260: #{resnet8_forward.1} parent=1 // pred_region
      %s293 = ssub.s32 16, 16
      %294 = vsyncadd [#allocation6], %s293
      %s296 = sshll.u32 [#allocation5], 4
      %s297 = int_to_ptr.vmem [resolvable:$true] %s296
      %299 = dma.hbm_to_vmem [thread:$0]  %s129, 16, %s297, [#allocation6]
    $region261: #{resnet8_forward.1} parent=1 // pred_fallthru
      _
    // Predicated region
    $region262: #{resnet8_forward.1} parent=1 // pred_check
      _
    $region263: #{resnet8_forward.1} parent=1 // pred_check_branch
      %301 = sbr.rel (0) target = $region265
    $region264: #{resnet8_forward.1} parent=1 // pred_region
      _
    $region265: #{resnet8_forward.1} parent=1 // pred_fallthru
      _
    // Predicated region
    $region266: #{resnet8_forward.1} parent=1 // pred_check
      _
    $region267: #{resnet8_forward.1} parent=1 // pred_check_branch
      %303 = sbr.rel (0) target = $region269
    $region268: #{resnet8_forward.1} parent=1 // pred_region
      _
    $region269: #{resnet8_forward.1} parent=1 // pred_fallthru
      _
    // Predicated region
    $region270: #{resnet8_forward.1} parent=1 // pred_check
      _
    $region271: #{resnet8_forward.1} parent=1 // pred_check_branch
      %305 = sbr.rel (0) target = $region273
    $region272: #{resnet8_forward.1} parent=1 // pred_region
      _
    $region273: #{resnet8_forward.1} parent=1 // pred_fallthru
      _
    // Predicated region
    $region274: #{resnet8_forward.1} parent=1 // pred_check
      _
    $region275: #{resnet8_forward.1} parent=1 // pred_check_branch
      %307 = sbr.rel (0) target = $region277
    $region276: #{resnet8_forward.1} parent=1 // pred_region
      _
    $region277: #{resnet8_forward.1} parent=1 // pred_fallthru
      _
    // Predicated region
    $region278: #{resnet8_forward.1} parent=1 // pred_check
      _
    $region279: #{resnet8_forward.1} parent=1 // pred_check_branch
      %309 = sbr.rel (0) target = $region281
    $region280: #{resnet8_forward.1} parent=1 // pred_region
      %s311 = ssub.s32 16, 16
      %312 = vsyncadd [#allocation6], %s311
      %s314 = sshll.u32 [#allocation7], 4
      %s315 = int_to_ptr.vmem [resolvable:$true] %s314
      %317 = dma.hbm_to_vmem [thread:$0]  %s139, 16, %s315, [#allocation6]
    $region281: #{resnet8_forward.1} parent=1 // pred_fallthru
      _
    // Predicated region
    $region282: #{resnet8_forward.1} parent=1 // pred_check
      _
    $region283: #{resnet8_forward.1} parent=1 // pred_check_branch
      %319 = sbr.rel (0) target = $region285
    $region284: #{resnet8_forward.1} parent=1 // pred_region
      %s321 = ssub.s32 16, 16
      %322 = vsyncadd [#allocation9], %s321
      %s324 = sshll.u32 [#allocation8], 4
      %s325 = int_to_ptr.vmem [resolvable:$true] %s324
      %327 = dma.hbm_to_vmem [thread:$0]  %s141, 16, %s325, [#allocation9]
    $region285: #{resnet8_forward.1} parent=1 // pred_fallthru
      _
    // Predicated region
    $region286: #{resnet8_forward.1} parent=1 // pred_check
      _
    $region287: #{resnet8_forward.1} parent=1 // pred_check_branch
      %329 = sbr.rel (0) target = $region289
    $region288: #{resnet8_forward.1} parent=1 // pred_region
      _
    $region289: #{resnet8_forward.1} parent=1 // pred_fallthru
      _
    // Predicated region
    $region290: #{resnet8_forward.1} parent=1 // pred_check
      _
    $region291: #{resnet8_forward.1} parent=1 // pred_check_branch
      %331 = sbr.rel (0) target = $region293
    $region292: #{resnet8_forward.1} parent=1 // pred_region
      %332 = dma.done [#allocation3], 16
    $region293: #{resnet8_forward.1} parent=1 // pred_fallthru
      _
    // Predicated region
    $region294: #{resnet8_forward.1} parent=1 // pred_check
      _
    $region295: #{resnet8_forward.1} parent=1 // pred_check_branch
      %334 = sbr.rel (0) target = $region297
    $region296: #{resnet8_forward.1} parent=1 // pred_region
      %335 = dma.done [#allocation6], 16
    $region297: #{resnet8_forward.1} parent=1 // pred_fallthru
      _
    // Predicated region
    $region298: #{resnet8_forward.1} parent=1 // pred_check
      _
    $region299: #{resnet8_forward.1} parent=1 // pred_check_branch
      %337 = sbr.rel (0) target = $region301
    $region300: #{resnet8_forward.1} parent=1 // pred_region
      %338 = dma.done [#allocation6], 16
    $region301: #{resnet8_forward.1} parent=1 // pred_fallthru
      _
    // Predicated region
    $region302: #{resnet8_forward.1} parent=1 // pred_check
      _
    $region303: #{resnet8_forward.1} parent=1 // pred_check_branch
      %340 = sbr.rel (0) target = $region305
    $region304: #{resnet8_forward.1} parent=1 // pred_region
      %341 = dma.done [#allocation9], 16
    $region305: #{resnet8_forward.1} parent=1 // pred_fallthru
      _
    %v343 = vld [vmem:[%s1] sm:$0xff]
    %v344 = vld [vmem:[%s1 + $0x8] sm:$0xff]
    %v345 = vld [vmem:[%s1 + $0x10] sm:$0xff]
    %v346 = vld [vmem:[%s1 + $0x18] sm:$0xff]
    %v347 = vrot.slane %v343, 7
    %v348 = vrot.slane %v344, 7
    %v349 = vrot.slane %v345, 7
    %v350 = vrot.slane %v346, 7
    %v351 = vlaneseq
    %v352 = vshrl.u32 %v351, 7
    %vm353 = vcmp.lt.s32.totalorder %v352, 1
    %v354 = vsel %vm353, %v349, %v350
    %v355 = vsel %vm353, %v348, %v349
    %v356 = vsel %vm353, %v347, %v348
    %v357 = vsel %vm353, %v350, %v347
    %v358 = vld [vmem:[%s123] sm:$0xff]
    %v359 = vld [vmem:[%s123 + $0x8] sm:$0xff]
    %v360 = vld [vmem:[%s123 + $0x10] sm:$0xff]
    %v361 = vld [vmem:[%s123 + $0x18] sm:$0xff]
    %363 = vset.pattern.permute.xlu0 0
    %364 = vperm.xlu0 %363, %v358
    %v365 = vpop.permute.xlu0 %364
    %368 = vset.pattern.permute.xlu0 0
    %369 = vperm.xlu0 %368, %v359
    %v370 = vpop.permute.xlu0 %369
    %373 = vset.pattern.permute.xlu0 0
    %374 = vperm.xlu0 %373, %v360
    %v375 = vpop.permute.xlu0 %374
    %378 = vset.pattern.permute.xlu0 0
    %379 = vperm.xlu0 %378, %v361
    %v380 = vpop.permute.xlu0 %379
    %v382 = vmul.f32 %v357, %v365
    %v383 = vmul.f32 %v356, %v370
    %v384 = vmul.f32 %v355, %v375
    %v385 = vmul.f32 %v354, %v380
    %v386 = vrot.slane %v343, 1
    %v387 = vrot.slane %v344, 1
    %v388 = vrot.slane %v345, 1
    %v389 = vrot.slane %v346, 1
    %vm390 = vcmp.lt.s32.totalorder %v352, 7
    %v391 = vsel %vm390, %v388, %v389
    %v392 = vsel %vm390, %v387, %v388
    %v393 = vsel %vm390, %v386, %v387
    %v394 = vsel %vm390, %v389, %v386
    %v395 = vld [vmem:[%s121] sm:$0xff]
    %v396 = vld [vmem:[%s121 + $0x8] sm:$0xff]
    %v397 = vld [vmem:[%s121 + $0x10] sm:$0xff]
    %v398 = vld [vmem:[%s121 + $0x18] sm:$0xff]
    %400 = vset.pattern.permute.xlu0 0
    %401 = vperm.xlu0 %400, %v395
    %v402 = vpop.permute.xlu0 %401
    %405 = vset.pattern.permute.xlu0 0
    %406 = vperm.xlu0 %405, %v396
    %v407 = vpop.permute.xlu0 %406
    %410 = vset.pattern.permute.xlu0 0
    %411 = vperm.xlu0 %410, %v397
    %v412 = vpop.permute.xlu0 %411
    %415 = vset.pattern.permute.xlu0 0
    %416 = vperm.xlu0 %415, %v398
    %v417 = vpop.permute.xlu0 %416
    %v419 = vmul.f32 %v393, %v402
    %v420 = vmul.f32 %v392, %v407
    %v421 = vmul.f32 %v391, %v412
    %v422 = vmul.f32 %v394, %v417
    %427 = vrot.lane.b32.xlu0 %v343, 48
    %v428 = vpop.permute.xlu0 %427
    %429 = vrot.lane.b32.xlu0 %v344, 48
    %v430 = vpop.permute.xlu0 %429
    %431 = vrot.lane.b32.xlu0 %v345, 48
    %v432 = vpop.permute.xlu0 %431
    %433 = vrot.lane.b32.xlu0 %v346, 48
    %v434 = vpop.permute.xlu0 %433
    %443 = vrot.lane.b32.xlu0 %v419, 96
    %v444 = vpop.permute.xlu0 %443
    %445 = vrot.lane.b32.xlu0 %v420, 96
    %v446 = vpop.permute.xlu0 %445
    %447 = vrot.lane.b32.xlu0 %v421, 96
    %v448 = vpop.permute.xlu0 %447
    %449 = vrot.lane.b32.xlu0 %v422, 96
    %v450 = vpop.permute.xlu0 %449
    %vm455 = vcmask 392192
    %v456 = vsel %vm455, %v382, %v428
    %v457 = vsel %vm455, %v383, %v430
    %v458 = vsel %vm455, %v384, %v432
    %v459 = vsel %vm455, %v385, %v434
    %vm460 = vcmask 785408
    %v461 = vsel %vm460, %v456, %v444
    %v462 = vsel %vm460, %v457, %v446
    %v463 = vsel %vm460, %v458, %v448
    %v464 = vsel %vm460, %v459, %v450
    %v465 = vpack.c.bf16 %v462, %v461
    %v466 = vpack.c.bf16 %v446, %v444
    %v467 = vpack.c.bf16 %v464, %v463
    %v468 = vpack.c.bf16 %v450, %v448
    %v469 = vld [vmem:[%s125] sm:$0xf]
    %v470 = vld [vmem:[%s125 + $0x4] sm:$0xf]
    %v471 = vld [vmem:[%s125 + $0x8] sm:$0xf]
    %v472 = vld [vmem:[%s125 + $0xc] sm:$0xf]
    %v473 = vld [vmem:[%s125 + $0x10] sm:$0xf]
    %v474 = vld [vmem:[%s125 + $0x14] sm:$0xf]
    %v475 = vld [vmem:[%s125 + $0x18] sm:$0xf]
    %v476 = vld [vmem:[%s125 + $0x1c] sm:$0xf]
    %v477 = vld [vmem:[%s125 + $0x20] sm:$0xf]
    %v478 = vld [vmem:[%s125 + $0x24] sm:$0xf]
    %v479 = vld [vmem:[%s125 + $0x28] sm:$0xf]
    %v480 = vld [vmem:[%s125 + $0x2c] sm:$0xf]
    %v481 = vld [vmem:[%s125 + $0x30] sm:$0xf]
    %v482 = vld [vmem:[%s125 + $0x34] sm:$0xf]
    %v483 = vld [vmem:[%s125 + $0x38] sm:$0xf]
    %v484 = vld [vmem:[%s125 + $0x3c] sm:$0xf]
    %v485 = vld [vmem:[%s125 + $0x40] sm:$0xf]
    %v486 = vld [vmem:[%s125 + $0x44] sm:$0xf]
    %v505 = vunpack.c.l.b16 %v469
    %v506 = vunpack.c.l.b16 %v470
    %v507 = vunpack.c.l.b16 %v471
    %v508 = vunpack.c.l.b16 %v472
    %v509 = vunpack.c.l.b16 %v473
    %v510 = vunpack.c.l.b16 %v474
    %v511 = vunpack.c.l.b16 %v475
    %v512 = vunpack.c.l.b16 %v476
    %v513 = vunpack.c.l.b16 %v477
    %v514 = vunpack.c.l.b16 %v478
    %v515 = vunpack.c.l.b16 %v479
    %v516 = vunpack.c.l.b16 %v480
    %v517 = vunpack.c.l.b16 %v481
    %v518 = vunpack.c.l.b16 %v482
    %v519 = vunpack.c.l.b16 %v483
    %v520 = vunpack.c.l.b16 %v484
    %v521 = vunpack.c.l.b16 %v485
    %v522 = vunpack.c.l.b16 %v486
    %v523 = vpack.c.b16 %v506, %v505
    %v524 = vpack.c.b16 %v508, %v507
    %v525 = vpack.c.b16 %v510, %v509
    %v526 = vpack.c.b16 %v512, %v511
    %v527 = vpack.c.b16 %v514, %v513
    %v528 = vpack.c.b16 %v516, %v515
    %v529 = vpack.c.b16 %v518, %v517
    %v530 = vpack.c.b16 %v520, %v519
    %v531 = vpack.c.b16 %v522, %v521
    %vm541 = vcmask 130048
    %v543 = vsel %vm541, %v466, 0
    %v546 = vsel %vm541, %v468, 0
    %548 = vmatprep.subr.bf16.mxu0 0
    %549 = vmatpush1.bf16.msra.mxu0 %v530
    %550 = vmatprep.subr.bf16.mxu0 0
    %551 = vmatpush1.bf16.msra.mxu0 %v529
    %552 = vmatprep.subr.bf16.mxu0 0
    %553 = vmatpush1.bf16.msra.mxu0 %v528
    %554 = vmatprep.subr.bf16.mxu0 0
    %555 = vmatpush1.bf16.msra.mxu0 %v527
    %556 = vmatprep.subr.bf16.mxu0 0
    %557 = vmatpush1.bf16.msra.mxu0 %v526
    %558 = vmatprep.subr.bf16.mxu0 0
    %559 = vmatpush1.bf16.msra.mxu0 %v525
    %560 = vmatprep.subr.bf16.mxu0 0
    %561 = vmatpush1.bf16.msra.mxu0 %v524
    %562 = vmatprep.subr.bf16.mxu0 0
    %563 = vmatpush1.bf16.msra.mxu0 %v523
    %564 = vmatprep.subr.bf16.mxu0 0
    %565 = vmatpush2.bf16.msra.mxu0 0
    %566 = vmatprep.subr.bf16.mxu0 0
    %567 = vmatpush2.bf16.msra.mxu0 0
    %568 = vmatprep.subr.bf16.mxu0 0
    %569 = vmatpush2.bf16.msra.mxu0 0
    %570 = vmatprep.subr.bf16.mxu0 0
    %571 = vmatpush2.bf16.msra.mxu0 0
    %572 = vmatprep.subr.bf16.mxu0 0
    %573 = vmatpush2.bf16.msra.mxu0 0
    %574 = vmatprep.subr.bf16.mxu0 0
    %575 = vmatpush2.bf16.msra.mxu0 0
    %576 = vmatprep.subr.bf16.mxu0 0
    %577 = vmatpush2.bf16.msra.mxu0 0
    %578 = vmatprep.subr.bf16.mxu0 0
    %579 = vmatpush2.bf16.msra.mxu0 %v531
    %580 = vmatprep.mubr.bf16.mxu0 %v543
    %581 = vmatmul.mubr.bf16.gmra.mxu0 %v465
    %v582 = vpop.f32.mrf.mxu0
    %v583 = vadd.f32 0.0, %v582
    %v584 = vpop.f32.mrf.mxu0
    %v585 = vpop.f32.mrf.mxu0
    %v586 = vadd.f32 0.0, %v585
    %v587 = vpop.f32.mrf.mxu0
    %588 = vmatprep.mubr.bf16.mxu0 %v546
    %589 = vmatmul.mubr.bf16.gmra.mxu0 %v467
    %v590 = vpop.f32.mrf.mxu0
    %v591 = vadd.f32 0.0, %v590
    %v592 = vpop.f32.mrf.mxu0
    %v593 = vpop.f32.mrf.mxu0
    %v594 = vadd.f32 0.0, %v593
    %v595 = vpop.f32.mrf.mxu0
    %596 = vdwg.mxu0
    %v597 = vadd.f32 %v583, %v586
    %v598 = vadd.f32 %v597, %v591
    %v599 = vadd.f32 %v598, %v594
    %v600 = vrot.slane %v599, 4
    %v601 = vadd.f32 %v599, %v600
    %v602 = vrot.slane %v601, 2
    %v603 = vadd.f32 %v601, %v602
    %v604 = vrot.slane %v603, 1
    %v605 = vadd.f32 %v603, %v604
    %v606 = vmul.f32 %v583, %v583
    %v607 = vmul.f32 %v586, %v586
    %v608 = vmul.f32 %v591, %v591
    %v609 = vmul.f32 %v594, %v594
    %v610 = vadd.f32 %v606, %v607
    %v611 = vadd.f32 %v610, %v608
    %v612 = vadd.f32 %v611, %v609
    %v613 = vrot.slane %v612, 4
    %v614 = vadd.f32 %v612, %v613
    %v615 = vrot.slane %v614, 2
    %v616 = vadd.f32 %v614, %v615
    %v617 = vrot.slane %v616, 1
    %v618 = vadd.f32 %v616, %v617
    %vm619 = vcmask 1040384
    %v620 = vsel %vm619, %v605, %v618
    %v621 = vld [vmem:[%s119] sm:$0xff]
    %v622 = vld [vmem:[%s119 + $0x8] sm:$0xff]
    %v623 = vld [vmem:[%s119 + $0x10] sm:$0xff]
    %v624 = vld [vmem:[%s119 + $0x18] sm:$0xff]
    %v625 = vld [vmem:[%s119 + $0x20] sm:$0xff]
    %v626 = vld [vmem:[%s119 + $0x28] sm:$0xff]
    %v627 = vld [vmem:[%s119 + $0x30] sm:$0xff]
    %v628 = vld [vmem:[%s119 + $0x38] sm:$0xff]
    %v629 = vld [vmem:[%s119 + $0x40] sm:$0xff]
    %v630 = vld [vmem:[%s119 + $0x48] sm:$0xff]
    %v631 = vld [vmem:[%s119 + $0x50] sm:$0xff]
    %v632 = vld [vmem:[%s119 + $0x58] sm:$0xff]
    %v633 = vld [vmem:[%s119 + $0x60] sm:$0xff]
    %v634 = vld [vmem:[%s119 + $0x68] sm:$0xff]
    %v635 = vld [vmem:[%s119 + $0x70] sm:$0xff]
    %v636 = vld [vmem:[%s119 + $0x78] sm:$0xff]
    %637 = vmatprep.subr.mxu0 0.0
    %638 = vmatpush1.msra.mxu0 %v636
    %639 = vmatprep.subr.mxu0 0.0
    %640 = vmatpush1.msra.mxu0 %v635
    %641 = vmatprep.subr.mxu0 0.0
    %642 = vmatpush1.msra.mxu0 %v634
    %643 = vmatprep.subr.mxu0 0.0
    %644 = vmatpush1.msra.mxu0 %v633
    %645 = vmatprep.subr.mxu0 0.0
    %646 = vmatpush1.msra.mxu0 %v632
    %647 = vmatprep.subr.mxu0 0.0
    %648 = vmatpush1.msra.mxu0 %v631
    %649 = vmatprep.subr.mxu0 0.0
    %650 = vmatpush1.msra.mxu0 %v630
    %651 = vmatprep.subr.mxu0 0.0
    %652 = vmatpush1.msra.mxu0 %v629
    %653 = vmatprep.subr.mxu0 0.0
    %654 = vmatpush1.msra.mxu0 %v628
    %655 = vmatprep.subr.mxu0 0.0
    %656 = vmatpush1.msra.mxu0 %v627
    %657 = vmatprep.subr.mxu0 0.0
    %658 = vmatpush1.msra.mxu0 %v626
    %659 = vmatprep.subr.mxu0 0.0
    %660 = vmatpush1.msra.mxu0 %v625
    %661 = vmatprep.subr.mxu0 0.0
    %662 = vmatpush1.msra.mxu0 %v624
    %663 = vmatprep.subr.mxu0 0.0
    %664 = vmatpush1.msra.mxu0 %v623
    %665 = vmatprep.subr.mxu0 0.0
    %666 = vmatpush1.msra.mxu0 %v622
    %667 = vmatprep.subr.mxu0 0.0
    %668 = vmatpush1.msra.mxu0 %v621
    %669 = vmatprep.subr.mxu0 0.0
    %670 = vmatpush2.msra.mxu0 0.0
    %671 = vmatprep.subr.mxu0 0.0
    %672 = vmatpush2.msra.mxu0 0.0
    %673 = vmatprep.subr.mxu0 0.0
    %674 = vmatpush2.msra.mxu0 0.0
    %675 = vmatprep.subr.mxu0 0.0
    %676 = vmatpush2.msra.mxu0 0.0
    %677 = vmatprep.subr.mxu0 0.0
    %678 = vmatpush2.msra.mxu0 0.0
    %679 = vmatprep.subr.mxu0 0.0
    %680 = vmatpush2.msra.mxu0 0.0
    %681 = vmatprep.subr.mxu0 0.0
    %682 = vmatpush2.msra.mxu0 0.0
    %683 = vmatprep.subr.mxu0 0.0
    %684 = vmatpush2.msra.mxu0 0.0
    %685 = vmatprep.subr.mxu0 0.0
    %686 = vmatpush2.msra.mxu0 0.0
    %687 = vmatprep.subr.mxu0 0.0
    %688 = vmatpush2.msra.mxu0 0.0
    %689 = vmatprep.subr.mxu0 0.0
    %690 = vmatpush2.msra.mxu0 0.0
    %691 = vmatprep.subr.mxu0 0.0
    %692 = vmatpush2.msra.mxu0 0.0
    %693 = vmatprep.subr.mxu0 0.0
    %694 = vmatpush2.msra.mxu0 0.0
    %695 = vmatprep.subr.mxu0 0.0
    %696 = vmatpush2.msra.mxu0 0.0
    %697 = vmatprep.subr.mxu0 0.0
    %698 = vmatpush2.msra.mxu0 0.0
    %699 = vmatprep.subr.mxu0 0.0
    %700 = vmatpush2.msra.mxu0 0.0
    %701 = vmatprep.mubr.f32.mxu0 0.0
    %702 = vmatmul.mubr.f32.gmra.mxu0 %v620
    %v703 = vpop.f32.mrf.mxu0
    %v704 = vadd.f32 0.0, %v703
    %v705 = vpop.f32.mrf.mxu0
    %706 = vdwg.mxu0
    %v707 = vmul.f32 %v704, %v704
    %v709 = vrot.slane %v707, 7
    %v711 = vsub.f32 %v704, %v709
    %v712 = vmax.f32 %v711, 0.0
    %v713 = vld [vmem:[#allocation2] sm:$0x1]
    %v714 = vadd.f32 %v712, 1e-05
    %v715 = vrsqrt.pop %v714
    %v718 = vunpack.c.l.s4 1966171168
    %v719 = vunpack.c.0.s8 %v718
    %v720 = vlaneseq
    %v721 = vshrl.u32 %v720, 7
    %v722 = vsub.s32 %v719, %v721
    %v723 = vrot.slane %v715, %v722
    %v724 = vcombine.high %v723, %v723
    %v726 = vunpack.c.l.s4 1966171168
    %v727 = vunpack.c.0.s8 %v726
    %v728 = vlaneseq
    %v729 = vshrl.u32 %v728, 7
    %v730 = vsub.s32 %v727, %v729
    %v731 = vrot.slane %v724, %v730
    %v733 = vmul.f32 %v713, %v731
    %v734 = vld [vmem:[%s113] sm:$0x1]
    %v735 = vmul.f32 %v704, %v733
    %v736 = vsub.f32 %v734, %v735
    %v738 = vlaneseq
    %v739 = vshrl.u32 %v738, 7
    %v740 = vsub.s32 0, %v739
    %v741 = vrot.slane %v736, %v740
    %v743 = vsel %vm619, %v733, %v741
    %v744 = vld [vmem:[%s117] sm:$0xff]
    %vm745 = vcmask 64512
    %v747 = vsel %vm745, %v743, 0
    %749 = vmatprep.subr.mxu0 0.0
    %750 = vmatpush1.msra.mxu0 0.0
    %751 = vmatprep.subr.mxu0 0.0
    %752 = vmatpush1.msra.mxu0 0.0
    %753 = vmatprep.subr.mxu0 0.0
    %754 = vmatpush1.msra.mxu0 0.0
    %755 = vmatprep.subr.mxu0 0.0
    %756 = vmatpush1.msra.mxu0 0.0
    %757 = vmatprep.subr.mxu0 0.0
    %758 = vmatpush1.msra.mxu0 0.0
    %759 = vmatprep.subr.mxu0 0.0
    %760 = vmatpush1.msra.mxu0 0.0
    %761 = vmatprep.subr.mxu0 0.0
    %762 = vmatpush1.msra.mxu0 0.0
    %763 = vmatprep.subr.mxu0 0.0
    %764 = vmatpush1.msra.mxu0 0.0
    %765 = vmatprep.subr.mxu0 0.0
    %766 = vmatpush1.msra.mxu0 0.0
    %767 = vmatprep.subr.mxu0 0.0
    %768 = vmatpush1.msra.mxu0 0.0
    %769 = vmatprep.subr.mxu0 0.0
    %770 = vmatpush1.msra.mxu0 0.0
    %771 = vmatprep.subr.mxu0 0.0
    %772 = vmatpush1.msra.mxu0 0.0
    %773 = vmatprep.subr.mxu0 0.0
    %774 = vmatpush1.msra.mxu0 0.0
    %775 = vmatprep.subr.mxu0 0.0
    %776 = vmatpush1.msra.mxu0 0.0
    %777 = vmatprep.subr.mxu0 0.0
    %778 = vmatpush1.msra.mxu0 0.0
    %779 = vmatprep.subr.mxu0 0.0
    %780 = vmatpush1.msra.mxu0 %v744
    %781 = vmatprep.subr.mxu0 0.0
    %782 = vmatpush2.msra.mxu0 0.0
    %783 = vmatprep.subr.mxu0 0.0
    %784 = vmatpush2.msra.mxu0 0.0
    %785 = vmatprep.subr.mxu0 0.0
    %786 = vmatpush2.msra.mxu0 0.0
    %787 = vmatprep.subr.mxu0 0.0
    %788 = vmatpush2.msra.mxu0 0.0
    %789 = vmatprep.subr.mxu0 0.0
    %790 = vmatpush2.msra.mxu0 0.0
    %791 = vmatprep.subr.mxu0 0.0
    %792 = vmatpush2.msra.mxu0 0.0
    %793 = vmatprep.subr.mxu0 0.0
    %794 = vmatpush2.msra.mxu0 0.0
    %795 = vmatprep.subr.mxu0 0.0
    %796 = vmatpush2.msra.mxu0 0.0
    %797 = vmatprep.subr.mxu0 0.0
    %798 = vmatpush2.msra.mxu0 0.0
    %799 = vmatprep.subr.mxu0 0.0
    %800 = vmatpush2.msra.mxu0 0.0
    %801 = vmatprep.subr.mxu0 0.0
    %802 = vmatpush2.msra.mxu0 0.0
    %803 = vmatprep.subr.mxu0 0.0
    %804 = vmatpush2.msra.mxu0 0.0
    %805 = vmatprep.subr.mxu0 0.0
    %806 = vmatpush2.msra.mxu0 0.0
    %807 = vmatprep.subr.mxu0 0.0
    %808 = vmatpush2.msra.mxu0 0.0
    %809 = vmatprep.subr.mxu0 0.0
    %810 = vmatpush2.msra.mxu0 0.0
    %811 = vmatprep.subr.mxu0 0.0
    %812 = vmatpush2.msra.mxu0 0.0
    %813 = vmatprep.mubr.f32.mxu0 0.0
    %814 = vmatmul.mubr.f32.gmra.mxu0 %v747
    %v815 = vpop.f32.mrf.mxu0
    %v816 = vadd.f32 0.0, %v815
    %v817 = vpop.f32.mrf.mxu0
    %818 = vdwg.mxu0
    %v819 = vlaneseq
    %v820 = vshrl.u32 %v819, 7
    %v821 = vsub.s32 0, %v820
    %v822 = vrot.slane %v816, %v821
    %v823 = vmul.f32 %v583, %v822
    %v824 = vmul.f32 %v586, %v822
    %v825 = vmul.f32 %v591, %v822
    %v826 = vmul.f32 %v594, %v822
    %v827 = vlaneseq
    %v828 = vshrl.u32 %v827, 7
    %v829 = vsub.s32 1, %v828
    %v830 = vrot.slane %v816, %v829
    %v831 = vadd.f32 %v823, %v830
    %v832 = vadd.f32 %v824, %v830
    %v833 = vadd.f32 %v825, %v830
    %v834 = vadd.f32 %v826, %v830
    %v835 = vmax.f32 %v831, 0.0
    %v836 = vmax.f32 %v832, 0.0
    %v837 = vmax.f32 %v833, 0.0
    %v838 = vmax.f32 %v834, 0.0
    %v839 = vrot.slane %v835, 7
    %v840 = vrot.slane %v836, 7
    %v841 = vrot.slane %v837, 7
    %v842 = vrot.slane %v838, 7
    %v843 = vsel %vm353, %v841, %v842
    %v844 = vsel %vm353, %v840, %v841
    %v845 = vsel %vm353, %v839, %v840
    %v846 = vsel %vm353, %v842, %v839
    %v847 = vld [vmem:[%s143] sm:$0xff]
    %v848 = vld [vmem:[%s143 + $0x8] sm:$0xff]
    %v849 = vld [vmem:[%s143 + $0x10] sm:$0xff]
    %v850 = vld [vmem:[%s143 + $0x18] sm:$0xff]
    %852 = vset.pattern.permute.xlu0 0
    %853 = vperm.xlu0 %852, %v847
    %v854 = vpop.permute.xlu0 %853
    %857 = vset.pattern.permute.xlu0 0
    %858 = vperm.xlu0 %857, %v848
    %v859 = vpop.permute.xlu0 %858
    %862 = vset.pattern.permute.xlu0 0
    %863 = vperm.xlu0 %862, %v849
    %v864 = vpop.permute.xlu0 %863
    %867 = vset.pattern.permute.xlu0 0
    %868 = vperm.xlu0 %867, %v850
    %v869 = vpop.permute.xlu0 %868
    %v871 = vmul.f32 %v846, %v854
    %v872 = vmul.f32 %v845, %v859
    %v873 = vmul.f32 %v844, %v864
    %v874 = vmul.f32 %v843, %v869
    %v875 = vrot.slane %v835, 1
    %v876 = vrot.slane %v836, 1
    %v877 = vrot.slane %v837, 1
    %v878 = vrot.slane %v838, 1
    %v879 = vsel %vm390, %v877, %v878
    %v880 = vsel %vm390, %v876, %v877
    %v881 = vsel %vm390, %v875, %v876
    %v882 = vsel %vm390, %v878, %v875
    %v883 = vld [vmem:[%s137] sm:$0xff]
    %v884 = vld [vmem:[%s137 + $0x8] sm:$0xff]
    %v885 = vld [vmem:[%s137 + $0x10] sm:$0xff]
    %v886 = vld [vmem:[%s137 + $0x18] sm:$0xff]
    %888 = vset.pattern.permute.xlu0 0
    %889 = vperm.xlu0 %888, %v883
    %v890 = vpop.permute.xlu0 %889
    %893 = vset.pattern.permute.xlu0 0
    %894 = vperm.xlu0 %893, %v884
    %v895 = vpop.permute.xlu0 %894
    %898 = vset.pattern.permute.xlu0 0
    %899 = vperm.xlu0 %898, %v885
    %v900 = vpop.permute.xlu0 %899
    %903 = vset.pattern.permute.xlu0 0
    %904 = vperm.xlu0 %903, %v886
    %v905 = vpop.permute.xlu0 %904
    %v907 = vmul.f32 %v881, %v890
    %v908 = vmul.f32 %v880, %v895
    %v909 = vmul.f32 %v879, %v900
    %v910 = vmul.f32 %v882, %v905
    %v911 = vmax.f32 %v871, %v907
    %v912 = vmax.f32 %v872, %v908
    %v913 = vmax.f32 %v873, %v909
    %v914 = vmax.f32 %v874, %v910
    %v915 = vmax.f32 %v911, %v835
    %v916 = vmax.f32 %v912, %v836
    %v917 = vmax.f32 %v913, %v837
    %v918 = vmax.f32 %v914, %v838
    %v919 = vld [vmem:[%s133] sm:$0xff]
    %v920 = vld [vmem:[%s133 + $0x8] sm:$0xff]
    %vm921 = vcmask 261120
    %v923 = vsel %vm921, %v919, 0
    %v926 = vsel %vm921, %v920, 0
    %928 = vmatprep.subr.mxu0 0.0
    %929 = vmatpush1.msra.mxu0 0.0
    %930 = vmatprep.subr.mxu0 0.0
    %931 = vmatpush1.msra.mxu0 0.0
    %932 = vmatprep.subr.mxu0 0.0
    %933 = vmatpush1.msra.mxu0 0.0
    %934 = vmatprep.subr.mxu0 0.0
    %935 = vmatpush1.msra.mxu0 0.0
    %936 = vmatprep.subr.mxu0 0.0
    %937 = vmatpush1.msra.mxu0 0.0
    %938 = vmatprep.subr.mxu0 0.0
    %939 = vmatpush1.msra.mxu0 0.0
    %940 = vmatprep.subr.mxu0 0.0
    %941 = vmatpush1.msra.mxu0 0.0
    %942 = vmatprep.subr.mxu0 0.0
    %943 = vmatpush1.msra.mxu0 0.0
    %944 = vmatprep.subr.mxu0 0.0
    %945 = vmatpush1.msra.mxu0 0.0
    %946 = vmatprep.subr.mxu0 0.0
    %947 = vmatpush1.msra.mxu0 0.0
    %948 = vmatprep.subr.mxu0 0.0
    %949 = vmatpush1.msra.mxu0 0.0
    %950 = vmatprep.subr.mxu0 0.0
    %951 = vmatpush1.msra.mxu0 0.0
    %952 = vmatprep.subr.mxu0 0.0
    %953 = vmatpush1.msra.mxu0 %v918
    %954 = vmatprep.subr.mxu0 0.0
    %955 = vmatpush1.msra.mxu0 %v917
    %956 = vmatprep.subr.mxu0 0.0
    %957 = vmatpush1.msra.mxu0 %v916
    %958 = vmatprep.subr.mxu0 0.0
    %959 = vmatpush1.msra.mxu0 %v915
    %960 = vmatprep.subr.mxu0 0.0
    %961 = vmatpush2.msra.mxu0 0.0
    %962 = vmatprep.subr.mxu0 0.0
    %963 = vmatpush2.msra.mxu0 0.0
    %964 = vmatprep.subr.mxu0 0.0
    %965 = vmatpush2.msra.mxu0 0.0
    %966 = vmatprep.subr.mxu0 0.0
    %967 = vmatpush2.msra.mxu0 0.0
    %968 = vmatprep.subr.mxu0 0.0
    %969 = vmatpush2.msra.mxu0 0.0
    %970 = vmatprep.subr.mxu0 0.0
    %971 = vmatpush2.msra.mxu0 0.0
    %972 = vmatprep.subr.mxu0 0.0
    %973 = vmatpush2.msra.mxu0 0.0
    %974 = vmatprep.subr.mxu0 0.0
    %975 = vmatpush2.msra.mxu0 0.0
    %976 = vmatprep.subr.mxu0 0.0
    %977 = vmatpush2.msra.mxu0 0.0
    %978 = vmatprep.subr.mxu0 0.0
    %979 = vmatpush2.msra.mxu0 0.0
    %980 = vmatprep.subr.mxu0 0.0
    %981 = vmatpush2.msra.mxu0 0.0
    %982 = vmatprep.subr.mxu0 0.0
    %983 = vmatpush2.msra.mxu0 0.0
    %984 = vmatprep.subr.mxu0 0.0
    %985 = vmatpush2.msra.mxu0 0.0
    %986 = vmatprep.subr.mxu0 0.0
    %987 = vmatpush2.msra.mxu0 0.0
    %988 = vmatprep.subr.mxu0 0.0
    %989 = vmatpush2.msra.mxu0 0.0
    %990 = vmatprep.subr.mxu0 0.0
    %991 = vmatpush2.msra.mxu0 0.0
    %992 = vmatprep.mubr.f32.mxu0 0.0
    %993 = vmatmul.mubr.f32.gmra.mxu0 %v923
    %v994 = vpop.f32.mrf.mxu0
    %v995 = vadd.f32 0.0, %v994
    %v996 = vpop.f32.mrf.mxu0
    %997 = vmatprep.mubr.f32.mxu0 0.0
    %998 = vmatmul.mubr.f32.gmra.mxu0 %v926
    %v999 = vpop.f32.mrf.mxu0
    %v1000 = vadd.f32 0.0, %v999
    %v1001 = vpop.f32.mrf.mxu0
    %1002 = vdwg.mxu0
    %1003 = vrot.lane.b32.xlu0 %v995, 8
    %v1004 = vpop.permute.xlu0 %1003
    %1005 = vrot.lane.b32.xlu0 %v1000, 8
    %v1006 = vpop.permute.xlu0 %1005
    %v1007 = vld [vmem:[#allocation7] sm:$0x1]
    %v1009 = vlaneseq
    %v1010 = vshrl.u32 %v1009, 7
    %v1011 = vsub.s32 0, %v1010
    %v1012 = vrot.slane %v1007, %v1011
    %v1014 = vmul.f32 %v1004, %v1012
    %v1015 = vmul.f32 %v1006, %v1012
    %1016 = vrot.lane.b32.xlu0 %v995, 120
    %v1017 = vpop.permute.xlu0 %1016
    %1018 = vrot.lane.b32.xlu0 %v1000, 120
    %v1019 = vpop.permute.xlu0 %1018
    %v1020 = vld [vmem:[#allocation8] sm:$0x1]
    %v1022 = vlaneseq
    %v1023 = vshrl.u32 %v1022, 7
    %v1024 = vsub.s32 0, %v1023
    %v1025 = vrot.slane %v1020, %v1024
    %v1027 = vmul.f32 %v1017, %v1025
    %v1028 = vmul.f32 %v1019, %v1025
    %v1029 = vmax.f32 %v1014, %v1027
    %v1030 = vmax.f32 %v1015, %v1028
    %v1031 = vmax.f32 %v1029, %v995
    %v1032 = vmax.f32 %v1030, %v1000
    %v1033 = vld [vmem:[%s135] sm:$0xff]
    %v1034 = vld [vmem:[%s135 + $0x8] sm:$0xff]
    %v1035 = vld [vmem:[%s135 + $0x10] sm:$0xff]
    %v1036 = vld [vmem:[%s135 + $0x18] sm:$0xff]
    %v1037 = vld [vmem:[%s135 + $0x20] sm:$0xff]
    %v1038 = vld [vmem:[%s135 + $0x28] sm:$0xff]
    %v1039 = vld [vmem:[%s135 + $0x30] sm:$0xff]
    %v1040 = vld [vmem:[%s135 + $0x38] sm:$0xff]
    %v1041 = vld [vmem:[%s135 + $0x40] sm:$0xff]
    %v1042 = vld [vmem:[%s135 + $0x48] sm:$0xff]
    %v1043 = vld [vmem:[%s135 + $0x50] sm:$0xff]
    %v1044 = vld [vmem:[%s135 + $0x58] sm:$0xff]
    %v1045 = vld [vmem:[%s135 + $0x60] sm:$0xff]
    %v1046 = vld [vmem:[%s135 + $0x68] sm:$0xff]
    %v1047 = vld [vmem:[%s135 + $0x70] sm:$0xff]
    %v1048 = vld [vmem:[%s135 + $0x78] sm:$0xff]
    %1049 = vmatprep.subr.mxu0 0.0
    %1050 = vmatpush1.msra.mxu0 %v1048
    %1051 = vmatprep.subr.mxu0 0.0
    %1052 = vmatpush1.msra.mxu0 %v1047
    %1053 = vmatprep.subr.mxu0 0.0
    %1054 = vmatpush1.msra.mxu0 %v1046
    %1055 = vmatprep.subr.mxu0 0.0
    %1056 = vmatpush1.msra.mxu0 %v1045
    %1057 = vmatprep.subr.mxu0 0.0
    %1058 = vmatpush1.msra.mxu0 %v1044
    %1059 = vmatprep.subr.mxu0 0.0
    %1060 = vmatpush1.msra.mxu0 %v1043
    %1061 = vmatprep.subr.mxu0 0.0
    %1062 = vmatpush1.msra.mxu0 %v1042
    %1063 = vmatprep.subr.mxu0 0.0
    %1064 = vmatpush1.msra.mxu0 %v1041
    %1065 = vmatprep.subr.mxu0 0.0
    %1066 = vmatpush1.msra.mxu0 %v1040
    %1067 = vmatprep.subr.mxu0 0.0
    %1068 = vmatpush1.msra.mxu0 %v1039
    %1069 = vmatprep.subr.mxu0 0.0
    %1070 = vmatpush1.msra.mxu0 %v1038
    %1071 = vmatprep.subr.mxu0 0.0
    %1072 = vmatpush1.msra.mxu0 %v1037
    %1073 = vmatprep.subr.mxu0 0.0
    %1074 = vmatpush1.msra.mxu0 %v1036
    %1075 = vmatprep.subr.mxu0 0.0
    %1076 = vmatpush1.msra.mxu0 %v1035
    %1077 = vmatprep.subr.mxu0 0.0
    %1078 = vmatpush1.msra.mxu0 %v1034
    %1079 = vmatprep.subr.mxu0 0.0
    %1080 = vmatpush1.msra.mxu0 %v1033
    %1081 = vmatprep.subr.mxu0 0.0
    %1082 = vmatpush2.msra.mxu0 0.0
    %1083 = vmatprep.subr.mxu0 0.0
    %1084 = vmatpush2.msra.mxu0 0.0
    %1085 = vmatprep.subr.mxu0 0.0
    %1086 = vmatpush2.msra.mxu0 0.0
    %1087 = vmatprep.subr.mxu0 0.0
    %1088 = vmatpush2.msra.mxu0 0.0
    %1089 = vmatprep.subr.mxu0 0.0
    %1090 = vmatpush2.msra.mxu0 0.0
    %1091 = vmatprep.subr.mxu0 0.0
    %1092 = vmatpush2.msra.mxu0 0.0
    %1093 = vmatprep.subr.mxu0 0.0
    %1094 = vmatpush2.msra.mxu0 0.0
    %1095 = vmatprep.subr.mxu0 0.0
    %1096 = vmatpush2.msra.mxu0 0.0
    %1097 = vmatprep.subr.mxu0 0.0
    %1098 = vmatpush2.msra.mxu0 0.0
    %1099 = vmatprep.subr.mxu0 0.0
    %1100 = vmatpush2.msra.mxu0 0.0
    %1101 = vmatprep.subr.mxu0 0.0
    %1102 = vmatpush2.msra.mxu0 0.0
    %1103 = vmatprep.subr.mxu0 0.0
    %1104 = vmatpush2.msra.mxu0 0.0
    %1105 = vmatprep.subr.mxu0 0.0
    %1106 = vmatpush2.msra.mxu0 0.0
    %1107 = vmatprep.subr.mxu0 0.0
    %1108 = vmatpush2.msra.mxu0 0.0
    %1109 = vmatprep.subr.mxu0 0.0
    %1110 = vmatpush2.msra.mxu0 0.0
    %1111 = vmatprep.subr.mxu0 0.0
    %1112 = vmatpush2.msra.mxu0 0.0
    %1113 = vmatprep.mubr.f32.mxu0 0.0
    %1114 = vmatmul.mubr.f32.gmra.mxu0 %v1031
    %v1115 = vpop.f32.mrf.mxu0
    %v1116 = vadd.f32 0.0, %v1115
    %v1117 = vpop.f32.mrf.mxu0
    %1118 = vmatprep.mubr.f32.mxu0 0.0
    %1119 = vmatmul.mubr.f32.gmra.mxu0 %v1032
    %v1120 = vpop.f32.mrf.mxu0
    %v1121 = vadd.f32 0.0, %v1120
    %v1122 = vpop.f32.mrf.mxu0
    %1123 = vdwg.mxu0
    %v1124 = vrot.slane %v1116, 7
    %v1125 = vrot.slane %v1121, 7
    %v1126 = vsel %vm353, %v1124, %v1125
    %v1127 = vsel %vm353, %v1125, %v1124
    %v1128 = vld [vmem:[%s13] sm:$0xff]
    %v1129 = vld [vmem:[%s13 + $0x8] sm:$0xff]
    %1131 = vset.pattern.permute.xlu0 0
    %1132 = vperm.xlu0 %1131, %v1128
    %v1133 = vpop.permute.xlu0 %1132
    %1136 = vset.pattern.permute.xlu0 0
    %1137 = vperm.xlu0 %1136, %v1129
    %v1138 = vpop.permute.xlu0 %1137
    %v1140 = vmul.f32 %v1127, %v1133
    %v1141 = vmul.f32 %v1126, %v1138
    %v1142 = vrot.slane %v1116, 1
    %v1143 = vrot.slane %v1121, 1
    %v1144 = vsel %vm390, %v1142, %v1143
    %v1145 = vsel %vm390, %v1143, %v1142
    %v1146 = vld [vmem:[%s11] sm:$0xff]
    %v1147 = vld [vmem:[%s11 + $0x8] sm:$0xff]
    %1149 = vset.pattern.permute.xlu0 0
    %1150 = vperm.xlu0 %1149, %v1146
    %v1151 = vpop.permute.xlu0 %1150
    %1154 = vset.pattern.permute.xlu0 0
    %1155 = vperm.xlu0 %1154, %v1147
    %v1156 = vpop.permute.xlu0 %1155
    %v1158 = vmul.f32 %v1144, %v1151
    %v1159 = vmul.f32 %v1145, %v1156
    %1162 = vrot.lane.b32.xlu0 %v1116, 64
    %v1163 = vpop.permute.xlu0 %1162
    %1164 = vrot.lane.b32.xlu0 %v1121, 64
    %v1165 = vpop.permute.xlu0 %1164
    %vm1168 = vcmask 523264
    %v1169 = vsel %vm1168, %v1140, %v1163
    %v1170 = vsel %vm1168, %v1141, %v1165
    %v1171 = vpack.c.bf16 %v1170, %v1169
    %v1172 = vpack.c.bf16 %v1159, %v1158
    %v1173 = vld [vmem:[%s15] sm:$0xf]
    %v1174 = vld [vmem:[%s15 + $0x4] sm:$0xf]
    %v1175 = vld [vmem:[%s15 + $0x8] sm:$0xf]
    %v1176 = vld [vmem:[%s15 + $0xc] sm:$0xf]
    %v1177 = vld [vmem:[%s15 + $0x10] sm:$0xf]
    %v1178 = vld [vmem:[%s15 + $0x14] sm:$0xf]
    %v1179 = vld [vmem:[%s15 + $0x18] sm:$0xf]
    %v1180 = vld [vmem:[%s15 + $0x1c] sm:$0xf]
    %v1181 = vld [vmem:[%s15 + $0x20] sm:$0xf]
    %v1182 = vld [vmem:[%s15 + $0x24] sm:$0xf]
    %v1183 = vld [vmem:[%s15 + $0x28] sm:$0xf]
    %v1184 = vld [vmem:[%s15 + $0x2c] sm:$0xf]
    %v1185 = vld [vmem:[%s15 + $0x30] sm:$0xf]
    %v1186 = vld [vmem:[%s15 + $0x34] sm:$0xf]
    %v1187 = vld [vmem:[%s15 + $0x38] sm:$0xf]
    %v1188 = vld [vmem:[%s15 + $0x3c] sm:$0xf]
    %v1189 = vld [vmem:[%s15 + $0x40] sm:$0xf]
    %v1190 = vld [vmem:[%s15 + $0x44] sm:$0xf]
    %v1191 = vld [vmem:[%s15 + $0x48] sm:$0xf]
    %v1192 = vld [vmem:[%s15 + $0x4c] sm:$0xf]
    %v1193 = vld [vmem:[%s15 + $0x50] sm:$0xf]
    %v1194 = vld [vmem:[%s15 + $0x54] sm:$0xf]
    %v1195 = vld [vmem:[%s15 + $0x58] sm:$0xf]
    %v1196 = vld [vmem:[%s15 + $0x5c] sm:$0xf]
    %v1221 = vunpack.c.l.b16 %v1173
    %v1222 = vunpack.c.l.b16 %v1174
    %v1223 = vunpack.c.l.b16 %v1175
    %v1224 = vunpack.c.l.b16 %v1176
    %v1225 = vunpack.c.l.b16 %v1177
    %v1226 = vunpack.c.l.b16 %v1178
    %v1227 = vunpack.c.l.b16 %v1179
    %v1228 = vunpack.c.l.b16 %v1180
    %v1229 = vunpack.c.l.b16 %v1181
    %v1230 = vunpack.c.l.b16 %v1182
    %v1231 = vunpack.c.l.b16 %v1183
    %v1232 = vunpack.c.l.b16 %v1184
    %v1233 = vunpack.c.l.b16 %v1185
    %v1234 = vunpack.c.l.b16 %v1186
    %v1235 = vunpack.c.l.b16 %v1187
    %v1236 = vunpack.c.l.b16 %v1188
    %v1237 = vunpack.c.l.b16 %v1189
    %v1238 = vunpack.c.l.b16 %v1190
    %v1239 = vunpack.c.l.b16 %v1191
    %v1240 = vunpack.c.l.b16 %v1192
    %v1241 = vunpack.c.l.b16 %v1193
    %v1242 = vunpack.c.l.b16 %v1194
    %v1243 = vunpack.c.l.b16 %v1195
    %v1244 = vunpack.c.l.b16 %v1196
    %v1245 = vpack.c.b16 %v1222, %v1221
    %v1246 = vpack.c.b16 %v1224, %v1223
    %v1247 = vpack.c.b16 %v1226, %v1225
    %v1248 = vpack.c.b16 %v1228, %v1227
    %v1249 = vpack.c.b16 %v1230, %v1229
    %v1250 = vpack.c.b16 %v1232, %v1231
    %v1251 = vpack.c.b16 %v1234, %v1233
    %v1252 = vpack.c.b16 %v1236, %v1235
    %v1253 = vpack.c.b16 %v1238, %v1237
    %v1254 = vpack.c.b16 %v1240, %v1239
    %v1255 = vpack.c.b16 %v1242, %v1241
    %v1256 = vpack.c.b16 %v1244, %v1243
    %v1270 = vsel %vm1168, %v1172, 0
    %1272 = vmatprep.subr.bf16.mxu0 0
    %1273 = vmatpush1.bf16.msra.mxu0 %v1252
    %1274 = vmatprep.subr.bf16.mxu0 0
    %1275 = vmatpush1.bf16.msra.mxu0 %v1251
    %1276 = vmatprep.subr.bf16.mxu0 0
    %1277 = vmatpush1.bf16.msra.mxu0 %v1250
    %1278 = vmatprep.subr.bf16.mxu0 0
    %1279 = vmatpush1.bf16.msra.mxu0 %v1249
    %1280 = vmatprep.subr.bf16.mxu0 0
    %1281 = vmatpush1.bf16.msra.mxu0 %v1248
    %1282 = vmatprep.subr.bf16.mxu0 0
    %1283 = vmatpush1.bf16.msra.mxu0 %v1247
    %1284 = vmatprep.subr.bf16.mxu0 0
    %1285 = vmatpush1.bf16.msra.mxu0 %v1246
    %1286 = vmatprep.subr.bf16.mxu0 0
    %1287 = vmatpush1.bf16.msra.mxu0 %v1245
    %1288 = vmatprep.subr.bf16.mxu0 0
    %1289 = vmatpush2.bf16.msra.mxu0 0
    %1290 = vmatprep.subr.bf16.mxu0 0
    %1291 = vmatpush2.bf16.msra.mxu0 0
    %1292 = vmatprep.subr.bf16.mxu0 0
    %1293 = vmatpush2.bf16.msra.mxu0 0
    %1294 = vmatprep.subr.bf16.mxu0 0
    %1295 = vmatpush2.bf16.msra.mxu0 0
    %1296 = vmatprep.subr.bf16.mxu0 0
    %1297 = vmatpush2.bf16.msra.mxu0 %v1256
    %1298 = vmatprep.subr.bf16.mxu0 0
    %1299 = vmatpush2.bf16.msra.mxu0 %v1255
    %1300 = vmatprep.subr.bf16.mxu0 0
    %1301 = vmatpush2.bf16.msra.mxu0 %v1254
    %1302 = vmatprep.subr.bf16.mxu0 0
    %1303 = vmatpush2.bf16.msra.mxu0 %v1253
    %1304 = vmatprep.mubr.bf16.mxu0 %v1270
    %1305 = vmatmul.mubr.bf16.gmra.mxu0 %v1171
    %v1306 = vpop.f32.mrf.mxu0
    %v1307 = vadd.f32 0.0, %v1306
    %v1308 = vpop.f32.mrf.mxu0
    %v1309 = vpop.f32.mrf.mxu0
    %v1310 = vadd.f32 0.0, %v1309
    %v1311 = vpop.f32.mrf.mxu0
    %1312 = vdwg.mxu0
    %v1313 = vsel %vm1168, %v1307, 0.0
    %v1314 = vsel %vm1168, %v1310, 0.0
    %v1315 = vadd.f32 %v1313, %v1314
    %v1316 = vrot.slane %v1315, 4
    %v1317 = vadd.f32 %v1315, %v1316
    %v1318 = vrot.slane %v1317, 2
    %v1319 = vadd.f32 %v1317, %v1318
    %v1320 = vrot.slane %v1319, 1
    %v1321 = vadd.f32 %v1319, %v1320
    %v1322 = vmul.f32 %v1307, %v1307
    %v1323 = vmul.f32 %v1310, %v1310
    %v1324 = vsel %vm1168, %v1322, 0.0
    %v1325 = vsel %vm1168, %v1323, 0.0
    %v1326 = vadd.f32 %v1324, %v1325
    %v1327 = vrot.slane %v1326, 4
    %v1328 = vadd.f32 %v1326, %v1327
    %v1329 = vrot.slane %v1328, 2
    %v1330 = vadd.f32 %v1328, %v1329
    %v1331 = vrot.slane %v1330, 1
    %v1332 = vadd.f32 %v1330, %v1331
    %v1333 = vsel %vm619, %v1321, %v1332
    %v1334 = vld [vmem:[%s9] sm:$0xff]
    %v1335 = vld [vmem:[%s9 + $0x8] sm:$0xff]
    %v1336 = vld [vmem:[%s9 + $0x10] sm:$0xff]
    %v1337 = vld [vmem:[%s9 + $0x18] sm:$0xff]
    %v1338 = vld [vmem:[%s9 + $0x20] sm:$0xff]
    %v1339 = vld [vmem:[%s9 + $0x28] sm:$0xff]
    %v1340 = vld [vmem:[%s9 + $0x30] sm:$0xff]
    %v1341 = vld [vmem:[%s9 + $0x38] sm:$0xff]
    %v1343 = vsel %vm1168, %v1333, 0
    %1345 = vmatprep.subr.mxu0 0.0
    %1346 = vmatpush1.msra.mxu0 0.0
    %1347 = vmatprep.subr.mxu0 0.0
    %1348 = vmatpush1.msra.mxu0 0.0
    %1349 = vmatprep.subr.mxu0 0.0
    %1350 = vmatpush1.msra.mxu0 0.0
    %1351 = vmatprep.subr.mxu0 0.0
    %1352 = vmatpush1.msra.mxu0 0.0
    %1353 = vmatprep.subr.mxu0 0.0
    %1354 = vmatpush1.msra.mxu0 0.0
    %1355 = vmatprep.subr.mxu0 0.0
    %1356 = vmatpush1.msra.mxu0 0.0
    %1357 = vmatprep.subr.mxu0 0.0
    %1358 = vmatpush1.msra.mxu0 0.0
    %1359 = vmatprep.subr.mxu0 0.0
    %1360 = vmatpush1.msra.mxu0 0.0
    %1361 = vmatprep.subr.mxu0 0.0
    %1362 = vmatpush1.msra.mxu0 %v1341
    %1363 = vmatprep.subr.mxu0 0.0
    %1364 = vmatpush1.msra.mxu0 %v1340
    %1365 = vmatprep.subr.mxu0 0.0
    %1366 = vmatpush1.msra.mxu0 %v1339
    %1367 = vmatprep.subr.mxu0 0.0
    %1368 = vmatpush1.msra.mxu0 %v1338
    %1369 = vmatprep.subr.mxu0 0.0
    %1370 = vmatpush1.msra.mxu0 %v1337
    %1371 = vmatprep.subr.mxu0 0.0
    %1372 = vmatpush1.msra.mxu0 %v1336
    %1373 = vmatprep.subr.mxu0 0.0
    %1374 = vmatpush1.msra.mxu0 %v1335
    %1375 = vmatprep.subr.mxu0 0.0
    %1376 = vmatpush1.msra.mxu0 %v1334
    %1377 = vmatprep.subr.mxu0 0.0
    %1378 = vmatpush2.msra.mxu0 0.0
    %1379 = vmatprep.subr.mxu0 0.0
    %1380 = vmatpush2.msra.mxu0 0.0
    %1381 = vmatprep.subr.mxu0 0.0
    %1382 = vmatpush2.msra.mxu0 0.0
    %1383 = vmatprep.subr.mxu0 0.0
    %1384 = vmatpush2.msra.mxu0 0.0
    %1385 = vmatprep.subr.mxu0 0.0
    %1386 = vmatpush2.msra.mxu0 0.0
    %1387 = vmatprep.subr.mxu0 0.0
    %1388 = vmatpush2.msra.mxu0 0.0
    %1389 = vmatprep.subr.mxu0 0.0
    %1390 = vmatpush2.msra.mxu0 0.0
    %1391 = vmatprep.subr.mxu0 0.0
    %1392 = vmatpush2.msra.mxu0 0.0
    %1393 = vmatprep.subr.mxu0 0.0
    %1394 = vmatpush2.msra.mxu0 0.0
    %1395 = vmatprep.subr.mxu0 0.0
    %1396 = vmatpush2.msra.mxu0 0.0
    %1397 = vmatprep.subr.mxu0 0.0
    %1398 = vmatpush2.msra.mxu0 0.0
    %1399 = vmatprep.subr.mxu0 0.0
    %1400 = vmatpush2.msra.mxu0 0.0
    %1401 = vmatprep.subr.mxu0 0.0
    %1402 = vmatpush2.msra.mxu0 0.0
    %1403 = vmatprep.subr.mxu0 0.0
    %1404 = vmatpush2.msra.mxu0 0.0
    %1405 = vmatprep.subr.mxu0 0.0
    %1406 = vmatpush2.msra.mxu0 0.0
    %1407 = vmatprep.subr.mxu0 0.0
    %1408 = vmatpush2.msra.mxu0 0.0
    %1409 = vmatprep.mubr.f32.mxu0 0.0
    %1410 = vmatmul.mubr.f32.gmra.mxu0 %v1343
    %v1411 = vpop.f32.mrf.mxu0
    %v1412 = vadd.f32 0.0, %v1411
    %v1413 = vpop.f32.mrf.mxu0
    %1414 = vdwg.mxu0
    %v1415 = vmul.f32 %v1412, %v1412
    %v1417 = vrot.slane %v1415, 7
    %v1419 = vsub.f32 %v1412, %v1417
    %v1420 = vmax.f32 %v1419, 0.0
    %v1421 = vld [vmem:[%s5] sm:$0x1]
    %v1422 = vadd.f32 %v1420, 1e-05
    %v1423 = vrsqrt.pop %v1422
    %v1426 = vunpack.c.l.s4 1966171168
    %v1427 = vunpack.c.0.s8 %v1426
    %v1428 = vlaneseq
    %v1429 = vshrl.u32 %v1428, 7
    %v1430 = vsub.s32 %v1427, %v1429
    %v1431 = vrot.slane %v1423, %v1430
    %v1432 = vcombine.high %v1431, %v1431
    %v1434 = vunpack.c.l.s4 1966171168
    %v1435 = vunpack.c.0.s8 %v1434
    %v1436 = vlaneseq
    %v1437 = vshrl.u32 %v1436, 7
    %v1438 = vsub.s32 %v1435, %v1437
    %v1439 = vrot.slane %v1432, %v1438
    %v1441 = vmul.f32 %v1421, %v1439
    %v1442 = vld [vmem:[%s3] sm:$0x1]
    %v1443 = vmul.f32 %v1412, %v1441
    %v1444 = vsub.f32 %v1442, %v1443
    %v1446 = vlaneseq
    %v1447 = vshrl.u32 %v1446, 7
    %v1448 = vsub.s32 0, %v1447
    %v1449 = vrot.slane %v1444, %v1448
    %v1451 = vsel %vm619, %v1441, %v1449
    %v1452 = vld [vmem:[%s7] sm:$0xff]
    %v1454 = vsel %vm745, %v1451, 0
    %1456 = vmatprep.subr.mxu0 0.0
    %1457 = vmatpush1.msra.mxu0 0.0
    %1458 = vmatprep.subr.mxu0 0.0
    %1459 = vmatpush1.msra.mxu0 0.0
    %1460 = vmatprep.subr.mxu0 0.0
    %1461 = vmatpush1.msra.mxu0 0.0
    %1462 = vmatprep.subr.mxu0 0.0
    %1463 = vmatpush1.msra.mxu0 0.0
    %1464 = vmatprep.subr.mxu0 0.0
    %1465 = vmatpush1.msra.mxu0 0.0
    %1466 = vmatprep.subr.mxu0 0.0
    %1467 = vmatpush1.msra.mxu0 0.0
    %1468 = vmatprep.subr.mxu0 0.0
    %1469 = vmatpush1.msra.mxu0 0.0
    %1470 = vmatprep.subr.mxu0 0.0
    %1471 = vmatpush1.msra.mxu0 0.0
    %1472 = vmatprep.subr.mxu0 0.0
    %1473 = vmatpush1.msra.mxu0 0.0
    %1474 = vmatprep.subr.mxu0 0.0
    %1475 = vmatpush1.msra.mxu0 0.0
    %1476 = vmatprep.subr.mxu0 0.0
    %1477 = vmatpush1.msra.mxu0 0.0
    %1478 = vmatprep.subr.mxu0 0.0
    %1479 = vmatpush1.msra.mxu0 0.0
    %1480 = vmatprep.subr.mxu0 0.0
    %1481 = vmatpush1.msra.mxu0 0.0
    %1482 = vmatprep.subr.mxu0 0.0
    %1483 = vmatpush1.msra.mxu0 0.0
    %1484 = vmatprep.subr.mxu0 0.0
    %1485 = vmatpush1.msra.mxu0 0.0
    %1486 = vmatprep.subr.mxu0 0.0
    %1487 = vmatpush1.msra.mxu0 %v1452
    %1488 = vmatprep.subr.mxu0 0.0
    %1489 = vmatpush2.msra.mxu0 0.0
    %1490 = vmatprep.subr.mxu0 0.0
    %1491 = vmatpush2.msra.mxu0 0.0
    %1492 = vmatprep.subr.mxu0 0.0
    %1493 = vmatpush2.msra.mxu0 0.0
    %1494 = vmatprep.subr.mxu0 0.0
    %1495 = vmatpush2.msra.mxu0 0.0
    %1496 = vmatprep.subr.mxu0 0.0
    %1497 = vmatpush2.msra.mxu0 0.0
    %1498 = vmatprep.subr.mxu0 0.0
    %1499 = vmatpush2.msra.mxu0 0.0
    %1500 = vmatprep.subr.mxu0 0.0
    %1501 = vmatpush2.msra.mxu0 0.0
    %1502 = vmatprep.subr.mxu0 0.0
    %1503 = vmatpush2.msra.mxu0 0.0
    %1504 = vmatprep.subr.mxu0 0.0
    %1505 = vmatpush2.msra.mxu0 0.0
    %1506 = vmatprep.subr.mxu0 0.0
    %1507 = vmatpush2.msra.mxu0 0.0
    %1508 = vmatprep.subr.mxu0 0.0
    %1509 = vmatpush2.msra.mxu0 0.0
    %1510 = vmatprep.subr.mxu0 0.0
    %1511 = vmatpush2.msra.mxu0 0.0
    %1512 = vmatprep.subr.mxu0 0.0
    %1513 = vmatpush2.msra.mxu0 0.0
    %1514 = vmatprep.subr.mxu0 0.0
    %1515 = vmatpush2.msra.mxu0 0.0
    %1516 = vmatprep.subr.mxu0 0.0
    %1517 = vmatpush2.msra.mxu0 0.0
    %1518 = vmatprep.subr.mxu0 0.0
    %1519 = vmatpush2.msra.mxu0 0.0
    %1520 = vmatprep.mubr.f32.mxu0 0.0
    %1521 = vmatmul.mubr.f32.gmra.mxu0 %v1454
    %v1522 = vpop.f32.mrf.mxu0
    %v1523 = vadd.f32 0.0, %v1522
    %v1524 = vpop.f32.mrf.mxu0
    %1525 = vdwg.mxu0
    %v1526 = vlaneseq
    %v1527 = vshrl.u32 %v1526, 7
    %v1528 = vsub.s32 0, %v1527
    %v1529 = vrot.slane %v1523, %v1528
    %v1530 = vmul.f32 %v1307, %v1529
    %v1531 = vmul.f32 %v1310, %v1529
    %v1532 = vlaneseq
    %v1533 = vshrl.u32 %v1532, 7
    %v1534 = vsub.s32 1, %v1533
    %v1535 = vrot.slane %v1523, %v1534
    %v1536 = vadd.f32 %v1530, %v1535
    %v1537 = vadd.f32 %v1531, %v1535
    %v1538 = vmax.f32 %v1536, 0.0
    %v1539 = vmax.f32 %v1537, 0.0
    %v1540 = vrot.slane %v1538, 7
    %v1541 = vrot.slane %v1539, 7
    %v1542 = vsel %vm353, %v1540, %v1541
    %v1543 = vsel %vm353, %v1541, %v1540
    %v1544 = vld [vmem:[%s27] sm:$0xff]
    %v1545 = vld [vmem:[%s27 + $0x8] sm:$0xff]
    %1547 = vset.pattern.permute.xlu0 0
    %1548 = vperm.xlu0 %1547, %v1544
    %v1549 = vpop.permute.xlu0 %1548
    %1552 = vset.pattern.permute.xlu0 0
    %1553 = vperm.xlu0 %1552, %v1545
    %v1554 = vpop.permute.xlu0 %1553
    %v1556 = vmul.f32 %v1543, %v1549
    %v1557 = vmul.f32 %v1542, %v1554
    %v1558 = vrot.slane %v1538, 1
    %v1559 = vrot.slane %v1539, 1
    %v1560 = vsel %vm390, %v1558, %v1559
    %v1561 = vsel %vm390, %v1559, %v1558
    %v1562 = vld [vmem:[%s25] sm:$0xff]
    %v1563 = vld [vmem:[%s25 + $0x8] sm:$0xff]
    %1565 = vset.pattern.permute.xlu0 0
    %1566 = vperm.xlu0 %1565, %v1562
    %v1567 = vpop.permute.xlu0 %1566
    %1570 = vset.pattern.permute.xlu0 0
    %1571 = vperm.xlu0 %1570, %v1563
    %v1572 = vpop.permute.xlu0 %1571
    %v1574 = vmul.f32 %v1560, %v1567
    %v1575 = vmul.f32 %v1561, %v1572
    %1578 = vrot.lane.b32.xlu0 %v1538, 64
    %v1579 = vpop.permute.xlu0 %1578
    %1580 = vrot.lane.b32.xlu0 %v1539, 64
    %v1581 = vpop.permute.xlu0 %1580
    %v1584 = vsel %vm1168, %v1556, %v1579
    %v1585 = vsel %vm1168, %v1557, %v1581
    %v1586 = vpack.c.bf16 %v1585, %v1584
    %v1587 = vpack.c.bf16 %v1575, %v1574
    %v1588 = vld [vmem:[%s29] sm:$0xf]
    %v1589 = vld [vmem:[%s29 + $0x4] sm:$0xf]
    %v1590 = vld [vmem:[%s29 + $0x8] sm:$0xf]
    %v1591 = vld [vmem:[%s29 + $0xc] sm:$0xf]
    %v1592 = vld [vmem:[%s29 + $0x10] sm:$0xf]
    %v1593 = vld [vmem:[%s29 + $0x14] sm:$0xf]
    %v1594 = vld [vmem:[%s29 + $0x18] sm:$0xf]
    %v1595 = vld [vmem:[%s29 + $0x1c] sm:$0xf]
    %v1596 = vld [vmem:[%s29 + $0x20] sm:$0xf]
    %v1597 = vld [vmem:[%s29 + $0x24] sm:$0xf]
    %v1598 = vld [vmem:[%s29 + $0x28] sm:$0xf]
    %v1599 = vld [vmem:[%s29 + $0x2c] sm:$0xf]
    %v1600 = vld [vmem:[%s29 + $0x30] sm:$0xf]
    %v1601 = vld [vmem:[%s29 + $0x34] sm:$0xf]
    %v1602 = vld [vmem:[%s29 + $0x38] sm:$0xf]
    %v1603 = vld [vmem:[%s29 + $0x3c] sm:$0xf]
    %v1604 = vld [vmem:[%s29 + $0x40] sm:$0xf]
    %v1605 = vld [vmem:[%s29 + $0x44] sm:$0xf]
    %v1606 = vld [vmem:[%s29 + $0x48] sm:$0xf]
    %v1607 = vld [vmem:[%s29 + $0x4c] sm:$0xf]
    %v1608 = vld [vmem:[%s29 + $0x50] sm:$0xf]
    %v1609 = vld [vmem:[%s29 + $0x54] sm:$0xf]
    %v1610 = vld [vmem:[%s29 + $0x58] sm:$0xf]
    %v1611 = vld [vmem:[%s29 + $0x5c] sm:$0xf]
    %v1636 = vunpack.c.l.b16 %v1588
    %v1637 = vunpack.c.l.b16 %v1589
    %v1638 = vunpack.c.l.b16 %v1590
    %v1639 = vunpack.c.l.b16 %v1591
    %v1640 = vunpack.c.l.b16 %v1592
    %v1641 = vunpack.c.l.b16 %v1593
    %v1642 = vunpack.c.l.b16 %v1594
    %v1643 = vunpack.c.l.b16 %v1595
    %v1644 = vunpack.c.l.b16 %v1596
    %v1645 = vunpack.c.l.b16 %v1597
    %v1646 = vunpack.c.l.b16 %v1598
    %v1647 = vunpack.c.l.b16 %v1599
    %v1648 = vunpack.c.l.b16 %v1600
    %v1649 = vunpack.c.l.b16 %v1601
    %v1650 = vunpack.c.l.b16 %v1602
    %v1651 = vunpack.c.l.b16 %v1603
    %v1652 = vunpack.c.l.b16 %v1604
    %v1653 = vunpack.c.l.b16 %v1605
    %v1654 = vunpack.c.l.b16 %v1606
    %v1655 = vunpack.c.l.b16 %v1607
    %v1656 = vunpack.c.l.b16 %v1608
    %v1657 = vunpack.c.l.b16 %v1609
    %v1658 = vunpack.c.l.b16 %v1610
    %v1659 = vunpack.c.l.b16 %v1611
    %v1660 = vpack.c.b16 %v1637, %v1636
    %v1661 = vpack.c.b16 %v1639, %v1638
    %v1662 = vpack.c.b16 %v1641, %v1640
    %v1663 = vpack.c.b16 %v1643, %v1642
    %v1664 = vpack.c.b16 %v1645, %v1644
    %v1665 = vpack.c.b16 %v1647, %v1646
    %v1666 = vpack.c.b16 %v1649, %v1648
    %v1667 = vpack.c.b16 %v1651, %v1650
    %v1668 = vpack.c.b16 %v1653, %v1652
    %v1669 = vpack.c.b16 %v1655, %v1654
    %v1670 = vpack.c.b16 %v1657, %v1656
    %v1671 = vpack.c.b16 %v1659, %v1658
    %v1685 = vsel %vm1168, %v1587, 0
    %1687 = vmatprep.subr.bf16.mxu0 0
    %1688 = vmatpush1.bf16.msra.mxu0 %v1667
    %1689 = vmatprep.subr.bf16.mxu0 0
    %1690 = vmatpush1.bf16.msra.mxu0 %v1666
    %1691 = vmatprep.subr.bf16.mxu0 0
    %1692 = vmatpush1.bf16.msra.mxu0 %v1665
    %1693 = vmatprep.subr.bf16.mxu0 0
    %1694 = vmatpush1.bf16.msra.mxu0 %v1664
    %1695 = vmatprep.subr.bf16.mxu0 0
    %1696 = vmatpush1.bf16.msra.mxu0 %v1663
    %1697 = vmatprep.subr.bf16.mxu0 0
    %1698 = vmatpush1.bf16.msra.mxu0 %v1662
    %1699 = vmatprep.subr.bf16.mxu0 0
    %1700 = vmatpush1.bf16.msra.mxu0 %v1661
    %1701 = vmatprep.subr.bf16.mxu0 0
    %1702 = vmatpush1.bf16.msra.mxu0 %v1660
    %1703 = vmatprep.subr.bf16.mxu0 0
    %1704 = vmatpush2.bf16.msra.mxu0 0
    %1705 = vmatprep.subr.bf16.mxu0 0
    %1706 = vmatpush2.bf16.msra.mxu0 0
    %1707 = vmatprep.subr.bf16.mxu0 0
    %1708 = vmatpush2.bf16.msra.mxu0 0
    %1709 = vmatprep.subr.bf16.mxu0 0
    %1710 = vmatpush2.bf16.msra.mxu0 0
    %1711 = vmatprep.subr.bf16.mxu0 0
    %1712 = vmatpush2.bf16.msra.mxu0 %v1671
    %1713 = vmatprep.subr.bf16.mxu0 0
    %1714 = vmatpush2.bf16.msra.mxu0 %v1670
    %1715 = vmatprep.subr.bf16.mxu0 0
    %1716 = vmatpush2.bf16.msra.mxu0 %v1669
    %1717 = vmatprep.subr.bf16.mxu0 0
    %1718 = vmatpush2.bf16.msra.mxu0 %v1668
    %1719 = vmatprep.mubr.bf16.mxu0 %v1685
    %1720 = vmatmul.mubr.bf16.gmra.mxu0 %v1586
    %v1721 = vpop.f32.mrf.mxu0
    %v1722 = vadd.f32 0.0, %v1721
    %v1723 = vpop.f32.mrf.mxu0
    %v1724 = vpop.f32.mrf.mxu0
    %v1725 = vadd.f32 0.0, %v1724
    %v1726 = vpop.f32.mrf.mxu0
    %1727 = vdwg.mxu0
    %v1728 = vsel %vm1168, %v1722, 0.0
    %v1729 = vsel %vm1168, %v1725, 0.0
    %v1730 = vadd.f32 %v1728, %v1729
    %v1731 = vrot.slane %v1730, 4
    %v1732 = vadd.f32 %v1730, %v1731
    %v1733 = vrot.slane %v1732, 2
    %v1734 = vadd.f32 %v1732, %v1733
    %v1735 = vrot.slane %v1734, 1
    %v1736 = vadd.f32 %v1734, %v1735
    %v1737 = vmul.f32 %v1722, %v1722
    %v1738 = vmul.f32 %v1725, %v1725
    %v1739 = vsel %vm1168, %v1737, 0.0
    %v1740 = vsel %vm1168, %v1738, 0.0
    %v1741 = vadd.f32 %v1739, %v1740
    %v1742 = vrot.slane %v1741, 4
    %v1743 = vadd.f32 %v1741, %v1742
    %v1744 = vrot.slane %v1743, 2
    %v1745 = vadd.f32 %v1743, %v1744
    %v1746 = vrot.slane %v1745, 1
    %v1747 = vadd.f32 %v1745, %v1746
    %v1748 = vsel %vm619, %v1736, %v1747
    %v1749 = vld [vmem:[%s23] sm:$0xff]
    %v1750 = vld [vmem:[%s23 + $0x8] sm:$0xff]
    %v1751 = vld [vmem:[%s23 + $0x10] sm:$0xff]
    %v1752 = vld [vmem:[%s23 + $0x18] sm:$0xff]
    %v1753 = vld [vmem:[%s23 + $0x20] sm:$0xff]
    %v1754 = vld [vmem:[%s23 + $0x28] sm:$0xff]
    %v1755 = vld [vmem:[%s23 + $0x30] sm:$0xff]
    %v1756 = vld [vmem:[%s23 + $0x38] sm:$0xff]
    %v1758 = vsel %vm1168, %v1748, 0
    %1760 = vmatprep.subr.mxu0 0.0
    %1761 = vmatpush1.msra.mxu0 0.0
    %1762 = vmatprep.subr.mxu0 0.0
    %1763 = vmatpush1.msra.mxu0 0.0
    %1764 = vmatprep.subr.mxu0 0.0
    %1765 = vmatpush1.msra.mxu0 0.0
    %1766 = vmatprep.subr.mxu0 0.0
    %1767 = vmatpush1.msra.mxu0 0.0
    %1768 = vmatprep.subr.mxu0 0.0
    %1769 = vmatpush1.msra.mxu0 0.0
    %1770 = vmatprep.subr.mxu0 0.0
    %1771 = vmatpush1.msra.mxu0 0.0
    %1772 = vmatprep.subr.mxu0 0.0
    %1773 = vmatpush1.msra.mxu0 0.0
    %1774 = vmatprep.subr.mxu0 0.0
    %1775 = vmatpush1.msra.mxu0 0.0
    %1776 = vmatprep.subr.mxu0 0.0
    %1777 = vmatpush1.msra.mxu0 %v1756
    %1778 = vmatprep.subr.mxu0 0.0
    %1779 = vmatpush1.msra.mxu0 %v1755
    %1780 = vmatprep.subr.mxu0 0.0
    %1781 = vmatpush1.msra.mxu0 %v1754
    %1782 = vmatprep.subr.mxu0 0.0
    %1783 = vmatpush1.msra.mxu0 %v1753
    %1784 = vmatprep.subr.mxu0 0.0
    %1785 = vmatpush1.msra.mxu0 %v1752
    %1786 = vmatprep.subr.mxu0 0.0
    %1787 = vmatpush1.msra.mxu0 %v1751
    %1788 = vmatprep.subr.mxu0 0.0
    %1789 = vmatpush1.msra.mxu0 %v1750
    %1790 = vmatprep.subr.mxu0 0.0
    %1791 = vmatpush1.msra.mxu0 %v1749
    %1792 = vmatprep.subr.mxu0 0.0
    %1793 = vmatpush2.msra.mxu0 0.0
    %1794 = vmatprep.subr.mxu0 0.0
    %1795 = vmatpush2.msra.mxu0 0.0
    %1796 = vmatprep.subr.mxu0 0.0
    %1797 = vmatpush2.msra.mxu0 0.0
    %1798 = vmatprep.subr.mxu0 0.0
    %1799 = vmatpush2.msra.mxu0 0.0
    %1800 = vmatprep.subr.mxu0 0.0
    %1801 = vmatpush2.msra.mxu0 0.0
    %1802 = vmatprep.subr.mxu0 0.0
    %1803 = vmatpush2.msra.mxu0 0.0
    %1804 = vmatprep.subr.mxu0 0.0
    %1805 = vmatpush2.msra.mxu0 0.0
    %1806 = vmatprep.subr.mxu0 0.0
    %1807 = vmatpush2.msra.mxu0 0.0
    %1808 = vmatprep.subr.mxu0 0.0
    %1809 = vmatpush2.msra.mxu0 0.0
    %1810 = vmatprep.subr.mxu0 0.0
    %1811 = vmatpush2.msra.mxu0 0.0
    %1812 = vmatprep.subr.mxu0 0.0
    %1813 = vmatpush2.msra.mxu0 0.0
    %1814 = vmatprep.subr.mxu0 0.0
    %1815 = vmatpush2.msra.mxu0 0.0
    %1816 = vmatprep.subr.mxu0 0.0
    %1817 = vmatpush2.msra.mxu0 0.0
    %1818 = vmatprep.subr.mxu0 0.0
    %1819 = vmatpush2.msra.mxu0 0.0
    %1820 = vmatprep.subr.mxu0 0.0
    %1821 = vmatpush2.msra.mxu0 0.0
    %1822 = vmatprep.subr.mxu0 0.0
    %1823 = vmatpush2.msra.mxu0 0.0
    %1824 = vmatprep.mubr.f32.mxu0 0.0
    %1825 = vmatmul.mubr.f32.gmra.mxu0 %v1758
    %v1826 = vpop.f32.mrf.mxu0
    %v1827 = vadd.f32 0.0, %v1826
    %v1828 = vpop.f32.mrf.mxu0
    %1829 = vdwg.mxu0
    %v1830 = vmul.f32 %v1827, %v1827
    %v1832 = vrot.slane %v1830, 7
    %v1834 = vsub.f32 %v1827, %v1832
    %v1835 = vmax.f32 %v1834, 0.0
    %v1836 = vld [vmem:[%s19] sm:$0x1]
    %v1837 = vadd.f32 %v1835, 1e-05
    %v1838 = vrsqrt.pop %v1837
    %v1841 = vunpack.c.l.s4 1966171168
    %v1842 = vunpack.c.0.s8 %v1841
    %v1843 = vlaneseq
    %v1844 = vshrl.u32 %v1843, 7
    %v1845 = vsub.s32 %v1842, %v1844
    %v1846 = vrot.slane %v1838, %v1845
    %v1847 = vcombine.high %v1846, %v1846
    %v1849 = vunpack.c.l.s4 1966171168
    %v1850 = vunpack.c.0.s8 %v1849
    %v1851 = vlaneseq
    %v1852 = vshrl.u32 %v1851, 7
    %v1853 = vsub.s32 %v1850, %v1852
    %v1854 = vrot.slane %v1847, %v1853
    %v1856 = vmul.f32 %v1836, %v1854
    %v1857 = vld [vmem:[%s17] sm:$0x1]
    %v1858 = vmul.f32 %v1827, %v1856
    %v1859 = vsub.f32 %v1857, %v1858
    %v1861 = vlaneseq
    %v1862 = vshrl.u32 %v1861, 7
    %v1863 = vsub.s32 0, %v1862
    %v1864 = vrot.slane %v1859, %v1863
    %v1866 = vsel %vm619, %v1856, %v1864
    %v1867 = vld [vmem:[%s21] sm:$0xff]
    %v1869 = vsel %vm745, %v1866, 0
    %1871 = vmatprep.subr.mxu0 0.0
    %1872 = vmatpush1.msra.mxu0 0.0
    %1873 = vmatprep.subr.mxu0 0.0
    %1874 = vmatpush1.msra.mxu0 0.0
    %1875 = vmatprep.subr.mxu0 0.0
    %1876 = vmatpush1.msra.mxu0 0.0
    %1877 = vmatprep.subr.mxu0 0.0
    %1878 = vmatpush1.msra.mxu0 0.0
    %1879 = vmatprep.subr.mxu0 0.0
    %1880 = vmatpush1.msra.mxu0 0.0
    %1881 = vmatprep.subr.mxu0 0.0
    %1882 = vmatpush1.msra.mxu0 0.0
    %1883 = vmatprep.subr.mxu0 0.0
    %1884 = vmatpush1.msra.mxu0 0.0
    %1885 = vmatprep.subr.mxu0 0.0
    %1886 = vmatpush1.msra.mxu0 0.0
    %1887 = vmatprep.subr.mxu0 0.0
    %1888 = vmatpush1.msra.mxu0 0.0
    %1889 = vmatprep.subr.mxu0 0.0
    %1890 = vmatpush1.msra.mxu0 0.0
    %1891 = vmatprep.subr.mxu0 0.0
    %1892 = vmatpush1.msra.mxu0 0.0
    %1893 = vmatprep.subr.mxu0 0.0
    %1894 = vmatpush1.msra.mxu0 0.0
    %1895 = vmatprep.subr.mxu0 0.0
    %1896 = vmatpush1.msra.mxu0 0.0
    %1897 = vmatprep.subr.mxu0 0.0
    %1898 = vmatpush1.msra.mxu0 0.0
    %1899 = vmatprep.subr.mxu0 0.0
    %1900 = vmatpush1.msra.mxu0 0.0
    %1901 = vmatprep.subr.mxu0 0.0
    %1902 = vmatpush1.msra.mxu0 %v1867
    %1903 = vmatprep.subr.mxu0 0.0
    %1904 = vmatpush2.msra.mxu0 0.0
    %1905 = vmatprep.subr.mxu0 0.0
    %1906 = vmatpush2.msra.mxu0 0.0
    %1907 = vmatprep.subr.mxu0 0.0
    %1908 = vmatpush2.msra.mxu0 0.0
    %1909 = vmatprep.subr.mxu0 0.0
    %1910 = vmatpush2.msra.mxu0 0.0
    %1911 = vmatprep.subr.mxu0 0.0
    %1912 = vmatpush2.msra.mxu0 0.0
    %1913 = vmatprep.subr.mxu0 0.0
    %1914 = vmatpush2.msra.mxu0 0.0
    %1915 = vmatprep.subr.mxu0 0.0
    %1916 = vmatpush2.msra.mxu0 0.0
    %1917 = vmatprep.subr.mxu0 0.0
    %1918 = vmatpush2.msra.mxu0 0.0
    %1919 = vmatprep.subr.mxu0 0.0
    %1920 = vmatpush2.msra.mxu0 0.0
    %1921 = vmatprep.subr.mxu0 0.0
    %1922 = vmatpush2.msra.mxu0 0.0
    %1923 = vmatprep.subr.mxu0 0.0
    %1924 = vmatpush2.msra.mxu0 0.0
    %1925 = vmatprep.subr.mxu0 0.0
    %1926 = vmatpush2.msra.mxu0 0.0
    %1927 = vmatprep.subr.mxu0 0.0
    %1928 = vmatpush2.msra.mxu0 0.0
    %1929 = vmatprep.subr.mxu0 0.0
    %1930 = vmatpush2.msra.mxu0 0.0
    %1931 = vmatprep.subr.mxu0 0.0
    %1932 = vmatpush2.msra.mxu0 0.0
    %1933 = vmatprep.subr.mxu0 0.0
    %1934 = vmatpush2.msra.mxu0 0.0
    %1935 = vmatprep.mubr.f32.mxu0 0.0
    %1936 = vmatmul.mubr.f32.gmra.mxu0 %v1869
    %v1937 = vpop.f32.mrf.mxu0
    %v1938 = vadd.f32 0.0, %v1937
    %v1939 = vpop.f32.mrf.mxu0
    %1940 = vdwg.mxu0
    %v1941 = vlaneseq
    %v1942 = vshrl.u32 %v1941, 7
    %v1943 = vsub.s32 0, %v1942
    %v1944 = vrot.slane %v1938, %v1943
    %v1945 = vmul.f32 %v1722, %v1944
    %v1946 = vmul.f32 %v1725, %v1944
    %v1947 = vlaneseq
    %v1948 = vshrl.u32 %v1947, 7
    %v1949 = vsub.s32 1, %v1948
    %v1950 = vrot.slane %v1938, %v1949
    %v1951 = vadd.f32 %v1945, %v1950
    %v1952 = vadd.f32 %v1946, %v1950
    %v1953 = vadd.f32 %v1951, %v1116
    %v1954 = vadd.f32 %v1952, %v1121
    %v1955 = vmax.f32 %v1953, 0.0
    %v1956 = vmax.f32 %v1954, 0.0
    %v1957 = vrot.slane %v1955, 7
    %v1958 = vrot.slane %v1956, 7
    %v1959 = vsel %vm353, %v1957, %v1958
    %v1960 = vsel %vm353, %v1958, %v1957
    %v1961 = vld [vmem:[%s43] sm:$0xff]
    %v1962 = vld [vmem:[%s43 + $0x8] sm:$0xff]
    %1964 = vset.pattern.permute.xlu0 0
    %1965 = vperm.xlu0 %1964, %v1961
    %v1966 = vpop.permute.xlu0 %1965
    %1969 = vset.pattern.permute.xlu0 0
    %1970 = vperm.xlu0 %1969, %v1962
    %v1971 = vpop.permute.xlu0 %1970
    %v1973 = vmul.f32 %v1960, %v1966
    %v1974 = vmul.f32 %v1959, %v1971
    %v1975 = vrot.slane %v1955, 1
    %v1976 = vrot.slane %v1956, 1
    %v1977 = vsel %vm390, %v1975, %v1976
    %v1978 = vsel %vm390, %v1976, %v1975
    %v1979 = vld [vmem:[%s41] sm:$0xff]
    %v1980 = vld [vmem:[%s41 + $0x8] sm:$0xff]
    %1982 = vset.pattern.permute.xlu0 0
    %1983 = vperm.xlu0 %1982, %v1979
    %v1984 = vpop.permute.xlu0 %1983
    %1987 = vset.pattern.permute.xlu0 0
    %1988 = vperm.xlu0 %1987, %v1980
    %v1989 = vpop.permute.xlu0 %1988
    %v1991 = vmul.f32 %v1977, %v1984
    %v1992 = vmul.f32 %v1978, %v1989
    %1995 = vrot.lane.b32.xlu0 %v1955, 64
    %v1996 = vpop.permute.xlu0 %1995
    %1997 = vrot.lane.b32.xlu0 %v1956, 64
    %v1998 = vpop.permute.xlu0 %1997
    %v2001 = vsel %vm1168, %v1973, %v1996
    %v2002 = vsel %vm1168, %v1974, %v1998
    %v2003 = vpack.c.bf16 %v2002, %v2001
    %v2004 = vpack.c.bf16 %v1992, %v1991
    %v2005 = vld [vmem:[%s45] sm:$0xf]
    %v2006 = vld [vmem:[%s45 + $0x4] sm:$0xf]
    %v2007 = vld [vmem:[%s45 + $0x8] sm:$0xf]
    %v2008 = vld [vmem:[%s45 + $0xc] sm:$0xf]
    %v2009 = vld [vmem:[%s45 + $0x10] sm:$0xf]
    %v2010 = vld [vmem:[%s45 + $0x14] sm:$0xf]
    %v2011 = vld [vmem:[%s45 + $0x18] sm:$0xf]
    %v2012 = vld [vmem:[%s45 + $0x1c] sm:$0xf]
    %v2013 = vld [vmem:[%s45 + $0x20] sm:$0xf]
    %v2014 = vld [vmem:[%s45 + $0x24] sm:$0xf]
    %v2015 = vld [vmem:[%s45 + $0x28] sm:$0xf]
    %v2016 = vld [vmem:[%s45 + $0x2c] sm:$0xf]
    %v2017 = vld [vmem:[%s45 + $0x30] sm:$0xf]
    %v2018 = vld [vmem:[%s45 + $0x34] sm:$0xf]
    %v2019 = vld [vmem:[%s45 + $0x38] sm:$0xf]
    %v2020 = vld [vmem:[%s45 + $0x3c] sm:$0xf]
    %v2021 = vld [vmem:[%s45 + $0x40] sm:$0xf]
    %v2022 = vld [vmem:[%s45 + $0x44] sm:$0xf]
    %v2023 = vld [vmem:[%s45 + $0x48] sm:$0xf]
    %v2024 = vld [vmem:[%s45 + $0x4c] sm:$0xf]
    %v2025 = vld [vmem:[%s45 + $0x50] sm:$0xf]
    %v2026 = vld [vmem:[%s45 + $0x54] sm:$0xf]
    %v2027 = vld [vmem:[%s45 + $0x58] sm:$0xf]
    %v2028 = vld [vmem:[%s45 + $0x5c] sm:$0xf]
    %v2053 = vunpack.c.l.b16 %v2005
    %v2054 = vunpack.c.l.b16 %v2006
    %v2055 = vunpack.c.l.b16 %v2007
    %v2056 = vunpack.c.l.b16 %v2008
    %v2057 = vunpack.c.l.b16 %v2009
    %v2058 = vunpack.c.l.b16 %v2010
    %v2059 = vunpack.c.l.b16 %v2011
    %v2060 = vunpack.c.l.b16 %v2012
    %v2061 = vunpack.c.l.b16 %v2013
    %v2062 = vunpack.c.l.b16 %v2014
    %v2063 = vunpack.c.l.b16 %v2015
    %v2064 = vunpack.c.l.b16 %v2016
    %v2065 = vunpack.c.l.b16 %v2017
    %v2066 = vunpack.c.l.b16 %v2018
    %v2067 = vunpack.c.l.b16 %v2019
    %v2068 = vunpack.c.l.b16 %v2020
    %v2069 = vunpack.c.l.b16 %v2021
    %v2070 = vunpack.c.l.b16 %v2022
    %v2071 = vunpack.c.l.b16 %v2023
    %v2072 = vunpack.c.l.b16 %v2024
    %v2073 = vunpack.c.l.b16 %v2025
    %v2074 = vunpack.c.l.b16 %v2026
    %v2075 = vunpack.c.l.b16 %v2027
    %v2076 = vunpack.c.l.b16 %v2028
    %v2077 = vpack.c.b16 %v2054, %v2053
    %v2078 = vpack.c.b16 %v2056, %v2055
    %v2079 = vpack.c.b16 %v2058, %v2057
    %v2080 = vpack.c.b16 %v2060, %v2059
    %v2081 = vpack.c.b16 %v2062, %v2061
    %v2082 = vpack.c.b16 %v2064, %v2063
    %v2083 = vpack.c.b16 %v2066, %v2065
    %v2084 = vpack.c.b16 %v2068, %v2067
    %v2085 = vpack.c.b16 %v2070, %v2069
    %v2086 = vpack.c.b16 %v2072, %v2071
    %v2087 = vpack.c.b16 %v2074, %v2073
    %v2088 = vpack.c.b16 %v2076, %v2075
    %v2102 = vsel %vm1168, %v2004, 0
    %2104 = vmatprep.subr.bf16.mxu0 0
    %2105 = vmatpush1.bf16.msra.mxu0 %v2084
    %2106 = vmatprep.subr.bf16.mxu0 0
    %2107 = vmatpush1.bf16.msra.mxu0 %v2083
    %2108 = vmatprep.subr.bf16.mxu0 0
    %2109 = vmatpush1.bf16.msra.mxu0 %v2082
    %2110 = vmatprep.subr.bf16.mxu0 0
    %2111 = vmatpush1.bf16.msra.mxu0 %v2081
    %2112 = vmatprep.subr.bf16.mxu0 0
    %2113 = vmatpush1.bf16.msra.mxu0 %v2080
    %2114 = vmatprep.subr.bf16.mxu0 0
    %2115 = vmatpush1.bf16.msra.mxu0 %v2079
    %2116 = vmatprep.subr.bf16.mxu0 0
    %2117 = vmatpush1.bf16.msra.mxu0 %v2078
    %2118 = vmatprep.subr.bf16.mxu0 0
    %2119 = vmatpush1.bf16.msra.mxu0 %v2077
    %2120 = vmatprep.subr.bf16.mxu0 0
    %2121 = vmatpush2.bf16.msra.mxu0 0
    %2122 = vmatprep.subr.bf16.mxu0 0
    %2123 = vmatpush2.bf16.msra.mxu0 0
    %2124 = vmatprep.subr.bf16.mxu0 0
    %2125 = vmatpush2.bf16.msra.mxu0 0
    %2126 = vmatprep.subr.bf16.mxu0 0
    %2127 = vmatpush2.bf16.msra.mxu0 0
    %2128 = vmatprep.subr.bf16.mxu0 0
    %2129 = vmatpush2.bf16.msra.mxu0 %v2088
    %2130 = vmatprep.subr.bf16.mxu0 0
    %2131 = vmatpush2.bf16.msra.mxu0 %v2087
    %2132 = vmatprep.subr.bf16.mxu0 0
    %2133 = vmatpush2.bf16.msra.mxu0 %v2086
    %2134 = vmatprep.subr.bf16.mxu0 0
    %2135 = vmatpush2.bf16.msra.mxu0 %v2085
    %2136 = vmatprep.mubr.bf16.mxu0 %v2102
    %2137 = vmatmul.mubr.bf16.gmra.mxu0 %v2003
    %v2138 = vpop.f32.mrf.mxu0
    %v2139 = vadd.f32 0.0, %v2138
    %v2140 = vpop.f32.mrf.mxu0
    %v2141 = vpop.f32.mrf.mxu0
    %v2142 = vadd.f32 0.0, %v2141
    %v2143 = vpop.f32.mrf.mxu0
    %2144 = vdwg.mxu0
    %v2145 = vld [vmem:[%s33] sm:$0xff]
    %v2147 = vsel %vm541, %v2145, 0
    %2149 = vmatprep.subr.mxu0 0.0
    %2150 = vmatpush1.msra.mxu0 0.0
    %2151 = vmatprep.subr.mxu0 0.0
    %2152 = vmatpush1.msra.mxu0 0.0
    %2153 = vmatprep.subr.mxu0 0.0
    %2154 = vmatpush1.msra.mxu0 0.0
    %2155 = vmatprep.subr.mxu0 0.0
    %2156 = vmatpush1.msra.mxu0 0.0
    %2157 = vmatprep.subr.mxu0 0.0
    %2158 = vmatpush1.msra.mxu0 0.0
    %2159 = vmatprep.subr.mxu0 0.0
    %2160 = vmatpush1.msra.mxu0 0.0
    %2161 = vmatprep.subr.mxu0 0.0
    %2162 = vmatpush1.msra.mxu0 0.0
    %2163 = vmatprep.subr.mxu0 0.0
    %2164 = vmatpush1.msra.mxu0 0.0
    %2165 = vmatprep.subr.mxu0 0.0
    %2166 = vmatpush1.msra.mxu0 0.0
    %2167 = vmatprep.subr.mxu0 0.0
    %2168 = vmatpush1.msra.mxu0 0.0
    %2169 = vmatprep.subr.mxu0 0.0
    %2170 = vmatpush1.msra.mxu0 0.0
    %2171 = vmatprep.subr.mxu0 0.0
    %2172 = vmatpush1.msra.mxu0 0.0
    %2173 = vmatprep.subr.mxu0 0.0
    %2174 = vmatpush1.msra.mxu0 0.0
    %2175 = vmatprep.subr.mxu0 0.0
    %2176 = vmatpush1.msra.mxu0 0.0
    %2177 = vmatprep.subr.mxu0 0.0
    %2178 = vmatpush1.msra.mxu0 %v2142
    %2179 = vmatprep.subr.mxu0 0.0
    %2180 = vmatpush1.msra.mxu0 %v2139
    %2181 = vmatprep.subr.mxu0 0.0
    %2182 = vmatpush2.msra.mxu0 0.0
    %2183 = vmatprep.subr.mxu0 0.0
    %2184 = vmatpush2.msra.mxu0 0.0
    %2185 = vmatprep.subr.mxu0 0.0
    %2186 = vmatpush2.msra.mxu0 0.0
    %2187 = vmatprep.subr.mxu0 0.0
    %2188 = vmatpush2.msra.mxu0 0.0
    %2189 = vmatprep.subr.mxu0 0.0
    %2190 = vmatpush2.msra.mxu0 0.0
    %2191 = vmatprep.subr.mxu0 0.0
    %2192 = vmatpush2.msra.mxu0 0.0
    %2193 = vmatprep.subr.mxu0 0.0
    %2194 = vmatpush2.msra.mxu0 0.0
    %2195 = vmatprep.subr.mxu0 0.0
    %2196 = vmatpush2.msra.mxu0 0.0
    %2197 = vmatprep.subr.mxu0 0.0
    %2198 = vmatpush2.msra.mxu0 0.0
    %2199 = vmatprep.subr.mxu0 0.0
    %2200 = vmatpush2.msra.mxu0 0.0
    %2201 = vmatprep.subr.mxu0 0.0
    %2202 = vmatpush2.msra.mxu0 0.0
    %2203 = vmatprep.subr.mxu0 0.0
    %2204 = vmatpush2.msra.mxu0 0.0
    %2205 = vmatprep.subr.mxu0 0.0
    %2206 = vmatpush2.msra.mxu0 0.0
    %2207 = vmatprep.subr.mxu0 0.0
    %2208 = vmatpush2.msra.mxu0 0.0
    %2209 = vmatprep.subr.mxu0 0.0
    %2210 = vmatpush2.msra.mxu0 0.0
    %2211 = vmatprep.subr.mxu0 0.0
    %2212 = vmatpush2.msra.mxu0 0.0
    %2213 = vmatprep.mubr.f32.mxu0 0.0
    %2214 = vmatmul.mubr.f32.gmra.mxu0 %v2147
    %v2215 = vpop.f32.mrf.mxu0
    %v2216 = vadd.f32 0.0, %v2215
    %v2217 = vpop.f32.mrf.mxu0
    %2218 = vdwg.mxu0
    %v2219 = vsel %vm1168, %v2216, 0.0
    %v2220 = vrot.slane %v2219, 4
    %v2221 = vadd.f32 %v2219, %v2220
    %v2222 = vrot.slane %v2221, 2
    %v2223 = vadd.f32 %v2221, %v2222
    %v2224 = vrot.slane %v2223, 1
    %v2225 = vadd.f32 %v2223, %v2224
    %v2226 = vmul.f32 %v2216, %v2216
    %v2227 = vsel %vm1168, %v2226, 0.0
    %v2228 = vrot.slane %v2227, 4
    %v2229 = vadd.f32 %v2227, %v2228
    %v2230 = vrot.slane %v2229, 2
    %v2231 = vadd.f32 %v2229, %v2230
    %v2232 = vrot.slane %v2231, 1
    %v2233 = vadd.f32 %v2231, %v2232
    %v2234 = vsel %vm619, %v2225, %v2233
    %v2235 = vld [vmem:[%s39] sm:$0xff]
    %v2236 = vld [vmem:[%s39 + $0x8] sm:$0xff]
    %v2237 = vld [vmem:[%s39 + $0x10] sm:$0xff]
    %v2238 = vld [vmem:[%s39 + $0x18] sm:$0xff]
    %v2239 = vld [vmem:[%s39 + $0x20] sm:$0xff]
    %v2240 = vld [vmem:[%s39 + $0x28] sm:$0xff]
    %v2241 = vld [vmem:[%s39 + $0x30] sm:$0xff]
    %v2242 = vld [vmem:[%s39 + $0x38] sm:$0xff]
    %v2244 = vsel %vm1168, %v2234, 0
    %2246 = vmatprep.subr.mxu0 0.0
    %2247 = vmatpush1.msra.mxu0 0.0
    %2248 = vmatprep.subr.mxu0 0.0
    %2249 = vmatpush1.msra.mxu0 0.0
    %2250 = vmatprep.subr.mxu0 0.0
    %2251 = vmatpush1.msra.mxu0 0.0
    %2252 = vmatprep.subr.mxu0 0.0
    %2253 = vmatpush1.msra.mxu0 0.0
    %2254 = vmatprep.subr.mxu0 0.0
    %2255 = vmatpush1.msra.mxu0 0.0
    %2256 = vmatprep.subr.mxu0 0.0
    %2257 = vmatpush1.msra.mxu0 0.0
    %2258 = vmatprep.subr.mxu0 0.0
    %2259 = vmatpush1.msra.mxu0 0.0
    %2260 = vmatprep.subr.mxu0 0.0
    %2261 = vmatpush1.msra.mxu0 0.0
    %2262 = vmatprep.subr.mxu0 0.0
    %2263 = vmatpush1.msra.mxu0 %v2242
    %2264 = vmatprep.subr.mxu0 0.0
    %2265 = vmatpush1.msra.mxu0 %v2241
    %2266 = vmatprep.subr.mxu0 0.0
    %2267 = vmatpush1.msra.mxu0 %v2240
    %2268 = vmatprep.subr.mxu0 0.0
    %2269 = vmatpush1.msra.mxu0 %v2239
    %2270 = vmatprep.subr.mxu0 0.0
    %2271 = vmatpush1.msra.mxu0 %v2238
    %2272 = vmatprep.subr.mxu0 0.0
    %2273 = vmatpush1.msra.mxu0 %v2237
    %2274 = vmatprep.subr.mxu0 0.0
    %2275 = vmatpush1.msra.mxu0 %v2236
    %2276 = vmatprep.subr.mxu0 0.0
    %2277 = vmatpush1.msra.mxu0 %v2235
    %2278 = vmatprep.subr.mxu0 0.0
    %2279 = vmatpush2.msra.mxu0 0.0
    %2280 = vmatprep.subr.mxu0 0.0
    %2281 = vmatpush2.msra.mxu0 0.0
    %2282 = vmatprep.subr.mxu0 0.0
    %2283 = vmatpush2.msra.mxu0 0.0
    %2284 = vmatprep.subr.mxu0 0.0
    %2285 = vmatpush2.msra.mxu0 0.0
    %2286 = vmatprep.subr.mxu0 0.0
    %2287 = vmatpush2.msra.mxu0 0.0
    %2288 = vmatprep.subr.mxu0 0.0
    %2289 = vmatpush2.msra.mxu0 0.0
    %2290 = vmatprep.subr.mxu0 0.0
    %2291 = vmatpush2.msra.mxu0 0.0
    %2292 = vmatprep.subr.mxu0 0.0
    %2293 = vmatpush2.msra.mxu0 0.0
    %2294 = vmatprep.subr.mxu0 0.0
    %2295 = vmatpush2.msra.mxu0 0.0
    %2296 = vmatprep.subr.mxu0 0.0
    %2297 = vmatpush2.msra.mxu0 0.0
    %2298 = vmatprep.subr.mxu0 0.0
    %2299 = vmatpush2.msra.mxu0 0.0
    %2300 = vmatprep.subr.mxu0 0.0
    %2301 = vmatpush2.msra.mxu0 0.0
    %2302 = vmatprep.subr.mxu0 0.0
    %2303 = vmatpush2.msra.mxu0 0.0
    %2304 = vmatprep.subr.mxu0 0.0
    %2305 = vmatpush2.msra.mxu0 0.0
    %2306 = vmatprep.subr.mxu0 0.0
    %2307 = vmatpush2.msra.mxu0 0.0
    %2308 = vmatprep.subr.mxu0 0.0
    %2309 = vmatpush2.msra.mxu0 0.0
    %2310 = vmatprep.mubr.f32.mxu0 0.0
    %2311 = vmatmul.mubr.f32.gmra.mxu0 %v2244
    %v2312 = vpop.f32.mrf.mxu0
    %v2313 = vadd.f32 0.0, %v2312
    %v2314 = vpop.f32.mrf.mxu0
    %2315 = vdwg.mxu0
    %v2316 = vmul.f32 %v2313, %v2313
    %v2318 = vrot.slane %v2316, 7
    %v2320 = vsub.f32 %v2313, %v2318
    %v2321 = vmax.f32 %v2320, 0.0
    %v2322 = vld [vmem:[%s35] sm:$0x1]
    %v2323 = vadd.f32 %v2321, 1e-05
    %v2324 = vrsqrt.pop %v2323
    %v2327 = vunpack.c.l.s4 1966171168
    %v2328 = vunpack.c.0.s8 %v2327
    %v2329 = vlaneseq
    %v2330 = vshrl.u32 %v2329, 7
    %v2331 = vsub.s32 %v2328, %v2330
    %v2332 = vrot.slane %v2324, %v2331
    %v2333 = vcombine.high %v2332, %v2332
    %v2335 = vunpack.c.l.s4 1966171168
    %v2336 = vunpack.c.0.s8 %v2335
    %v2337 = vlaneseq
    %v2338 = vshrl.u32 %v2337, 7
    %v2339 = vsub.s32 %v2336, %v2338
    %v2340 = vrot.slane %v2333, %v2339
    %v2342 = vmul.f32 %v2322, %v2340
    %v2343 = vld [vmem:[%s31] sm:$0x1]
    %v2344 = vmul.f32 %v2313, %v2342
    %v2345 = vsub.f32 %v2343, %v2344
    %v2347 = vlaneseq
    %v2348 = vshrl.u32 %v2347, 7
    %v2349 = vsub.s32 0, %v2348
    %v2350 = vrot.slane %v2345, %v2349
    %v2352 = vsel %vm619, %v2342, %v2350
    %v2353 = vld [vmem:[%s37] sm:$0xff]
    %v2354 = vld [vmem:[%s37 + $0x8] sm:$0xff]
    %v2356 = vsel %vm541, %v2352, 0
    %2358 = vmatprep.subr.mxu0 0.0
    %2359 = vmatpush1.msra.mxu0 0.0
    %2360 = vmatprep.subr.mxu0 0.0
    %2361 = vmatpush1.msra.mxu0 0.0
    %2362 = vmatprep.subr.mxu0 0.0
    %2363 = vmatpush1.msra.mxu0 0.0
    %2364 = vmatprep.subr.mxu0 0.0
    %2365 = vmatpush1.msra.mxu0 0.0
    %2366 = vmatprep.subr.mxu0 0.0
    %2367 = vmatpush1.msra.mxu0 0.0
    %2368 = vmatprep.subr.mxu0 0.0
    %2369 = vmatpush1.msra.mxu0 0.0
    %2370 = vmatprep.subr.mxu0 0.0
    %2371 = vmatpush1.msra.mxu0 0.0
    %2372 = vmatprep.subr.mxu0 0.0
    %2373 = vmatpush1.msra.mxu0 0.0
    %2374 = vmatprep.subr.mxu0 0.0
    %2375 = vmatpush1.msra.mxu0 0.0
    %2376 = vmatprep.subr.mxu0 0.0
    %2377 = vmatpush1.msra.mxu0 0.0
    %2378 = vmatprep.subr.mxu0 0.0
    %2379 = vmatpush1.msra.mxu0 0.0
    %2380 = vmatprep.subr.mxu0 0.0
    %2381 = vmatpush1.msra.mxu0 0.0
    %2382 = vmatprep.subr.mxu0 0.0
    %2383 = vmatpush1.msra.mxu0 0.0
    %2384 = vmatprep.subr.mxu0 0.0
    %2385 = vmatpush1.msra.mxu0 0.0
    %2386 = vmatprep.subr.mxu0 0.0
    %2387 = vmatpush1.msra.mxu0 %v2354
    %2388 = vmatprep.subr.mxu0 0.0
    %2389 = vmatpush1.msra.mxu0 %v2353
    %2390 = vmatprep.subr.mxu0 0.0
    %2391 = vmatpush2.msra.mxu0 0.0
    %2392 = vmatprep.subr.mxu0 0.0
    %2393 = vmatpush2.msra.mxu0 0.0
    %2394 = vmatprep.subr.mxu0 0.0
    %2395 = vmatpush2.msra.mxu0 0.0
    %2396 = vmatprep.subr.mxu0 0.0
    %2397 = vmatpush2.msra.mxu0 0.0
    %2398 = vmatprep.subr.mxu0 0.0
    %2399 = vmatpush2.msra.mxu0 0.0
    %2400 = vmatprep.subr.mxu0 0.0
    %2401 = vmatpush2.msra.mxu0 0.0
    %2402 = vmatprep.subr.mxu0 0.0
    %2403 = vmatpush2.msra.mxu0 0.0
    %2404 = vmatprep.subr.mxu0 0.0
    %2405 = vmatpush2.msra.mxu0 0.0
    %2406 = vmatprep.subr.mxu0 0.0
    %2407 = vmatpush2.msra.mxu0 0.0
    %2408 = vmatprep.subr.mxu0 0.0
    %2409 = vmatpush2.msra.mxu0 0.0
    %2410 = vmatprep.subr.mxu0 0.0
    %2411 = vmatpush2.msra.mxu0 0.0
    %2412 = vmatprep.subr.mxu0 0.0
    %2413 = vmatpush2.msra.mxu0 0.0
    %2414 = vmatprep.subr.mxu0 0.0
    %2415 = vmatpush2.msra.mxu0 0.0
    %2416 = vmatprep.subr.mxu0 0.0
    %2417 = vmatpush2.msra.mxu0 0.0
    %2418 = vmatprep.subr.mxu0 0.0
    %2419 = vmatpush2.msra.mxu0 0.0
    %2420 = vmatprep.subr.mxu0 0.0
    %2421 = vmatpush2.msra.mxu0 0.0
    %2422 = vmatprep.mubr.f32.mxu0 0.0
    %2423 = vmatmul.mubr.f32.gmra.mxu0 %v2356
    %v2424 = vpop.f32.mrf.mxu0
    %v2425 = vadd.f32 0.0, %v2424
    %v2426 = vpop.f32.mrf.mxu0
    %2427 = vdwg.mxu0
    %v2428 = vlaneseq
    %v2429 = vshrl.u32 %v2428, 7
    %v2430 = vsub.s32 0, %v2429
    %v2431 = vrot.slane %v2425, %v2430
    %v2432 = vmul.f32 %v2216, %v2431
    %v2433 = vlaneseq
    %v2434 = vshrl.u32 %v2433, 7
    %v2435 = vsub.s32 1, %v2434
    %v2436 = vrot.slane %v2425, %v2435
    %v2437 = vadd.f32 %v2432, %v2436
    %v2438 = vmax.f32 %v2437, 0.0
    %v2439 = vrot.slane %v2438, 7
    %v2440 = vld [vmem:[%s57] sm:$0xff]
    %2442 = vset.pattern.permute.xlu0 0
    %2443 = vperm.xlu0 %2442, %v2440
    %v2444 = vpop.permute.xlu0 %2443
    %v2446 = vmul.f32 %v2439, %v2444
    %v2447 = vrot.slane %v2438, 1
    %v2448 = vld [vmem:[%s55] sm:$0xff]
    %2450 = vset.pattern.permute.xlu0 0
    %2451 = vperm.xlu0 %2450, %v2448
    %v2452 = vpop.permute.xlu0 %2451
    %v2454 = vmul.f32 %v2447, %v2452
    %2456 = vrot.lane.b32.xlu0 %v2438, 64
    %v2457 = vpop.permute.xlu0 %2456
    %v2459 = vsel %vm1168, %v2446, %v2457
    %v2460 = vpack.c.bf16 %v2459, %v2459
    %v2461 = vpack.c.bf16 %v2454, %v2454
    %v2462 = vld [vmem:[%s59] sm:$0xf]
    %v2463 = vld [vmem:[%s59 + $0x4] sm:$0xf]
    %v2464 = vld [vmem:[%s59 + $0x8] sm:$0xf]
    %v2465 = vld [vmem:[%s59 + $0xc] sm:$0xf]
    %v2466 = vld [vmem:[%s59 + $0x10] sm:$0xf]
    %v2467 = vld [vmem:[%s59 + $0x14] sm:$0xf]
    %v2468 = vld [vmem:[%s59 + $0x18] sm:$0xf]
    %v2469 = vld [vmem:[%s59 + $0x1c] sm:$0xf]
    %v2470 = vld [vmem:[%s59 + $0x20] sm:$0xf]
    %v2471 = vld [vmem:[%s59 + $0x24] sm:$0xf]
    %v2472 = vld [vmem:[%s59 + $0x28] sm:$0xf]
    %v2473 = vld [vmem:[%s59 + $0x2c] sm:$0xf]
    %v2474 = vld [vmem:[%s59 + $0x30] sm:$0xf]
    %v2475 = vld [vmem:[%s59 + $0x34] sm:$0xf]
    %v2476 = vld [vmem:[%s59 + $0x38] sm:$0xf]
    %v2477 = vld [vmem:[%s59 + $0x3c] sm:$0xf]
    %v2478 = vld [vmem:[%s59 + $0x40] sm:$0xf]
    %v2479 = vld [vmem:[%s59 + $0x44] sm:$0xf]
    %v2480 = vld [vmem:[%s59 + $0x48] sm:$0xf]
    %v2481 = vld [vmem:[%s59 + $0x4c] sm:$0xf]
    %v2482 = vld [vmem:[%s59 + $0x50] sm:$0xf]
    %v2483 = vld [vmem:[%s59 + $0x54] sm:$0xf]
    %v2484 = vld [vmem:[%s59 + $0x58] sm:$0xf]
    %v2485 = vld [vmem:[%s59 + $0x5c] sm:$0xf]
    %v2510 = vunpack.c.l.b16 %v2462
    %v2511 = vunpack.c.l.b16 %v2463
    %v2512 = vunpack.c.l.b16 %v2464
    %v2513 = vunpack.c.l.b16 %v2465
    %v2514 = vunpack.c.l.b16 %v2466
    %v2515 = vunpack.c.l.b16 %v2467
    %v2516 = vunpack.c.l.b16 %v2468
    %v2517 = vunpack.c.l.b16 %v2469
    %v2518 = vunpack.c.l.b16 %v2470
    %v2519 = vunpack.c.l.b16 %v2471
    %v2520 = vunpack.c.l.b16 %v2472
    %v2521 = vunpack.c.l.b16 %v2473
    %v2522 = vunpack.c.l.b16 %v2474
    %v2523 = vunpack.c.l.b16 %v2475
    %v2524 = vunpack.c.l.b16 %v2476
    %v2525 = vunpack.c.l.b16 %v2477
    %v2526 = vunpack.c.l.b16 %v2478
    %v2527 = vunpack.c.l.b16 %v2479
    %v2528 = vunpack.c.l.b16 %v2480
    %v2529 = vunpack.c.l.b16 %v2481
    %v2530 = vunpack.c.l.b16 %v2482
    %v2531 = vunpack.c.l.b16 %v2483
    %v2532 = vunpack.c.l.b16 %v2484
    %v2533 = vunpack.c.l.b16 %v2485
    %v2534 = vpack.c.b16 %v2511, %v2510
    %v2535 = vpack.c.b16 %v2513, %v2512
    %v2536 = vpack.c.b16 %v2515, %v2514
    %v2537 = vpack.c.b16 %v2517, %v2516
    %v2538 = vpack.c.b16 %v2519, %v2518
    %v2539 = vpack.c.b16 %v2521, %v2520
    %v2540 = vpack.c.b16 %v2523, %v2522
    %v2541 = vpack.c.b16 %v2525, %v2524
    %v2542 = vpack.c.b16 %v2527, %v2526
    %v2543 = vpack.c.b16 %v2529, %v2528
    %v2544 = vpack.c.b16 %v2531, %v2530
    %v2545 = vpack.c.b16 %v2533, %v2532
    %v2559 = vsel %vm1168, %v2461, 0
    %2561 = vmatprep.subr.bf16.mxu0 0
    %2562 = vmatpush1.bf16.msra.mxu0 %v2541
    %2563 = vmatprep.subr.bf16.mxu0 0
    %2564 = vmatpush1.bf16.msra.mxu0 %v2540
    %2565 = vmatprep.subr.bf16.mxu0 0
    %2566 = vmatpush1.bf16.msra.mxu0 %v2539
    %2567 = vmatprep.subr.bf16.mxu0 0
    %2568 = vmatpush1.bf16.msra.mxu0 %v2538
    %2569 = vmatprep.subr.bf16.mxu0 0
    %2570 = vmatpush1.bf16.msra.mxu0 %v2537
    %2571 = vmatprep.subr.bf16.mxu0 0
    %2572 = vmatpush1.bf16.msra.mxu0 %v2536
    %2573 = vmatprep.subr.bf16.mxu0 0
    %2574 = vmatpush1.bf16.msra.mxu0 %v2535
    %2575 = vmatprep.subr.bf16.mxu0 0
    %2576 = vmatpush1.bf16.msra.mxu0 %v2534
    %2577 = vmatprep.subr.bf16.mxu0 0
    %2578 = vmatpush2.bf16.msra.mxu0 0
    %2579 = vmatprep.subr.bf16.mxu0 0
    %2580 = vmatpush2.bf16.msra.mxu0 0
    %2581 = vmatprep.subr.bf16.mxu0 0
    %2582 = vmatpush2.bf16.msra.mxu0 0
    %2583 = vmatprep.subr.bf16.mxu0 0
    %2584 = vmatpush2.bf16.msra.mxu0 0
    %2585 = vmatprep.subr.bf16.mxu0 0
    %2586 = vmatpush2.bf16.msra.mxu0 %v2545
    %2587 = vmatprep.subr.bf16.mxu0 0
    %2588 = vmatpush2.bf16.msra.mxu0 %v2544
    %2589 = vmatprep.subr.bf16.mxu0 0
    %2590 = vmatpush2.bf16.msra.mxu0 %v2543
    %2591 = vmatprep.subr.bf16.mxu0 0
    %2592 = vmatpush2.bf16.msra.mxu0 %v2542
    %2593 = vmatprep.mubr.bf16.mxu0 %v2559
    %2594 = vmatmul.mubr.bf16.gmra.mxu0 %v2460
    %v2595 = vpop.f32.mrf.mxu0
    %v2596 = vadd.f32 0.0, %v2595
    %v2597 = vpop.f32.mrf.mxu0
    %v2598 = vpop.f32.mrf.mxu0
    %v2599 = vpop.f32.mrf.mxu0
    %2600 = vdwg.mxu0
    %v2601 = vsel %vm1168, %v2596, 0.0
    %v2602 = vrot.slane %v2601, 4
    %v2603 = vadd.f32 %v2601, %v2602
    %v2604 = vrot.slane %v2603, 2
    %v2605 = vadd.f32 %v2603, %v2604
    %v2606 = vrot.slane %v2605, 1
    %v2607 = vadd.f32 %v2605, %v2606
    %v2608 = vmul.f32 %v2596, %v2596
    %v2609 = vsel %vm1168, %v2608, 0.0
    %v2610 = vrot.slane %v2609, 4
    %v2611 = vadd.f32 %v2609, %v2610
    %v2612 = vrot.slane %v2611, 2
    %v2613 = vadd.f32 %v2611, %v2612
    %v2614 = vrot.slane %v2613, 1
    %v2615 = vadd.f32 %v2613, %v2614
    %v2616 = vsel %vm619, %v2607, %v2615
    %v2617 = vld [vmem:[%s53] sm:$0xff]
    %v2618 = vld [vmem:[%s53 + $0x8] sm:$0xff]
    %v2619 = vld [vmem:[%s53 + $0x10] sm:$0xff]
    %v2620 = vld [vmem:[%s53 + $0x18] sm:$0xff]
    %v2621 = vld [vmem:[%s53 + $0x20] sm:$0xff]
    %v2622 = vld [vmem:[%s53 + $0x28] sm:$0xff]
    %v2623 = vld [vmem:[%s53 + $0x30] sm:$0xff]
    %v2624 = vld [vmem:[%s53 + $0x38] sm:$0xff]
    %v2626 = vsel %vm1168, %v2616, 0
    %2628 = vmatprep.subr.mxu0 0.0
    %2629 = vmatpush1.msra.mxu0 0.0
    %2630 = vmatprep.subr.mxu0 0.0
    %2631 = vmatpush1.msra.mxu0 0.0
    %2632 = vmatprep.subr.mxu0 0.0
    %2633 = vmatpush1.msra.mxu0 0.0
    %2634 = vmatprep.subr.mxu0 0.0
    %2635 = vmatpush1.msra.mxu0 0.0
    %2636 = vmatprep.subr.mxu0 0.0
    %2637 = vmatpush1.msra.mxu0 0.0
    %2638 = vmatprep.subr.mxu0 0.0
    %2639 = vmatpush1.msra.mxu0 0.0
    %2640 = vmatprep.subr.mxu0 0.0
    %2641 = vmatpush1.msra.mxu0 0.0
    %2642 = vmatprep.subr.mxu0 0.0
    %2643 = vmatpush1.msra.mxu0 0.0
    %2644 = vmatprep.subr.mxu0 0.0
    %2645 = vmatpush1.msra.mxu0 %v2624
    %2646 = vmatprep.subr.mxu0 0.0
    %2647 = vmatpush1.msra.mxu0 %v2623
    %2648 = vmatprep.subr.mxu0 0.0
    %2649 = vmatpush1.msra.mxu0 %v2622
    %2650 = vmatprep.subr.mxu0 0.0
    %2651 = vmatpush1.msra.mxu0 %v2621
    %2652 = vmatprep.subr.mxu0 0.0
    %2653 = vmatpush1.msra.mxu0 %v2620
    %2654 = vmatprep.subr.mxu0 0.0
    %2655 = vmatpush1.msra.mxu0 %v2619
    %2656 = vmatprep.subr.mxu0 0.0
    %2657 = vmatpush1.msra.mxu0 %v2618
    %2658 = vmatprep.subr.mxu0 0.0
    %2659 = vmatpush1.msra.mxu0 %v2617
    %2660 = vmatprep.subr.mxu0 0.0
    %2661 = vmatpush2.msra.mxu0 0.0
    %2662 = vmatprep.subr.mxu0 0.0
    %2663 = vmatpush2.msra.mxu0 0.0
    %2664 = vmatprep.subr.mxu0 0.0
    %2665 = vmatpush2.msra.mxu0 0.0
    %2666 = vmatprep.subr.mxu0 0.0
    %2667 = vmatpush2.msra.mxu0 0.0
    %2668 = vmatprep.subr.mxu0 0.0
    %2669 = vmatpush2.msra.mxu0 0.0
    %2670 = vmatprep.subr.mxu0 0.0
    %2671 = vmatpush2.msra.mxu0 0.0
    %2672 = vmatprep.subr.mxu0 0.0
    %2673 = vmatpush2.msra.mxu0 0.0
    %2674 = vmatprep.subr.mxu0 0.0
    %2675 = vmatpush2.msra.mxu0 0.0
    %2676 = vmatprep.subr.mxu0 0.0
    %2677 = vmatpush2.msra.mxu0 0.0
    %2678 = vmatprep.subr.mxu0 0.0
    %2679 = vmatpush2.msra.mxu0 0.0
    %2680 = vmatprep.subr.mxu0 0.0
    %2681 = vmatpush2.msra.mxu0 0.0
    %2682 = vmatprep.subr.mxu0 0.0
    %2683 = vmatpush2.msra.mxu0 0.0
    %2684 = vmatprep.subr.mxu0 0.0
    %2685 = vmatpush2.msra.mxu0 0.0
    %2686 = vmatprep.subr.mxu0 0.0
    %2687 = vmatpush2.msra.mxu0 0.0
    %2688 = vmatprep.subr.mxu0 0.0
    %2689 = vmatpush2.msra.mxu0 0.0
    %2690 = vmatprep.subr.mxu0 0.0
    %2691 = vmatpush2.msra.mxu0 0.0
    %2692 = vmatprep.mubr.f32.mxu0 0.0
    %2693 = vmatmul.mubr.f32.gmra.mxu0 %v2626
    %v2694 = vpop.f32.mrf.mxu0
    %v2695 = vadd.f32 0.0, %v2694
    %v2696 = vpop.f32.mrf.mxu0
    %2697 = vdwg.mxu0
    %v2698 = vmul.f32 %v2695, %v2695
    %v2700 = vrot.slane %v2698, 7
    %v2702 = vsub.f32 %v2695, %v2700
    %v2703 = vmax.f32 %v2702, 0.0
    %v2704 = vld [vmem:[%s49] sm:$0x1]
    %v2705 = vadd.f32 %v2703, 1e-05
    %v2706 = vrsqrt.pop %v2705
    %v2709 = vunpack.c.l.s4 1966171168
    %v2710 = vunpack.c.0.s8 %v2709
    %v2711 = vlaneseq
    %v2712 = vshrl.u32 %v2711, 7
    %v2713 = vsub.s32 %v2710, %v2712
    %v2714 = vrot.slane %v2706, %v2713
    %v2715 = vcombine.high %v2714, %v2714
    %v2717 = vunpack.c.l.s4 1966171168
    %v2718 = vunpack.c.0.s8 %v2717
    %v2719 = vlaneseq
    %v2720 = vshrl.u32 %v2719, 7
    %v2721 = vsub.s32 %v2718, %v2720
    %v2722 = vrot.slane %v2715, %v2721
    %v2724 = vmul.f32 %v2704, %v2722
    %v2725 = vld [vmem:[%s47] sm:$0x1]
    %v2726 = vmul.f32 %v2695, %v2724
    %v2727 = vsub.f32 %v2725, %v2726
    %v2729 = vlaneseq
    %v2730 = vshrl.u32 %v2729, 7
    %v2731 = vsub.s32 0, %v2730
    %v2732 = vrot.slane %v2727, %v2731
    %v2734 = vsel %vm619, %v2724, %v2732
    %v2735 = vld [vmem:[%s51] sm:$0xff]
    %v2736 = vld [vmem:[%s51 + $0x8] sm:$0xff]
    %v2738 = vsel %vm541, %v2734, 0
    %2740 = vmatprep.subr.mxu0 0.0
    %2741 = vmatpush1.msra.mxu0 0.0
    %2742 = vmatprep.subr.mxu0 0.0
    %2743 = vmatpush1.msra.mxu0 0.0
    %2744 = vmatprep.subr.mxu0 0.0
    %2745 = vmatpush1.msra.mxu0 0.0
    %2746 = vmatprep.subr.mxu0 0.0
    %2747 = vmatpush1.msra.mxu0 0.0
    %2748 = vmatprep.subr.mxu0 0.0
    %2749 = vmatpush1.msra.mxu0 0.0
    %2750 = vmatprep.subr.mxu0 0.0
    %2751 = vmatpush1.msra.mxu0 0.0
    %2752 = vmatprep.subr.mxu0 0.0
    %2753 = vmatpush1.msra.mxu0 0.0
    %2754 = vmatprep.subr.mxu0 0.0
    %2755 = vmatpush1.msra.mxu0 0.0
    %2756 = vmatprep.subr.mxu0 0.0
    %2757 = vmatpush1.msra.mxu0 0.0
    %2758 = vmatprep.subr.mxu0 0.0
    %2759 = vmatpush1.msra.mxu0 0.0
    %2760 = vmatprep.subr.mxu0 0.0
    %2761 = vmatpush1.msra.mxu0 0.0
    %2762 = vmatprep.subr.mxu0 0.0
    %2763 = vmatpush1.msra.mxu0 0.0
    %2764 = vmatprep.subr.mxu0 0.0
    %2765 = vmatpush1.msra.mxu0 0.0
    %2766 = vmatprep.subr.mxu0 0.0
    %2767 = vmatpush1.msra.mxu0 0.0
    %2768 = vmatprep.subr.mxu0 0.0
    %2769 = vmatpush1.msra.mxu0 %v2736
    %2770 = vmatprep.subr.mxu0 0.0
    %2771 = vmatpush1.msra.mxu0 %v2735
    %2772 = vmatprep.subr.mxu0 0.0
    %2773 = vmatpush2.msra.mxu0 0.0
    %2774 = vmatprep.subr.mxu0 0.0
    %2775 = vmatpush2.msra.mxu0 0.0
    %2776 = vmatprep.subr.mxu0 0.0
    %2777 = vmatpush2.msra.mxu0 0.0
    %2778 = vmatprep.subr.mxu0 0.0
    %2779 = vmatpush2.msra.mxu0 0.0
    %2780 = vmatprep.subr.mxu0 0.0
    %2781 = vmatpush2.msra.mxu0 0.0
    %2782 = vmatprep.subr.mxu0 0.0
    %2783 = vmatpush2.msra.mxu0 0.0
    %2784 = vmatprep.subr.mxu0 0.0
    %2785 = vmatpush2.msra.mxu0 0.0
    %2786 = vmatprep.subr.mxu0 0.0
    %2787 = vmatpush2.msra.mxu0 0.0
    %2788 = vmatprep.subr.mxu0 0.0
    %2789 = vmatpush2.msra.mxu0 0.0
    %2790 = vmatprep.subr.mxu0 0.0
    %2791 = vmatpush2.msra.mxu0 0.0
    %2792 = vmatprep.subr.mxu0 0.0
    %2793 = vmatpush2.msra.mxu0 0.0
    %2794 = vmatprep.subr.mxu0 0.0
    %2795 = vmatpush2.msra.mxu0 0.0
    %2796 = vmatprep.subr.mxu0 0.0
    %2797 = vmatpush2.msra.mxu0 0.0
    %2798 = vmatprep.subr.mxu0 0.0
    %2799 = vmatpush2.msra.mxu0 0.0
    %2800 = vmatprep.subr.mxu0 0.0
    %2801 = vmatpush2.msra.mxu0 0.0
    %2802 = vmatprep.subr.mxu0 0.0
    %2803 = vmatpush2.msra.mxu0 0.0
    %2804 = vmatprep.mubr.f32.mxu0 0.0
    %2805 = vmatmul.mubr.f32.gmra.mxu0 %v2738
    %v2806 = vpop.f32.mrf.mxu0
    %v2807 = vadd.f32 0.0, %v2806
    %v2808 = vpop.f32.mrf.mxu0
    %2809 = vdwg.mxu0
    %v2810 = vlaneseq
    %v2811 = vshrl.u32 %v2810, 7
    %v2812 = vsub.s32 0, %v2811
    %v2813 = vrot.slane %v2807, %v2812
    %v2814 = vmul.f32 %v2596, %v2813
    %v2815 = vlaneseq
    %v2816 = vshrl.u32 %v2815, 7
    %v2817 = vsub.s32 1, %v2816
    %v2818 = vrot.slane %v2807, %v2817
    %v2819 = vadd.f32 %v2814, %v2818
    %v2820 = vpack.c.bf16 %v1956, %v1955
    %v2821 = vld [vmem:[%s71] sm:$0xf]
    %v2822 = vld [vmem:[%s71 + $0x4] sm:$0xf]
    %v2823 = vld [vmem:[%s71 + $0x8] sm:$0xf]
    %v2824 = vld [vmem:[%s71 + $0xc] sm:$0xf]
    %v2825 = vld [vmem:[%s71 + $0x10] sm:$0xf]
    %v2826 = vld [vmem:[%s71 + $0x14] sm:$0xf]
    %v2827 = vld [vmem:[%s71 + $0x18] sm:$0xf]
    %v2828 = vld [vmem:[%s71 + $0x1c] sm:$0xf]
    %v2837 = vunpack.c.l.b16 %v2821
    %v2838 = vunpack.c.l.b16 %v2822
    %v2839 = vunpack.c.l.b16 %v2823
    %v2840 = vunpack.c.l.b16 %v2824
    %v2841 = vunpack.c.l.b16 %v2825
    %v2842 = vunpack.c.l.b16 %v2826
    %v2843 = vunpack.c.l.b16 %v2827
    %v2844 = vunpack.c.l.b16 %v2828
    %v2845 = vpack.c.b16 %v2838, %v2837
    %v2846 = vpack.c.b16 %v2840, %v2839
    %v2847 = vpack.c.b16 %v2842, %v2841
    %v2848 = vpack.c.b16 %v2844, %v2843
    %v2854 = vsel %vm1168, %v2820, 0
    %2856 = vmatprep.subr.bf16.mxu0 0
    %2857 = vmatpush1.bf16.msra.mxu0 0
    %2858 = vmatprep.subr.bf16.mxu0 0
    %2859 = vmatpush1.bf16.msra.mxu0 0
    %2860 = vmatprep.subr.bf16.mxu0 0
    %2861 = vmatpush1.bf16.msra.mxu0 0
    %2862 = vmatprep.subr.bf16.mxu0 0
    %2863 = vmatpush1.bf16.msra.mxu0 0
    %2864 = vmatprep.subr.bf16.mxu0 0
    %2865 = vmatpush1.bf16.msra.mxu0 %v2848
    %2866 = vmatprep.subr.bf16.mxu0 0
    %2867 = vmatpush1.bf16.msra.mxu0 %v2847
    %2868 = vmatprep.subr.bf16.mxu0 0
    %2869 = vmatpush1.bf16.msra.mxu0 %v2846
    %2870 = vmatprep.subr.bf16.mxu0 0
    %2871 = vmatpush1.bf16.msra.mxu0 %v2845
    %2872 = vmatprep.subr.bf16.mxu0 0
    %2873 = vmatpush2.bf16.msra.mxu0 0
    %2874 = vmatprep.subr.bf16.mxu0 0
    %2875 = vmatpush2.bf16.msra.mxu0 0
    %2876 = vmatprep.subr.bf16.mxu0 0
    %2877 = vmatpush2.bf16.msra.mxu0 0
    %2878 = vmatprep.subr.bf16.mxu0 0
    %2879 = vmatpush2.bf16.msra.mxu0 0
    %2880 = vmatprep.subr.bf16.mxu0 0
    %2881 = vmatpush2.bf16.msra.mxu0 0
    %2882 = vmatprep.subr.bf16.mxu0 0
    %2883 = vmatpush2.bf16.msra.mxu0 0
    %2884 = vmatprep.subr.bf16.mxu0 0
    %2885 = vmatpush2.bf16.msra.mxu0 0
    %2886 = vmatprep.subr.bf16.mxu0 0
    %2887 = vmatpush2.bf16.msra.mxu0 0
    %2888 = vmatprep.mubr.bf16.mxu0 0
    %2889 = vmatmul.mubr.bf16.gmra.mxu0 %v2854
    %v2890 = vpop.f32.mrf.mxu0
    %v2891 = vadd.f32 0.0, %v2890
    %v2892 = vpop.f32.mrf.mxu0
    %v2893 = vpop.f32.mrf.mxu0
    %v2894 = vadd.f32 0.0, %v2893
    %v2895 = vpop.f32.mrf.mxu0
    %2896 = vdwg.mxu0
    %v2897 = vld [vmem:[%s63] sm:$0xff]
    %v2899 = vsel %vm541, %v2897, 0
    %2901 = vmatprep.subr.mxu0 0.0
    %2902 = vmatpush1.msra.mxu0 0.0
    %2903 = vmatprep.subr.mxu0 0.0
    %2904 = vmatpush1.msra.mxu0 0.0
    %2905 = vmatprep.subr.mxu0 0.0
    %2906 = vmatpush1.msra.mxu0 0.0
    %2907 = vmatprep.subr.mxu0 0.0
    %2908 = vmatpush1.msra.mxu0 0.0
    %2909 = vmatprep.subr.mxu0 0.0
    %2910 = vmatpush1.msra.mxu0 0.0
    %2911 = vmatprep.subr.mxu0 0.0
    %2912 = vmatpush1.msra.mxu0 0.0
    %2913 = vmatprep.subr.mxu0 0.0
    %2914 = vmatpush1.msra.mxu0 0.0
    %2915 = vmatprep.subr.mxu0 0.0
    %2916 = vmatpush1.msra.mxu0 0.0
    %2917 = vmatprep.subr.mxu0 0.0
    %2918 = vmatpush1.msra.mxu0 0.0
    %2919 = vmatprep.subr.mxu0 0.0
    %2920 = vmatpush1.msra.mxu0 0.0
    %2921 = vmatprep.subr.mxu0 0.0
    %2922 = vmatpush1.msra.mxu0 0.0
    %2923 = vmatprep.subr.mxu0 0.0
    %2924 = vmatpush1.msra.mxu0 0.0
    %2925 = vmatprep.subr.mxu0 0.0
    %2926 = vmatpush1.msra.mxu0 0.0
    %2927 = vmatprep.subr.mxu0 0.0
    %2928 = vmatpush1.msra.mxu0 0.0
    %2929 = vmatprep.subr.mxu0 0.0
    %2930 = vmatpush1.msra.mxu0 %v2894
    %2931 = vmatprep.subr.mxu0 0.0
    %2932 = vmatpush1.msra.mxu0 %v2891
    %2933 = vmatprep.subr.mxu0 0.0
    %2934 = vmatpush2.msra.mxu0 0.0
    %2935 = vmatprep.subr.mxu0 0.0
    %2936 = vmatpush2.msra.mxu0 0.0
    %2937 = vmatprep.subr.mxu0 0.0
    %2938 = vmatpush2.msra.mxu0 0.0
    %2939 = vmatprep.subr.mxu0 0.0
    %2940 = vmatpush2.msra.mxu0 0.0
    %2941 = vmatprep.subr.mxu0 0.0
    %2942 = vmatpush2.msra.mxu0 0.0
    %2943 = vmatprep.subr.mxu0 0.0
    %2944 = vmatpush2.msra.mxu0 0.0
    %2945 = vmatprep.subr.mxu0 0.0
    %2946 = vmatpush2.msra.mxu0 0.0
    %2947 = vmatprep.subr.mxu0 0.0
    %2948 = vmatpush2.msra.mxu0 0.0
    %2949 = vmatprep.subr.mxu0 0.0
    %2950 = vmatpush2.msra.mxu0 0.0
    %2951 = vmatprep.subr.mxu0 0.0
    %2952 = vmatpush2.msra.mxu0 0.0
    %2953 = vmatprep.subr.mxu0 0.0
    %2954 = vmatpush2.msra.mxu0 0.0
    %2955 = vmatprep.subr.mxu0 0.0
    %2956 = vmatpush2.msra.mxu0 0.0
    %2957 = vmatprep.subr.mxu0 0.0
    %2958 = vmatpush2.msra.mxu0 0.0
    %2959 = vmatprep.subr.mxu0 0.0
    %2960 = vmatpush2.msra.mxu0 0.0
    %2961 = vmatprep.subr.mxu0 0.0
    %2962 = vmatpush2.msra.mxu0 0.0
    %2963 = vmatprep.subr.mxu0 0.0
    %2964 = vmatpush2.msra.mxu0 0.0
    %2965 = vmatprep.mubr.f32.mxu0 0.0
    %2966 = vmatmul.mubr.f32.gmra.mxu0 %v2899
    %v2967 = vpop.f32.mrf.mxu0
    %v2968 = vadd.f32 0.0, %v2967
    %v2969 = vpop.f32.mrf.mxu0
    %2970 = vdwg.mxu0
    %v2971 = vsel %vm1168, %v2968, 0.0
    %v2972 = vrot.slane %v2971, 4
    %v2973 = vadd.f32 %v2971, %v2972
    %v2974 = vrot.slane %v2973, 2
    %v2975 = vadd.f32 %v2973, %v2974
    %v2976 = vrot.slane %v2975, 1
    %v2977 = vadd.f32 %v2975, %v2976
    %v2978 = vmul.f32 %v2968, %v2968
    %v2979 = vsel %vm1168, %v2978, 0.0
    %v2980 = vrot.slane %v2979, 4
    %v2981 = vadd.f32 %v2979, %v2980
    %v2982 = vrot.slane %v2981, 2
    %v2983 = vadd.f32 %v2981, %v2982
    %v2984 = vrot.slane %v2983, 1
    %v2985 = vadd.f32 %v2983, %v2984
    %v2986 = vsel %vm619, %v2977, %v2985
    %v2987 = vld [vmem:[%s69] sm:$0xff]
    %v2988 = vld [vmem:[%s69 + $0x8] sm:$0xff]
    %v2989 = vld [vmem:[%s69 + $0x10] sm:$0xff]
    %v2990 = vld [vmem:[%s69 + $0x18] sm:$0xff]
    %v2991 = vld [vmem:[%s69 + $0x20] sm:$0xff]
    %v2992 = vld [vmem:[%s69 + $0x28] sm:$0xff]
    %v2993 = vld [vmem:[%s69 + $0x30] sm:$0xff]
    %v2994 = vld [vmem:[%s69 + $0x38] sm:$0xff]
    %v2996 = vsel %vm1168, %v2986, 0
    %2998 = vmatprep.subr.mxu0 0.0
    %2999 = vmatpush1.msra.mxu0 0.0
    %3000 = vmatprep.subr.mxu0 0.0
    %3001 = vmatpush1.msra.mxu0 0.0
    %3002 = vmatprep.subr.mxu0 0.0
    %3003 = vmatpush1.msra.mxu0 0.0
    %3004 = vmatprep.subr.mxu0 0.0
    %3005 = vmatpush1.msra.mxu0 0.0
    %3006 = vmatprep.subr.mxu0 0.0
    %3007 = vmatpush1.msra.mxu0 0.0
    %3008 = vmatprep.subr.mxu0 0.0
    %3009 = vmatpush1.msra.mxu0 0.0
    %3010 = vmatprep.subr.mxu0 0.0
    %3011 = vmatpush1.msra.mxu0 0.0
    %3012 = vmatprep.subr.mxu0 0.0
    %3013 = vmatpush1.msra.mxu0 0.0
    %3014 = vmatprep.subr.mxu0 0.0
    %3015 = vmatpush1.msra.mxu0 %v2994
    %3016 = vmatprep.subr.mxu0 0.0
    %3017 = vmatpush1.msra.mxu0 %v2993
    %3018 = vmatprep.subr.mxu0 0.0
    %3019 = vmatpush1.msra.mxu0 %v2992
    %3020 = vmatprep.subr.mxu0 0.0
    %3021 = vmatpush1.msra.mxu0 %v2991
    %3022 = vmatprep.subr.mxu0 0.0
    %3023 = vmatpush1.msra.mxu0 %v2990
    %3024 = vmatprep.subr.mxu0 0.0
    %3025 = vmatpush1.msra.mxu0 %v2989
    %3026 = vmatprep.subr.mxu0 0.0
    %3027 = vmatpush1.msra.mxu0 %v2988
    %3028 = vmatprep.subr.mxu0 0.0
    %3029 = vmatpush1.msra.mxu0 %v2987
    %3030 = vmatprep.subr.mxu0 0.0
    %3031 = vmatpush2.msra.mxu0 0.0
    %3032 = vmatprep.subr.mxu0 0.0
    %3033 = vmatpush2.msra.mxu0 0.0
    %3034 = vmatprep.subr.mxu0 0.0
    %3035 = vmatpush2.msra.mxu0 0.0
    %3036 = vmatprep.subr.mxu0 0.0
    %3037 = vmatpush2.msra.mxu0 0.0
    %3038 = vmatprep.subr.mxu0 0.0
    %3039 = vmatpush2.msra.mxu0 0.0
    %3040 = vmatprep.subr.mxu0 0.0
    %3041 = vmatpush2.msra.mxu0 0.0
    %3042 = vmatprep.subr.mxu0 0.0
    %3043 = vmatpush2.msra.mxu0 0.0
    %3044 = vmatprep.subr.mxu0 0.0
    %3045 = vmatpush2.msra.mxu0 0.0
    %3046 = vmatprep.subr.mxu0 0.0
    %3047 = vmatpush2.msra.mxu0 0.0
    %3048 = vmatprep.subr.mxu0 0.0
    %3049 = vmatpush2.msra.mxu0 0.0
    %3050 = vmatprep.subr.mxu0 0.0
    %3051 = vmatpush2.msra.mxu0 0.0
    %3052 = vmatprep.subr.mxu0 0.0
    %3053 = vmatpush2.msra.mxu0 0.0
    %3054 = vmatprep.subr.mxu0 0.0
    %3055 = vmatpush2.msra.mxu0 0.0
    %3056 = vmatprep.subr.mxu0 0.0
    %3057 = vmatpush2.msra.mxu0 0.0
    %3058 = vmatprep.subr.mxu0 0.0
    %3059 = vmatpush2.msra.mxu0 0.0
    %3060 = vmatprep.subr.mxu0 0.0
    %3061 = vmatpush2.msra.mxu0 0.0
    %3062 = vmatprep.mubr.f32.mxu0 0.0
    %3063 = vmatmul.mubr.f32.gmra.mxu0 %v2996
    %v3064 = vpop.f32.mrf.mxu0
    %v3065 = vadd.f32 0.0, %v3064
    %v3066 = vpop.f32.mrf.mxu0
    %3067 = vdwg.mxu0
    %v3068 = vmul.f32 %v3065, %v3065
    %v3070 = vrot.slane %v3068, 7
    %v3072 = vsub.f32 %v3065, %v3070
    %v3073 = vmax.f32 %v3072, 0.0
    %v3074 = vld [vmem:[%s65] sm:$0x1]
    %v3075 = vadd.f32 %v3073, 1e-05
    %v3076 = vrsqrt.pop %v3075
    %v3079 = vunpack.c.l.s4 1966171168
    %v3080 = vunpack.c.0.s8 %v3079
    %v3081 = vlaneseq
    %v3082 = vshrl.u32 %v3081, 7
    %v3083 = vsub.s32 %v3080, %v3082
    %v3084 = vrot.slane %v3076, %v3083
    %v3085 = vcombine.high %v3084, %v3084
    %v3087 = vunpack.c.l.s4 1966171168
    %v3088 = vunpack.c.0.s8 %v3087
    %v3089 = vlaneseq
    %v3090 = vshrl.u32 %v3089, 7
    %v3091 = vsub.s32 %v3088, %v3090
    %v3092 = vrot.slane %v3085, %v3091
    %v3094 = vmul.f32 %v3074, %v3092
    %v3095 = vld [vmem:[%s61] sm:$0x1]
    %v3096 = vmul.f32 %v3065, %v3094
    %v3097 = vsub.f32 %v3095, %v3096
    %v3099 = vlaneseq
    %v3100 = vshrl.u32 %v3099, 7
    %v3101 = vsub.s32 0, %v3100
    %v3102 = vrot.slane %v3097, %v3101
    %v3104 = vsel %vm619, %v3094, %v3102
    %v3105 = vld [vmem:[%s67] sm:$0xff]
    %v3106 = vld [vmem:[%s67 + $0x8] sm:$0xff]
    %v3108 = vsel %vm541, %v3104, 0
    %3110 = vmatprep.subr.mxu0 0.0
    %3111 = vmatpush1.msra.mxu0 0.0
    %3112 = vmatprep.subr.mxu0 0.0
    %3113 = vmatpush1.msra.mxu0 0.0
    %3114 = vmatprep.subr.mxu0 0.0
    %3115 = vmatpush1.msra.mxu0 0.0
    %3116 = vmatprep.subr.mxu0 0.0
    %3117 = vmatpush1.msra.mxu0 0.0
    %3118 = vmatprep.subr.mxu0 0.0
    %3119 = vmatpush1.msra.mxu0 0.0
    %3120 = vmatprep.subr.mxu0 0.0
    %3121 = vmatpush1.msra.mxu0 0.0
    %3122 = vmatprep.subr.mxu0 0.0
    %3123 = vmatpush1.msra.mxu0 0.0
    %3124 = vmatprep.subr.mxu0 0.0
    %3125 = vmatpush1.msra.mxu0 0.0
    %3126 = vmatprep.subr.mxu0 0.0
    %3127 = vmatpush1.msra.mxu0 0.0
    %3128 = vmatprep.subr.mxu0 0.0
    %3129 = vmatpush1.msra.mxu0 0.0
    %3130 = vmatprep.subr.mxu0 0.0
    %3131 = vmatpush1.msra.mxu0 0.0
    %3132 = vmatprep.subr.mxu0 0.0
    %3133 = vmatpush1.msra.mxu0 0.0
    %3134 = vmatprep.subr.mxu0 0.0
    %3135 = vmatpush1.msra.mxu0 0.0
    %3136 = vmatprep.subr.mxu0 0.0
    %3137 = vmatpush1.msra.mxu0 0.0
    %3138 = vmatprep.subr.mxu0 0.0
    %3139 = vmatpush1.msra.mxu0 %v3106
    %3140 = vmatprep.subr.mxu0 0.0
    %3141 = vmatpush1.msra.mxu0 %v3105
    %3142 = vmatprep.subr.mxu0 0.0
    %3143 = vmatpush2.msra.mxu0 0.0
    %3144 = vmatprep.subr.mxu0 0.0
    %3145 = vmatpush2.msra.mxu0 0.0
    %3146 = vmatprep.subr.mxu0 0.0
    %3147 = vmatpush2.msra.mxu0 0.0
    %3148 = vmatprep.subr.mxu0 0.0
    %3149 = vmatpush2.msra.mxu0 0.0
    %3150 = vmatprep.subr.mxu0 0.0
    %3151 = vmatpush2.msra.mxu0 0.0
    %3152 = vmatprep.subr.mxu0 0.0
    %3153 = vmatpush2.msra.mxu0 0.0
    %3154 = vmatprep.subr.mxu0 0.0
    %3155 = vmatpush2.msra.mxu0 0.0
    %3156 = vmatprep.subr.mxu0 0.0
    %3157 = vmatpush2.msra.mxu0 0.0
    %3158 = vmatprep.subr.mxu0 0.0
    %3159 = vmatpush2.msra.mxu0 0.0
    %3160 = vmatprep.subr.mxu0 0.0
    %3161 = vmatpush2.msra.mxu0 0.0
    %3162 = vmatprep.subr.mxu0 0.0
    %3163 = vmatpush2.msra.mxu0 0.0
    %3164 = vmatprep.subr.mxu0 0.0
    %3165 = vmatpush2.msra.mxu0 0.0
    %3166 = vmatprep.subr.mxu0 0.0
    %3167 = vmatpush2.msra.mxu0 0.0
    %3168 = vmatprep.subr.mxu0 0.0
    %3169 = vmatpush2.msra.mxu0 0.0
    %3170 = vmatprep.subr.mxu0 0.0
    %3171 = vmatpush2.msra.mxu0 0.0
    %3172 = vmatprep.subr.mxu0 0.0
    %3173 = vmatpush2.msra.mxu0 0.0
    %3174 = vmatprep.mubr.f32.mxu0 0.0
    %3175 = vmatmul.mubr.f32.gmra.mxu0 %v3108
    %v3176 = vpop.f32.mrf.mxu0
    %v3177 = vadd.f32 0.0, %v3176
    %v3178 = vpop.f32.mrf.mxu0
    %3179 = vdwg.mxu0
    %v3180 = vlaneseq
    %v3181 = vshrl.u32 %v3180, 7
    %v3182 = vsub.s32 0, %v3181
    %v3183 = vrot.slane %v3177, %v3182
    %v3184 = vmul.f32 %v2968, %v3183
    %v3185 = vlaneseq
    %v3186 = vshrl.u32 %v3185, 7
    %v3187 = vsub.s32 1, %v3186
    %v3188 = vrot.slane %v3177, %v3187
    %v3189 = vadd.f32 %v3184, %v3188
    %v3190 = vadd.f32 %v2819, %v3189
    %v3191 = vmax.f32 %v3190, 0.0
    %v3192 = vrot.slane %v3191, 7
    %v3193 = vld [vmem:[%s85] sm:$0xff]
    %3195 = vset.pattern.permute.xlu0 0
    %3196 = vperm.xlu0 %3195, %v3193
    %v3197 = vpop.permute.xlu0 %3196
    %v3199 = vmul.f32 %v3192, %v3197
    %v3200 = vrot.slane %v3191, 1
    %v3201 = vld [vmem:[%s83] sm:$0xff]
    %3203 = vset.pattern.permute.xlu0 0
    %3204 = vperm.xlu0 %3203, %v3201
    %v3205 = vpop.permute.xlu0 %3204
    %v3207 = vmul.f32 %v3200, %v3205
    %3209 = vrot.lane.b32.xlu0 %v3191, 64
    %v3210 = vpop.permute.xlu0 %3209
    %v3212 = vsel %vm1168, %v3199, %v3210
    %v3213 = vpack.c.bf16 %v3212, %v3212
    %v3214 = vpack.c.bf16 %v3207, %v3207
    %v3215 = vld [vmem:[%s87] sm:$0xf]
    %v3216 = vld [vmem:[%s87 + $0x4] sm:$0xf]
    %v3217 = vld [vmem:[%s87 + $0x8] sm:$0xf]
    %v3218 = vld [vmem:[%s87 + $0xc] sm:$0xf]
    %v3219 = vld [vmem:[%s87 + $0x10] sm:$0xf]
    %v3220 = vld [vmem:[%s87 + $0x14] sm:$0xf]
    %v3221 = vld [vmem:[%s87 + $0x18] sm:$0xf]
    %v3222 = vld [vmem:[%s87 + $0x1c] sm:$0xf]
    %v3223 = vld [vmem:[%s87 + $0x20] sm:$0xf]
    %v3224 = vld [vmem:[%s87 + $0x24] sm:$0xf]
    %v3225 = vld [vmem:[%s87 + $0x28] sm:$0xf]
    %v3226 = vld [vmem:[%s87 + $0x2c] sm:$0xf]
    %v3227 = vld [vmem:[%s87 + $0x30] sm:$0xf]
    %v3228 = vld [vmem:[%s87 + $0x34] sm:$0xf]
    %v3229 = vld [vmem:[%s87 + $0x38] sm:$0xf]
    %v3230 = vld [vmem:[%s87 + $0x3c] sm:$0xf]
    %v3231 = vld [vmem:[%s87 + $0x40] sm:$0xf]
    %v3232 = vld [vmem:[%s87 + $0x44] sm:$0xf]
    %v3233 = vld [vmem:[%s87 + $0x48] sm:$0xf]
    %v3234 = vld [vmem:[%s87 + $0x4c] sm:$0xf]
    %v3235 = vld [vmem:[%s87 + $0x50] sm:$0xf]
    %v3236 = vld [vmem:[%s87 + $0x54] sm:$0xf]
    %v3237 = vld [vmem:[%s87 + $0x58] sm:$0xf]
    %v3238 = vld [vmem:[%s87 + $0x5c] sm:$0xf]
    %v3263 = vunpack.c.l.b16 %v3215
    %v3264 = vunpack.c.l.b16 %v3216
    %v3265 = vunpack.c.l.b16 %v3217
    %v3266 = vunpack.c.l.b16 %v3218
    %v3267 = vunpack.c.l.b16 %v3219
    %v3268 = vunpack.c.l.b16 %v3220
    %v3269 = vunpack.c.l.b16 %v3221
    %v3270 = vunpack.c.l.b16 %v3222
    %v3271 = vunpack.c.l.b16 %v3223
    %v3272 = vunpack.c.l.b16 %v3224
    %v3273 = vunpack.c.l.b16 %v3225
    %v3274 = vunpack.c.l.b16 %v3226
    %v3275 = vunpack.c.l.b16 %v3227
    %v3276 = vunpack.c.l.b16 %v3228
    %v3277 = vunpack.c.l.b16 %v3229
    %v3278 = vunpack.c.l.b16 %v3230
    %v3279 = vunpack.c.l.b16 %v3231
    %v3280 = vunpack.c.l.b16 %v3232
    %v3281 = vunpack.c.l.b16 %v3233
    %v3282 = vunpack.c.l.b16 %v3234
    %v3283 = vunpack.c.l.b16 %v3235
    %v3284 = vunpack.c.l.b16 %v3236
    %v3285 = vunpack.c.l.b16 %v3237
    %v3286 = vunpack.c.l.b16 %v3238
    %v3287 = vpack.c.b16 %v3264, %v3263
    %v3288 = vpack.c.b16 %v3266, %v3265
    %v3289 = vpack.c.b16 %v3268, %v3267
    %v3290 = vpack.c.b16 %v3270, %v3269
    %v3291 = vpack.c.b16 %v3272, %v3271
    %v3292 = vpack.c.b16 %v3274, %v3273
    %v3293 = vpack.c.b16 %v3276, %v3275
    %v3294 = vpack.c.b16 %v3278, %v3277
    %v3295 = vpack.c.b16 %v3280, %v3279
    %v3296 = vpack.c.b16 %v3282, %v3281
    %v3297 = vpack.c.b16 %v3284, %v3283
    %v3298 = vpack.c.b16 %v3286, %v3285
    %v3312 = vsel %vm1168, %v3214, 0
    %3314 = vmatprep.subr.bf16.mxu0 0
    %3315 = vmatpush1.bf16.msra.mxu0 %v3294
    %3316 = vmatprep.subr.bf16.mxu0 0
    %3317 = vmatpush1.bf16.msra.mxu0 %v3293
    %3318 = vmatprep.subr.bf16.mxu0 0
    %3319 = vmatpush1.bf16.msra.mxu0 %v3292
    %3320 = vmatprep.subr.bf16.mxu0 0
    %3321 = vmatpush1.bf16.msra.mxu0 %v3291
    %3322 = vmatprep.subr.bf16.mxu0 0
    %3323 = vmatpush1.bf16.msra.mxu0 %v3290
    %3324 = vmatprep.subr.bf16.mxu0 0
    %3325 = vmatpush1.bf16.msra.mxu0 %v3289
    %3326 = vmatprep.subr.bf16.mxu0 0
    %3327 = vmatpush1.bf16.msra.mxu0 %v3288
    %3328 = vmatprep.subr.bf16.mxu0 0
    %3329 = vmatpush1.bf16.msra.mxu0 %v3287
    %3330 = vmatprep.subr.bf16.mxu0 0
    %3331 = vmatpush2.bf16.msra.mxu0 0
    %3332 = vmatprep.subr.bf16.mxu0 0
    %3333 = vmatpush2.bf16.msra.mxu0 0
    %3334 = vmatprep.subr.bf16.mxu0 0
    %3335 = vmatpush2.bf16.msra.mxu0 0
    %3336 = vmatprep.subr.bf16.mxu0 0
    %3337 = vmatpush2.bf16.msra.mxu0 0
    %3338 = vmatprep.subr.bf16.mxu0 0
    %3339 = vmatpush2.bf16.msra.mxu0 %v3298
    %3340 = vmatprep.subr.bf16.mxu0 0
    %3341 = vmatpush2.bf16.msra.mxu0 %v3297
    %3342 = vmatprep.subr.bf16.mxu0 0
    %3343 = vmatpush2.bf16.msra.mxu0 %v3296
    %3344 = vmatprep.subr.bf16.mxu0 0
    %3345 = vmatpush2.bf16.msra.mxu0 %v3295
    %3346 = vmatprep.mubr.bf16.mxu0 %v3312
    %3347 = vmatmul.mubr.bf16.gmra.mxu0 %v3213
    %v3348 = vpop.f32.mrf.mxu0
    %v3349 = vadd.f32 0.0, %v3348
    %v3350 = vpop.f32.mrf.mxu0
    %v3351 = vpop.f32.mrf.mxu0
    %v3352 = vpop.f32.mrf.mxu0
    %3353 = vdwg.mxu0
    %v3354 = vld [vmem:[%s75] sm:$0xf]
    %v3356 = vsel %vm745, %v3354, 0
    %3358 = vmatprep.subr.mxu0 0.0
    %3359 = vmatpush1.msra.mxu0 0.0
    %3360 = vmatprep.subr.mxu0 0.0
    %3361 = vmatpush1.msra.mxu0 0.0
    %3362 = vmatprep.subr.mxu0 0.0
    %3363 = vmatpush1.msra.mxu0 0.0
    %3364 = vmatprep.subr.mxu0 0.0
    %3365 = vmatpush1.msra.mxu0 0.0
    %3366 = vmatprep.subr.mxu0 0.0
    %3367 = vmatpush1.msra.mxu0 0.0
    %3368 = vmatprep.subr.mxu0 0.0
    %3369 = vmatpush1.msra.mxu0 0.0
    %3370 = vmatprep.subr.mxu0 0.0
    %3371 = vmatpush1.msra.mxu0 0.0
    %3372 = vmatprep.subr.mxu0 0.0
    %3373 = vmatpush1.msra.mxu0 0.0
    %3374 = vmatprep.subr.mxu0 0.0
    %3375 = vmatpush1.msra.mxu0 0.0
    %3376 = vmatprep.subr.mxu0 0.0
    %3377 = vmatpush1.msra.mxu0 0.0
    %3378 = vmatprep.subr.mxu0 0.0
    %3379 = vmatpush1.msra.mxu0 0.0
    %3380 = vmatprep.subr.mxu0 0.0
    %3381 = vmatpush1.msra.mxu0 0.0
    %3382 = vmatprep.subr.mxu0 0.0
    %3383 = vmatpush1.msra.mxu0 0.0
    %3384 = vmatprep.subr.mxu0 0.0
    %3385 = vmatpush1.msra.mxu0 0.0
    %3386 = vmatprep.subr.mxu0 0.0
    %3387 = vmatpush1.msra.mxu0 0.0
    %3388 = vmatprep.subr.mxu0 0.0
    %3389 = vmatpush1.msra.mxu0 %v3349
    %3390 = vmatprep.subr.mxu0 0.0
    %3391 = vmatpush2.msra.mxu0 0.0
    %3392 = vmatprep.subr.mxu0 0.0
    %3393 = vmatpush2.msra.mxu0 0.0
    %3394 = vmatprep.subr.mxu0 0.0
    %3395 = vmatpush2.msra.mxu0 0.0
    %3396 = vmatprep.subr.mxu0 0.0
    %3397 = vmatpush2.msra.mxu0 0.0
    %3398 = vmatprep.subr.mxu0 0.0
    %3399 = vmatpush2.msra.mxu0 0.0
    %3400 = vmatprep.subr.mxu0 0.0
    %3401 = vmatpush2.msra.mxu0 0.0
    %3402 = vmatprep.subr.mxu0 0.0
    %3403 = vmatpush2.msra.mxu0 0.0
    %3404 = vmatprep.subr.mxu0 0.0
    %3405 = vmatpush2.msra.mxu0 0.0
    %3406 = vmatprep.subr.mxu0 0.0
    %3407 = vmatpush2.msra.mxu0 0.0
    %3408 = vmatprep.subr.mxu0 0.0
    %3409 = vmatpush2.msra.mxu0 0.0
    %3410 = vmatprep.subr.mxu0 0.0
    %3411 = vmatpush2.msra.mxu0 0.0
    %3412 = vmatprep.subr.mxu0 0.0
    %3413 = vmatpush2.msra.mxu0 0.0
    %3414 = vmatprep.subr.mxu0 0.0
    %3415 = vmatpush2.msra.mxu0 0.0
    %3416 = vmatprep.subr.mxu0 0.0
    %3417 = vmatpush2.msra.mxu0 0.0
    %3418 = vmatprep.subr.mxu0 0.0
    %3419 = vmatpush2.msra.mxu0 0.0
    %3420 = vmatprep.subr.mxu0 0.0
    %3421 = vmatpush2.msra.mxu0 0.0
    %3422 = vmatprep.mubr.f32.mxu0 0.0
    %3423 = vmatmul.mubr.f32.gmra.mxu0 %v3356
    %v3424 = vpop.f32.mrf.mxu0
    %v3425 = vadd.f32 0.0, %v3424
    %v3426 = vpop.f32.mrf.mxu0
    %3427 = vdwg.mxu0
    %vm3428 = vcmask 519168
    %v3429 = vsel %vm3428, %v3425, 0.0
    %v3430 = vrot.slane %v3429, 4
    %v3431 = vadd.f32 %v3429, %v3430
    %v3432 = vrot.slane %v3431, 2
    %v3433 = vadd.f32 %v3431, %v3432
    %v3434 = vrot.slane %v3433, 1
    %v3435 = vadd.f32 %v3433, %v3434
    %v3436 = vmul.f32 %v3425, %v3425
    %v3437 = vsel %vm3428, %v3436, 0.0
    %v3438 = vrot.slane %v3437, 4
    %v3439 = vadd.f32 %v3437, %v3438
    %v3440 = vrot.slane %v3439, 2
    %v3441 = vadd.f32 %v3439, %v3440
    %v3442 = vrot.slane %v3441, 1
    %v3443 = vadd.f32 %v3441, %v3442
    %v3444 = vsel %vm619, %v3435, %v3443
    %v3445 = vld [vmem:[%s81] sm:$0xff]
    %v3446 = vld [vmem:[%s81 + $0x8] sm:$0xff]
    %v3447 = vld [vmem:[%s81 + $0x10] sm:$0xff]
    %v3448 = vld [vmem:[%s81 + $0x18] sm:$0xff]
    %v3449 = vld [vmem:[%s81 + $0x20] sm:$0xff]
    %v3450 = vld [vmem:[%s81 + $0x28] sm:$0xff]
    %v3451 = vld [vmem:[%s81 + $0x30] sm:$0xff]
    %v3452 = vld [vmem:[%s81 + $0x38] sm:$0xff]
    %v3454 = vsel %vm1168, %v3444, 0
    %3456 = vmatprep.subr.mxu0 0.0
    %3457 = vmatpush1.msra.mxu0 0.0
    %3458 = vmatprep.subr.mxu0 0.0
    %3459 = vmatpush1.msra.mxu0 0.0
    %3460 = vmatprep.subr.mxu0 0.0
    %3461 = vmatpush1.msra.mxu0 0.0
    %3462 = vmatprep.subr.mxu0 0.0
    %3463 = vmatpush1.msra.mxu0 0.0
    %3464 = vmatprep.subr.mxu0 0.0
    %3465 = vmatpush1.msra.mxu0 0.0
    %3466 = vmatprep.subr.mxu0 0.0
    %3467 = vmatpush1.msra.mxu0 0.0
    %3468 = vmatprep.subr.mxu0 0.0
    %3469 = vmatpush1.msra.mxu0 0.0
    %3470 = vmatprep.subr.mxu0 0.0
    %3471 = vmatpush1.msra.mxu0 0.0
    %3472 = vmatprep.subr.mxu0 0.0
    %3473 = vmatpush1.msra.mxu0 %v3452
    %3474 = vmatprep.subr.mxu0 0.0
    %3475 = vmatpush1.msra.mxu0 %v3451
    %3476 = vmatprep.subr.mxu0 0.0
    %3477 = vmatpush1.msra.mxu0 %v3450
    %3478 = vmatprep.subr.mxu0 0.0
    %3479 = vmatpush1.msra.mxu0 %v3449
    %3480 = vmatprep.subr.mxu0 0.0
    %3481 = vmatpush1.msra.mxu0 %v3448
    %3482 = vmatprep.subr.mxu0 0.0
    %3483 = vmatpush1.msra.mxu0 %v3447
    %3484 = vmatprep.subr.mxu0 0.0
    %3485 = vmatpush1.msra.mxu0 %v3446
    %3486 = vmatprep.subr.mxu0 0.0
    %3487 = vmatpush1.msra.mxu0 %v3445
    %3488 = vmatprep.subr.mxu0 0.0
    %3489 = vmatpush2.msra.mxu0 0.0
    %3490 = vmatprep.subr.mxu0 0.0
    %3491 = vmatpush2.msra.mxu0 0.0
    %3492 = vmatprep.subr.mxu0 0.0
    %3493 = vmatpush2.msra.mxu0 0.0
    %3494 = vmatprep.subr.mxu0 0.0
    %3495 = vmatpush2.msra.mxu0 0.0
    %3496 = vmatprep.subr.mxu0 0.0
    %3497 = vmatpush2.msra.mxu0 0.0
    %3498 = vmatprep.subr.mxu0 0.0
    %3499 = vmatpush2.msra.mxu0 0.0
    %3500 = vmatprep.subr.mxu0 0.0
    %3501 = vmatpush2.msra.mxu0 0.0
    %3502 = vmatprep.subr.mxu0 0.0
    %3503 = vmatpush2.msra.mxu0 0.0
    %3504 = vmatprep.subr.mxu0 0.0
    %3505 = vmatpush2.msra.mxu0 0.0
    %3506 = vmatprep.subr.mxu0 0.0
    %3507 = vmatpush2.msra.mxu0 0.0
    %3508 = vmatprep.subr.mxu0 0.0
    %3509 = vmatpush2.msra.mxu0 0.0
    %3510 = vmatprep.subr.mxu0 0.0
    %3511 = vmatpush2.msra.mxu0 0.0
    %3512 = vmatprep.subr.mxu0 0.0
    %3513 = vmatpush2.msra.mxu0 0.0
    %3514 = vmatprep.subr.mxu0 0.0
    %3515 = vmatpush2.msra.mxu0 0.0
    %3516 = vmatprep.subr.mxu0 0.0
    %3517 = vmatpush2.msra.mxu0 0.0
    %3518 = vmatprep.subr.mxu0 0.0
    %3519 = vmatpush2.msra.mxu0 0.0
    %3520 = vmatprep.mubr.f32.mxu0 0.0
    %3521 = vmatmul.mubr.f32.gmra.mxu0 %v3454
    %v3522 = vpop.f32.mrf.mxu0
    %v3523 = vadd.f32 0.0, %v3522
    %v3524 = vpop.f32.mrf.mxu0
    %3525 = vdwg.mxu0
    %v3526 = vmul.f32 %v3523, %v3523
    %v3528 = vrot.slane %v3526, 7
    %v3530 = vsub.f32 %v3523, %v3528
    %v3531 = vmax.f32 %v3530, 0.0
    %v3532 = vld [vmem:[%s77] sm:$0x1]
    %v3533 = vadd.f32 %v3531, 1e-05
    %v3534 = vrsqrt.pop %v3533
    %v3537 = vunpack.c.l.s4 1966171168
    %v3538 = vunpack.c.0.s8 %v3537
    %v3539 = vlaneseq
    %v3540 = vshrl.u32 %v3539, 7
    %v3541 = vsub.s32 %v3538, %v3540
    %v3542 = vrot.slane %v3534, %v3541
    %v3543 = vcombine.high %v3542, %v3542
    %v3545 = vunpack.c.l.s4 1966171168
    %v3546 = vunpack.c.0.s8 %v3545
    %v3547 = vlaneseq
    %v3548 = vshrl.u32 %v3547, 7
    %v3549 = vsub.s32 %v3546, %v3548
    %v3550 = vrot.slane %v3543, %v3549
    %v3552 = vmul.f32 %v3532, %v3550
    %v3553 = vld [vmem:[%s73] sm:$0x1]
    %v3554 = vmul.f32 %v3523, %v3552
    %v3555 = vsub.f32 %v3553, %v3554
    %v3557 = vlaneseq
    %v3558 = vshrl.u32 %v3557, 7
    %v3559 = vsub.s32 0, %v3558
    %v3560 = vrot.slane %v3555, %v3559
    %v3562 = vsel %vm619, %v3552, %v3560
    %v3563 = vld [vmem:[%s79] sm:$0xff]
    %v3564 = vld [vmem:[%s79 + $0x8] sm:$0xff]
    %v3565 = vld [vmem:[%s79 + $0x10] sm:$0xff]
    %v3566 = vld [vmem:[%s79 + $0x18] sm:$0xff]
    %v3568 = vsel %vm921, %v3562, 0
    %3570 = vmatprep.subr.mxu0 0.0
    %3571 = vmatpush1.msra.mxu0 0.0
    %3572 = vmatprep.subr.mxu0 0.0
    %3573 = vmatpush1.msra.mxu0 0.0
    %3574 = vmatprep.subr.mxu0 0.0
    %3575 = vmatpush1.msra.mxu0 0.0
    %3576 = vmatprep.subr.mxu0 0.0
    %3577 = vmatpush1.msra.mxu0 0.0
    %3578 = vmatprep.subr.mxu0 0.0
    %3579 = vmatpush1.msra.mxu0 0.0
    %3580 = vmatprep.subr.mxu0 0.0
    %3581 = vmatpush1.msra.mxu0 0.0
    %3582 = vmatprep.subr.mxu0 0.0
    %3583 = vmatpush1.msra.mxu0 0.0
    %3584 = vmatprep.subr.mxu0 0.0
    %3585 = vmatpush1.msra.mxu0 0.0
    %3586 = vmatprep.subr.mxu0 0.0
    %3587 = vmatpush1.msra.mxu0 0.0
    %3588 = vmatprep.subr.mxu0 0.0
    %3589 = vmatpush1.msra.mxu0 0.0
    %3590 = vmatprep.subr.mxu0 0.0
    %3591 = vmatpush1.msra.mxu0 0.0
    %3592 = vmatprep.subr.mxu0 0.0
    %3593 = vmatpush1.msra.mxu0 0.0
    %3594 = vmatprep.subr.mxu0 0.0
    %3595 = vmatpush1.msra.mxu0 %v3566
    %3596 = vmatprep.subr.mxu0 0.0
    %3597 = vmatpush1.msra.mxu0 %v3565
    %3598 = vmatprep.subr.mxu0 0.0
    %3599 = vmatpush1.msra.mxu0 %v3564
    %3600 = vmatprep.subr.mxu0 0.0
    %3601 = vmatpush1.msra.mxu0 %v3563
    %3602 = vmatprep.subr.mxu0 0.0
    %3603 = vmatpush2.msra.mxu0 0.0
    %3604 = vmatprep.subr.mxu0 0.0
    %3605 = vmatpush2.msra.mxu0 0.0
    %3606 = vmatprep.subr.mxu0 0.0
    %3607 = vmatpush2.msra.mxu0 0.0
    %3608 = vmatprep.subr.mxu0 0.0
    %3609 = vmatpush2.msra.mxu0 0.0
    %3610 = vmatprep.subr.mxu0 0.0
    %3611 = vmatpush2.msra.mxu0 0.0
    %3612 = vmatprep.subr.mxu0 0.0
    %3613 = vmatpush2.msra.mxu0 0.0
    %3614 = vmatprep.subr.mxu0 0.0
    %3615 = vmatpush2.msra.mxu0 0.0
    %3616 = vmatprep.subr.mxu0 0.0
    %3617 = vmatpush2.msra.mxu0 0.0
    %3618 = vmatprep.subr.mxu0 0.0
    %3619 = vmatpush2.msra.mxu0 0.0
    %3620 = vmatprep.subr.mxu0 0.0
    %3621 = vmatpush2.msra.mxu0 0.0
    %3622 = vmatprep.subr.mxu0 0.0
    %3623 = vmatpush2.msra.mxu0 0.0
    %3624 = vmatprep.subr.mxu0 0.0
    %3625 = vmatpush2.msra.mxu0 0.0
    %3626 = vmatprep.subr.mxu0 0.0
    %3627 = vmatpush2.msra.mxu0 0.0
    %3628 = vmatprep.subr.mxu0 0.0
    %3629 = vmatpush2.msra.mxu0 0.0
    %3630 = vmatprep.subr.mxu0 0.0
    %3631 = vmatpush2.msra.mxu0 0.0
    %3632 = vmatprep.subr.mxu0 0.0
    %3633 = vmatpush2.msra.mxu0 0.0
    %3634 = vmatprep.mubr.f32.mxu0 0.0
    %3635 = vmatmul.mubr.f32.gmra.mxu0 %v3568
    %v3636 = vpop.f32.mrf.mxu0
    %v3637 = vadd.f32 0.0, %v3636
    %v3638 = vpop.f32.mrf.mxu0
    %3639 = vdwg.mxu0
    %v3640 = vlaneseq
    %v3641 = vshrl.u32 %v3640, 7
    %v3642 = vsub.s32 0, %v3641
    %v3643 = vrot.slane %v3637, %v3642
    %v3644 = vmul.f32 %v3425, %v3643
    %v3645 = vlaneseq
    %v3646 = vshrl.u32 %v3645, 7
    %v3647 = vsub.s32 1, %v3646
    %v3648 = vrot.slane %v3637, %v3647
    %v3649 = vadd.f32 %v3644, %v3648
    %v3650 = vmax.f32 %v3649, 0.0
    %v3651 = vld [vmem:[%s97] sm:$0xf]
    %vm3652 = vcmask 31744
    %v3654 = vsel %vm3652, %v3651, 0
    %vm3656 = vcmask 1043456
    %v3658 = vsel %vm3656, %v3650, 0
    %3660 = vmatprep.subr.mxu0 0.0
    %3661 = vmatpush1.msra.mxu0 0.0
    %3662 = vmatprep.subr.mxu0 0.0
    %3663 = vmatpush1.msra.mxu0 0.0
    %3664 = vmatprep.subr.mxu0 0.0
    %3665 = vmatpush1.msra.mxu0 0.0
    %3666 = vmatprep.subr.mxu0 0.0
    %3667 = vmatpush1.msra.mxu0 0.0
    %3668 = vmatprep.subr.mxu0 0.0
    %3669 = vmatpush1.msra.mxu0 0.0
    %3670 = vmatprep.subr.mxu0 0.0
    %3671 = vmatpush1.msra.mxu0 0.0
    %3672 = vmatprep.subr.mxu0 0.0
    %3673 = vmatpush1.msra.mxu0 0.0
    %3674 = vmatprep.subr.mxu0 0.0
    %3675 = vmatpush1.msra.mxu0 0.0
    %3676 = vmatprep.subr.mxu0 0.0
    %3677 = vmatpush1.msra.mxu0 0.0
    %3678 = vmatprep.subr.mxu0 0.0
    %3679 = vmatpush1.msra.mxu0 0.0
    %3680 = vmatprep.subr.mxu0 0.0
    %3681 = vmatpush1.msra.mxu0 0.0
    %3682 = vmatprep.subr.mxu0 0.0
    %3683 = vmatpush1.msra.mxu0 0.0
    %3684 = vmatprep.subr.mxu0 0.0
    %3685 = vmatpush1.msra.mxu0 0.0
    %3686 = vmatprep.subr.mxu0 0.0
    %3687 = vmatpush1.msra.mxu0 0.0
    %3688 = vmatprep.subr.mxu0 0.0
    %3689 = vmatpush1.msra.mxu0 0.0
    %3690 = vmatprep.subr.mxu0 0.0
    %3691 = vmatpush1.msra.mxu0 %v3658
    %3692 = vmatprep.subr.mxu0 0.0
    %3693 = vmatpush2.msra.mxu0 0.0
    %3694 = vmatprep.subr.mxu0 0.0
    %3695 = vmatpush2.msra.mxu0 0.0
    %3696 = vmatprep.subr.mxu0 0.0
    %3697 = vmatpush2.msra.mxu0 0.0
    %3698 = vmatprep.subr.mxu0 0.0
    %3699 = vmatpush2.msra.mxu0 0.0
    %3700 = vmatprep.subr.mxu0 0.0
    %3701 = vmatpush2.msra.mxu0 0.0
    %3702 = vmatprep.subr.mxu0 0.0
    %3703 = vmatpush2.msra.mxu0 0.0
    %3704 = vmatprep.subr.mxu0 0.0
    %3705 = vmatpush2.msra.mxu0 0.0
    %3706 = vmatprep.subr.mxu0 0.0
    %3707 = vmatpush2.msra.mxu0 0.0
    %3708 = vmatprep.subr.mxu0 0.0
    %3709 = vmatpush2.msra.mxu0 0.0
    %3710 = vmatprep.subr.mxu0 0.0
    %3711 = vmatpush2.msra.mxu0 0.0
    %3712 = vmatprep.subr.mxu0 0.0
    %3713 = vmatpush2.msra.mxu0 0.0
    %3714 = vmatprep.subr.mxu0 0.0
    %3715 = vmatpush2.msra.mxu0 0.0
    %3716 = vmatprep.subr.mxu0 0.0
    %3717 = vmatpush2.msra.mxu0 0.0
    %3718 = vmatprep.subr.mxu0 0.0
    %3719 = vmatpush2.msra.mxu0 0.0
    %3720 = vmatprep.subr.mxu0 0.0
    %3721 = vmatpush2.msra.mxu0 0.0
    %3722 = vmatprep.subr.mxu0 0.0
    %3723 = vmatpush2.msra.mxu0 0.0
    %3724 = vmatprep.mubr.f32.mxu0 0.0
    %3725 = vmatmul.mubr.f32.gmra.mxu0 %v3654
    %v3726 = vpop.f32.mrf.mxu0
    %v3727 = vadd.f32 0.0, %v3726
    %v3728 = vpop.f32.mrf.mxu0
    %3729 = vdwg.mxu0
    %s3730 = scalar_lea.vmem %s97, 4
    %v3731 = vld [vmem:[%s3730] sm:$0xf]
    %v3733 = vsel %vm3652, %v3731, 0
    %3735 = vmatprep.subr.mxu0 0.0
    %3736 = vmatpush1.msra.mxu0 0.0
    %3737 = vmatprep.subr.mxu0 0.0
    %3738 = vmatpush1.msra.mxu0 0.0
    %3739 = vmatprep.subr.mxu0 0.0
    %3740 = vmatpush1.msra.mxu0 0.0
    %3741 = vmatprep.subr.mxu0 0.0
    %3742 = vmatpush1.msra.mxu0 0.0
    %3743 = vmatprep.subr.mxu0 0.0
    %3744 = vmatpush1.msra.mxu0 0.0
    %3745 = vmatprep.subr.mxu0 0.0
    %3746 = vmatpush1.msra.mxu0 0.0
    %3747 = vmatprep.subr.mxu0 0.0
    %3748 = vmatpush1.msra.mxu0 0.0
    %3749 = vmatprep.subr.mxu0 0.0
    %3750 = vmatpush1.msra.mxu0 0.0
    %3751 = vmatprep.subr.mxu0 0.0
    %3752 = vmatpush1.msra.mxu0 0.0
    %3753 = vmatprep.subr.mxu0 0.0
    %3754 = vmatpush1.msra.mxu0 0.0
    %3755 = vmatprep.subr.mxu0 0.0
    %3756 = vmatpush1.msra.mxu0 0.0
    %3757 = vmatprep.subr.mxu0 0.0
    %3758 = vmatpush1.msra.mxu0 0.0
    %3759 = vmatprep.subr.mxu0 0.0
    %3760 = vmatpush1.msra.mxu0 0.0
    %3761 = vmatprep.subr.mxu0 0.0
    %3762 = vmatpush1.msra.mxu0 0.0
    %3763 = vmatprep.subr.mxu0 0.0
    %3764 = vmatpush1.msra.mxu0 0.0
    %3765 = vmatprep.subr.mxu0 0.0
    %3766 = vmatpush1.msra.mxu0 %v3658
    %3767 = vmatprep.subr.mxu0 0.0
    %3768 = vmatpush2.msra.mxu0 0.0
    %3769 = vmatprep.subr.mxu0 0.0
    %3770 = vmatpush2.msra.mxu0 0.0
    %3771 = vmatprep.subr.mxu0 0.0
    %3772 = vmatpush2.msra.mxu0 0.0
    %3773 = vmatprep.subr.mxu0 0.0
    %3774 = vmatpush2.msra.mxu0 0.0
    %3775 = vmatprep.subr.mxu0 0.0
    %3776 = vmatpush2.msra.mxu0 0.0
    %3777 = vmatprep.subr.mxu0 0.0
    %3778 = vmatpush2.msra.mxu0 0.0
    %3779 = vmatprep.subr.mxu0 0.0
    %3780 = vmatpush2.msra.mxu0 0.0
    %3781 = vmatprep.subr.mxu0 0.0
    %3782 = vmatpush2.msra.mxu0 0.0
    %3783 = vmatprep.subr.mxu0 0.0
    %3784 = vmatpush2.msra.mxu0 0.0
    %3785 = vmatprep.subr.mxu0 0.0
    %3786 = vmatpush2.msra.mxu0 0.0
    %3787 = vmatprep.subr.mxu0 0.0
    %3788 = vmatpush2.msra.mxu0 0.0
    %3789 = vmatprep.subr.mxu0 0.0
    %3790 = vmatpush2.msra.mxu0 0.0
    %3791 = vmatprep.subr.mxu0 0.0
    %3792 = vmatpush2.msra.mxu0 0.0
    %3793 = vmatprep.subr.mxu0 0.0
    %3794 = vmatpush2.msra.mxu0 0.0
    %3795 = vmatprep.subr.mxu0 0.0
    %3796 = vmatpush2.msra.mxu0 0.0
    %3797 = vmatprep.subr.mxu0 0.0
    %3798 = vmatpush2.msra.mxu0 0.0
    %3799 = vmatprep.mubr.f32.mxu0 0.0
    %3800 = vmatmul.mubr.f32.gmra.mxu0 %v3733
    %v3801 = vpop.f32.mrf.mxu0
    %v3802 = vadd.f32 0.0, %v3801
    %v3803 = vpop.f32.mrf.mxu0
    %3804 = vdwg.mxu0
    %3805 = vrot.lane.b32.xlu0 %v3650, 64
    %v3806 = vpop.permute.xlu0 %3805
    %v3808 = vsel %vm1168, %v3727, %v3806
    %v3809 = vpack.c.bf16 %v3808, %v3808
    %v3810 = vpack.c.bf16 %v3802, %v3802
    %v3811 = vld [vmem:[%s99] sm:$0xf]
    %v3812 = vld [vmem:[%s99 + $0x4] sm:$0xf]
    %v3813 = vld [vmem:[%s99 + $0x8] sm:$0xf]
    %v3814 = vld [vmem:[%s99 + $0xc] sm:$0xf]
    %v3815 = vld [vmem:[%s99 + $0x10] sm:$0xf]
    %v3816 = vld [vmem:[%s99 + $0x14] sm:$0xf]
    %v3817 = vld [vmem:[%s99 + $0x18] sm:$0xf]
    %v3818 = vld [vmem:[%s99 + $0x1c] sm:$0xf]
    %v3819 = vld [vmem:[%s99 + $0x20] sm:$0xf]
    %v3820 = vld [vmem:[%s99 + $0x24] sm:$0xf]
    %v3821 = vld [vmem:[%s99 + $0x28] sm:$0xf]
    %v3822 = vld [vmem:[%s99 + $0x2c] sm:$0xf]
    %v3823 = vld [vmem:[%s99 + $0x30] sm:$0xf]
    %v3824 = vld [vmem:[%s99 + $0x34] sm:$0xf]
    %v3825 = vld [vmem:[%s99 + $0x38] sm:$0xf]
    %v3826 = vld [vmem:[%s99 + $0x3c] sm:$0xf]
    %v3827 = vld [vmem:[%s99 + $0x40] sm:$0xf]
    %v3828 = vld [vmem:[%s99 + $0x44] sm:$0xf]
    %v3829 = vld [vmem:[%s99 + $0x48] sm:$0xf]
    %v3830 = vld [vmem:[%s99 + $0x4c] sm:$0xf]
    %v3831 = vld [vmem:[%s99 + $0x50] sm:$0xf]
    %v3832 = vld [vmem:[%s99 + $0x54] sm:$0xf]
    %v3833 = vld [vmem:[%s99 + $0x58] sm:$0xf]
    %v3834 = vld [vmem:[%s99 + $0x5c] sm:$0xf]
    %v3859 = vunpack.c.l.b16 %v3811
    %v3860 = vunpack.c.l.b16 %v3812
    %v3861 = vunpack.c.l.b16 %v3813
    %v3862 = vunpack.c.l.b16 %v3814
    %v3863 = vunpack.c.l.b16 %v3815
    %v3864 = vunpack.c.l.b16 %v3816
    %v3865 = vunpack.c.l.b16 %v3817
    %v3866 = vunpack.c.l.b16 %v3818
    %v3867 = vunpack.c.l.b16 %v3819
    %v3868 = vunpack.c.l.b16 %v3820
    %v3869 = vunpack.c.l.b16 %v3821
    %v3870 = vunpack.c.l.b16 %v3822
    %v3871 = vunpack.c.l.b16 %v3823
    %v3872 = vunpack.c.l.b16 %v3824
    %v3873 = vunpack.c.l.b16 %v3825
    %v3874 = vunpack.c.l.b16 %v3826
    %v3875 = vunpack.c.l.b16 %v3827
    %v3876 = vunpack.c.l.b16 %v3828
    %v3877 = vunpack.c.l.b16 %v3829
    %v3878 = vunpack.c.l.b16 %v3830
    %v3879 = vunpack.c.l.b16 %v3831
    %v3880 = vunpack.c.l.b16 %v3832
    %v3881 = vunpack.c.l.b16 %v3833
    %v3882 = vunpack.c.l.b16 %v3834
    %v3883 = vpack.c.b16 %v3860, %v3859
    %v3884 = vpack.c.b16 %v3862, %v3861
    %v3885 = vpack.c.b16 %v3864, %v3863
    %v3886 = vpack.c.b16 %v3866, %v3865
    %v3887 = vpack.c.b16 %v3868, %v3867
    %v3888 = vpack.c.b16 %v3870, %v3869
    %v3889 = vpack.c.b16 %v3872, %v3871
    %v3890 = vpack.c.b16 %v3874, %v3873
    %v3891 = vpack.c.b16 %v3876, %v3875
    %v3892 = vpack.c.b16 %v3878, %v3877
    %v3893 = vpack.c.b16 %v3880, %v3879
    %v3894 = vpack.c.b16 %v3882, %v3881
    %v3908 = vsel %vm1168, %v3810, 0
    %3910 = vmatprep.subr.bf16.mxu0 0
    %3911 = vmatpush1.bf16.msra.mxu0 %v3890
    %3912 = vmatprep.subr.bf16.mxu0 0
    %3913 = vmatpush1.bf16.msra.mxu0 %v3889
    %3914 = vmatprep.subr.bf16.mxu0 0
    %3915 = vmatpush1.bf16.msra.mxu0 %v3888
    %3916 = vmatprep.subr.bf16.mxu0 0
    %3917 = vmatpush1.bf16.msra.mxu0 %v3887
    %3918 = vmatprep.subr.bf16.mxu0 0
    %3919 = vmatpush1.bf16.msra.mxu0 %v3886
    %3920 = vmatprep.subr.bf16.mxu0 0
    %3921 = vmatpush1.bf16.msra.mxu0 %v3885
    %3922 = vmatprep.subr.bf16.mxu0 0
    %3923 = vmatpush1.bf16.msra.mxu0 %v3884
    %3924 = vmatprep.subr.bf16.mxu0 0
    %3925 = vmatpush1.bf16.msra.mxu0 %v3883
    %3926 = vmatprep.subr.bf16.mxu0 0
    %3927 = vmatpush2.bf16.msra.mxu0 0
    %3928 = vmatprep.subr.bf16.mxu0 0
    %3929 = vmatpush2.bf16.msra.mxu0 0
    %3930 = vmatprep.subr.bf16.mxu0 0
    %3931 = vmatpush2.bf16.msra.mxu0 0
    %3932 = vmatprep.subr.bf16.mxu0 0
    %3933 = vmatpush2.bf16.msra.mxu0 0
    %3934 = vmatprep.subr.bf16.mxu0 0
    %3935 = vmatpush2.bf16.msra.mxu0 %v3894
    %3936 = vmatprep.subr.bf16.mxu0 0
    %3937 = vmatpush2.bf16.msra.mxu0 %v3893
    %3938 = vmatprep.subr.bf16.mxu0 0
    %3939 = vmatpush2.bf16.msra.mxu0 %v3892
    %3940 = vmatprep.subr.bf16.mxu0 0
    %3941 = vmatpush2.bf16.msra.mxu0 %v3891
    %3942 = vmatprep.mubr.bf16.mxu0 %v3908
    %3943 = vmatmul.mubr.bf16.gmra.mxu0 %v3809
    %v3944 = vpop.f32.mrf.mxu0
    %v3945 = vadd.f32 0.0, %v3944
    %v3946 = vpop.f32.mrf.mxu0
    %v3947 = vpop.f32.mrf.mxu0
    %v3948 = vpop.f32.mrf.mxu0
    %3949 = vdwg.mxu0
    %v3950 = vsel %vm3428, %v3945, 0.0
    %v3951 = vrot.slane %v3950, 4
    %v3952 = vadd.f32 %v3950, %v3951
    %v3953 = vrot.slane %v3952, 2
    %v3954 = vadd.f32 %v3952, %v3953
    %v3955 = vrot.slane %v3954, 1
    %v3956 = vadd.f32 %v3954, %v3955
    %v3957 = vmul.f32 %v3945, %v3945
    %v3958 = vsel %vm3428, %v3957, 0.0
    %v3959 = vrot.slane %v3958, 4
    %v3960 = vadd.f32 %v3958, %v3959
    %v3961 = vrot.slane %v3960, 2
    %v3962 = vadd.f32 %v3960, %v3961
    %v3963 = vrot.slane %v3962, 1
    %v3964 = vadd.f32 %v3962, %v3963
    %v3965 = vsel %vm619, %v3956, %v3964
    %v3966 = vld [vmem:[%s95] sm:$0xff]
    %v3967 = vld [vmem:[%s95 + $0x8] sm:$0xff]
    %v3968 = vld [vmem:[%s95 + $0x10] sm:$0xff]
    %v3969 = vld [vmem:[%s95 + $0x18] sm:$0xff]
    %v3970 = vld [vmem:[%s95 + $0x20] sm:$0xff]
    %v3971 = vld [vmem:[%s95 + $0x28] sm:$0xff]
    %v3972 = vld [vmem:[%s95 + $0x30] sm:$0xff]
    %v3973 = vld [vmem:[%s95 + $0x38] sm:$0xff]
    %v3975 = vsel %vm1168, %v3965, 0
    %3977 = vmatprep.subr.mxu0 0.0
    %3978 = vmatpush1.msra.mxu0 0.0
    %3979 = vmatprep.subr.mxu0 0.0
    %3980 = vmatpush1.msra.mxu0 0.0
    %3981 = vmatprep.subr.mxu0 0.0
    %3982 = vmatpush1.msra.mxu0 0.0
    %3983 = vmatprep.subr.mxu0 0.0
    %3984 = vmatpush1.msra.mxu0 0.0
    %3985 = vmatprep.subr.mxu0 0.0
    %3986 = vmatpush1.msra.mxu0 0.0
    %3987 = vmatprep.subr.mxu0 0.0
    %3988 = vmatpush1.msra.mxu0 0.0
    %3989 = vmatprep.subr.mxu0 0.0
    %3990 = vmatpush1.msra.mxu0 0.0
    %3991 = vmatprep.subr.mxu0 0.0
    %3992 = vmatpush1.msra.mxu0 0.0
    %3993 = vmatprep.subr.mxu0 0.0
    %3994 = vmatpush1.msra.mxu0 %v3973
    %3995 = vmatprep.subr.mxu0 0.0
    %3996 = vmatpush1.msra.mxu0 %v3972
    %3997 = vmatprep.subr.mxu0 0.0
    %3998 = vmatpush1.msra.mxu0 %v3971
    %3999 = vmatprep.subr.mxu0 0.0
    %4000 = vmatpush1.msra.mxu0 %v3970
    %4001 = vmatprep.subr.mxu0 0.0
    %4002 = vmatpush1.msra.mxu0 %v3969
    %4003 = vmatprep.subr.mxu0 0.0
    %4004 = vmatpush1.msra.mxu0 %v3968
    %4005 = vmatprep.subr.mxu0 0.0
    %4006 = vmatpush1.msra.mxu0 %v3967
    %4007 = vmatprep.subr.mxu0 0.0
    %4008 = vmatpush1.msra.mxu0 %v3966
    %4009 = vmatprep.subr.mxu0 0.0
    %4010 = vmatpush2.msra.mxu0 0.0
    %4011 = vmatprep.subr.mxu0 0.0
    %4012 = vmatpush2.msra.mxu0 0.0
    %4013 = vmatprep.subr.mxu0 0.0
    %4014 = vmatpush2.msra.mxu0 0.0
    %4015 = vmatprep.subr.mxu0 0.0
    %4016 = vmatpush2.msra.mxu0 0.0
    %4017 = vmatprep.subr.mxu0 0.0
    %4018 = vmatpush2.msra.mxu0 0.0
    %4019 = vmatprep.subr.mxu0 0.0
    %4020 = vmatpush2.msra.mxu0 0.0
    %4021 = vmatprep.subr.mxu0 0.0
    %4022 = vmatpush2.msra.mxu0 0.0
    %4023 = vmatprep.subr.mxu0 0.0
    %4024 = vmatpush2.msra.mxu0 0.0
    %4025 = vmatprep.subr.mxu0 0.0
    %4026 = vmatpush2.msra.mxu0 0.0
    %4027 = vmatprep.subr.mxu0 0.0
    %4028 = vmatpush2.msra.mxu0 0.0
    %4029 = vmatprep.subr.mxu0 0.0
    %4030 = vmatpush2.msra.mxu0 0.0
    %4031 = vmatprep.subr.mxu0 0.0
    %4032 = vmatpush2.msra.mxu0 0.0
    %4033 = vmatprep.subr.mxu0 0.0
    %4034 = vmatpush2.msra.mxu0 0.0
    %4035 = vmatprep.subr.mxu0 0.0
    %4036 = vmatpush2.msra.mxu0 0.0
    %4037 = vmatprep.subr.mxu0 0.0
    %4038 = vmatpush2.msra.mxu0 0.0
    %4039 = vmatprep.subr.mxu0 0.0
    %4040 = vmatpush2.msra.mxu0 0.0
    %4041 = vmatprep.mubr.f32.mxu0 0.0
    %4042 = vmatmul.mubr.f32.gmra.mxu0 %v3975
    %v4043 = vpop.f32.mrf.mxu0
    %v4044 = vadd.f32 0.0, %v4043
    %v4045 = vpop.f32.mrf.mxu0
    %4046 = vdwg.mxu0
    %v4047 = vmul.f32 %v4044, %v4044
    %v4049 = vrot.slane %v4047, 7
    %v4051 = vsub.f32 %v4044, %v4049
    %v4052 = vmax.f32 %v4051, 0.0
    %v4053 = vld [vmem:[%s91] sm:$0x1]
    %v4054 = vadd.f32 %v4052, 1e-05
    %v4055 = vrsqrt.pop %v4054
    %v4058 = vunpack.c.l.s4 1966171168
    %v4059 = vunpack.c.0.s8 %v4058
    %v4060 = vlaneseq
    %v4061 = vshrl.u32 %v4060, 7
    %v4062 = vsub.s32 %v4059, %v4061
    %v4063 = vrot.slane %v4055, %v4062
    %v4064 = vcombine.high %v4063, %v4063
    %v4066 = vunpack.c.l.s4 1966171168
    %v4067 = vunpack.c.0.s8 %v4066
    %v4068 = vlaneseq
    %v4069 = vshrl.u32 %v4068, 7
    %v4070 = vsub.s32 %v4067, %v4069
    %v4071 = vrot.slane %v4064, %v4070
    %v4073 = vmul.f32 %v4053, %v4071
    %v4074 = vld [vmem:[%s89] sm:$0x1]
    %v4075 = vmul.f32 %v4044, %v4073
    %v4076 = vsub.f32 %v4074, %v4075
    %v4078 = vlaneseq
    %v4079 = vshrl.u32 %v4078, 7
    %v4080 = vsub.s32 0, %v4079
    %v4081 = vrot.slane %v4076, %v4080
    %v4083 = vsel %vm619, %v4073, %v4081
    %v4084 = vld [vmem:[%s93] sm:$0xff]
    %v4085 = vld [vmem:[%s93 + $0x8] sm:$0xff]
    %v4086 = vld [vmem:[%s93 + $0x10] sm:$0xff]
    %v4087 = vld [vmem:[%s93 + $0x18] sm:$0xff]
    %v4089 = vsel %vm921, %v4083, 0
    %4091 = vmatprep.subr.mxu0 0.0
    %4092 = vmatpush1.msra.mxu0 0.0
    %4093 = vmatprep.subr.mxu0 0.0
    %4094 = vmatpush1.msra.mxu0 0.0
    %4095 = vmatprep.subr.mxu0 0.0
    %4096 = vmatpush1.msra.mxu0 0.0
    %4097 = vmatprep.subr.mxu0 0.0
    %4098 = vmatpush1.msra.mxu0 0.0
    %4099 = vmatprep.subr.mxu0 0.0
    %4100 = vmatpush1.msra.mxu0 0.0
    %4101 = vmatprep.subr.mxu0 0.0
    %4102 = vmatpush1.msra.mxu0 0.0
    %4103 = vmatprep.subr.mxu0 0.0
    %4104 = vmatpush1.msra.mxu0 0.0
    %4105 = vmatprep.subr.mxu0 0.0
    %4106 = vmatpush1.msra.mxu0 0.0
    %4107 = vmatprep.subr.mxu0 0.0
    %4108 = vmatpush1.msra.mxu0 0.0
    %4109 = vmatprep.subr.mxu0 0.0
    %4110 = vmatpush1.msra.mxu0 0.0
    %4111 = vmatprep.subr.mxu0 0.0
    %4112 = vmatpush1.msra.mxu0 0.0
    %4113 = vmatprep.subr.mxu0 0.0
    %4114 = vmatpush1.msra.mxu0 0.0
    %4115 = vmatprep.subr.mxu0 0.0
    %4116 = vmatpush1.msra.mxu0 %v4087
    %4117 = vmatprep.subr.mxu0 0.0
    %4118 = vmatpush1.msra.mxu0 %v4086
    %4119 = vmatprep.subr.mxu0 0.0
    %4120 = vmatpush1.msra.mxu0 %v4085
    %4121 = vmatprep.subr.mxu0 0.0
    %4122 = vmatpush1.msra.mxu0 %v4084
    %4123 = vmatprep.subr.mxu0 0.0
    %4124 = vmatpush2.msra.mxu0 0.0
    %4125 = vmatprep.subr.mxu0 0.0
    %4126 = vmatpush2.msra.mxu0 0.0
    %4127 = vmatprep.subr.mxu0 0.0
    %4128 = vmatpush2.msra.mxu0 0.0
    %4129 = vmatprep.subr.mxu0 0.0
    %4130 = vmatpush2.msra.mxu0 0.0
    %4131 = vmatprep.subr.mxu0 0.0
    %4132 = vmatpush2.msra.mxu0 0.0
    %4133 = vmatprep.subr.mxu0 0.0
    %4134 = vmatpush2.msra.mxu0 0.0
    %4135 = vmatprep.subr.mxu0 0.0
    %4136 = vmatpush2.msra.mxu0 0.0
    %4137 = vmatprep.subr.mxu0 0.0
    %4138 = vmatpush2.msra.mxu0 0.0
    %4139 = vmatprep.subr.mxu0 0.0
    %4140 = vmatpush2.msra.mxu0 0.0
    %4141 = vmatprep.subr.mxu0 0.0
    %4142 = vmatpush2.msra.mxu0 0.0
    %4143 = vmatprep.subr.mxu0 0.0
    %4144 = vmatpush2.msra.mxu0 0.0
    %4145 = vmatprep.subr.mxu0 0.0
    %4146 = vmatpush2.msra.mxu0 0.0
    %4147 = vmatprep.subr.mxu0 0.0
    %4148 = vmatpush2.msra.mxu0 0.0
    %4149 = vmatprep.subr.mxu0 0.0
    %4150 = vmatpush2.msra.mxu0 0.0
    %4151 = vmatprep.subr.mxu0 0.0
    %4152 = vmatpush2.msra.mxu0 0.0
    %4153 = vmatprep.subr.mxu0 0.0
    %4154 = vmatpush2.msra.mxu0 0.0
    %4155 = vmatprep.mubr.f32.mxu0 0.0
    %4156 = vmatmul.mubr.f32.gmra.mxu0 %v4089
    %v4157 = vpop.f32.mrf.mxu0
    %v4158 = vadd.f32 0.0, %v4157
    %v4159 = vpop.f32.mrf.mxu0
    %4160 = vdwg.mxu0
    %v4161 = vlaneseq
    %v4162 = vshrl.u32 %v4161, 7
    %v4163 = vsub.s32 0, %v4162
    %v4164 = vrot.slane %v4158, %v4163
    %v4165 = vmul.f32 %v3945, %v4164
    %v4166 = vlaneseq
    %v4167 = vshrl.u32 %v4166, 7
    %v4168 = vsub.s32 1, %v4167
    %v4169 = vrot.slane %v4158, %v4168
    %v4170 = vadd.f32 %v4165, %v4169
    %v4171 = vpack.c.bf16 %v3191, %v3191
    %v4172 = vld [vmem:[%s111] sm:$0xf]
    %v4173 = vld [vmem:[%s111 + $0x4] sm:$0xf]
    %v4174 = vld [vmem:[%s111 + $0x8] sm:$0xf]
    %v4175 = vld [vmem:[%s111 + $0xc] sm:$0xf]
    %v4176 = vld [vmem:[%s111 + $0x10] sm:$0xf]
    %v4177 = vld [vmem:[%s111 + $0x14] sm:$0xf]
    %v4178 = vld [vmem:[%s111 + $0x18] sm:$0xf]
    %v4179 = vld [vmem:[%s111 + $0x1c] sm:$0xf]
    %v4188 = vunpack.c.l.b16 %v4172
    %v4189 = vunpack.c.l.b16 %v4173
    %v4190 = vunpack.c.l.b16 %v4174
    %v4191 = vunpack.c.l.b16 %v4175
    %v4192 = vunpack.c.l.b16 %v4176
    %v4193 = vunpack.c.l.b16 %v4177
    %v4194 = vunpack.c.l.b16 %v4178
    %v4195 = vunpack.c.l.b16 %v4179
    %v4196 = vpack.c.b16 %v4189, %v4188
    %v4197 = vpack.c.b16 %v4191, %v4190
    %v4198 = vpack.c.b16 %v4193, %v4192
    %v4199 = vpack.c.b16 %v4195, %v4194
    %v4205 = vsel %vm1168, %v4171, 0
    %4207 = vmatprep.subr.bf16.mxu0 0
    %4208 = vmatpush1.bf16.msra.mxu0 0
    %4209 = vmatprep.subr.bf16.mxu0 0
    %4210 = vmatpush1.bf16.msra.mxu0 0
    %4211 = vmatprep.subr.bf16.mxu0 0
    %4212 = vmatpush1.bf16.msra.mxu0 0
    %4213 = vmatprep.subr.bf16.mxu0 0
    %4214 = vmatpush1.bf16.msra.mxu0 0
    %4215 = vmatprep.subr.bf16.mxu0 0
    %4216 = vmatpush1.bf16.msra.mxu0 %v4199
    %4217 = vmatprep.subr.bf16.mxu0 0
    %4218 = vmatpush1.bf16.msra.mxu0 %v4198
    %4219 = vmatprep.subr.bf16.mxu0 0
    %4220 = vmatpush1.bf16.msra.mxu0 %v4197
    %4221 = vmatprep.subr.bf16.mxu0 0
    %4222 = vmatpush1.bf16.msra.mxu0 %v4196
    %4223 = vmatprep.subr.bf16.mxu0 0
    %4224 = vmatpush2.bf16.msra.mxu0 0
    %4225 = vmatprep.subr.bf16.mxu0 0
    %4226 = vmatpush2.bf16.msra.mxu0 0
    %4227 = vmatprep.subr.bf16.mxu0 0
    %4228 = vmatpush2.bf16.msra.mxu0 0
    %4229 = vmatprep.subr.bf16.mxu0 0
    %4230 = vmatpush2.bf16.msra.mxu0 0
    %4231 = vmatprep.subr.bf16.mxu0 0
    %4232 = vmatpush2.bf16.msra.mxu0 0
    %4233 = vmatprep.subr.bf16.mxu0 0
    %4234 = vmatpush2.bf16.msra.mxu0 0
    %4235 = vmatprep.subr.bf16.mxu0 0
    %4236 = vmatpush2.bf16.msra.mxu0 0
    %4237 = vmatprep.subr.bf16.mxu0 0
    %4238 = vmatpush2.bf16.msra.mxu0 0
    %4239 = vmatprep.mubr.bf16.mxu0 0
    %4240 = vmatmul.mubr.bf16.gmra.mxu0 %v4205
    %v4241 = vpop.f32.mrf.mxu0
    %v4242 = vadd.f32 0.0, %v4241
    %v4243 = vpop.f32.mrf.mxu0
    %v4244 = vpop.f32.mrf.mxu0
    %v4245 = vpop.f32.mrf.mxu0
    %4246 = vdwg.mxu0
    %v4247 = vld [vmem:[%s103] sm:$0xf]
    %v4249 = vsel %vm745, %v4247, 0
    %4251 = vmatprep.subr.mxu0 0.0
    %4252 = vmatpush1.msra.mxu0 0.0
    %4253 = vmatprep.subr.mxu0 0.0
    %4254 = vmatpush1.msra.mxu0 0.0
    %4255 = vmatprep.subr.mxu0 0.0
    %4256 = vmatpush1.msra.mxu0 0.0
    %4257 = vmatprep.subr.mxu0 0.0
    %4258 = vmatpush1.msra.mxu0 0.0
    %4259 = vmatprep.subr.mxu0 0.0
    %4260 = vmatpush1.msra.mxu0 0.0
    %4261 = vmatprep.subr.mxu0 0.0
    %4262 = vmatpush1.msra.mxu0 0.0
    %4263 = vmatprep.subr.mxu0 0.0
    %4264 = vmatpush1.msra.mxu0 0.0
    %4265 = vmatprep.subr.mxu0 0.0
    %4266 = vmatpush1.msra.mxu0 0.0
    %4267 = vmatprep.subr.mxu0 0.0
    %4268 = vmatpush1.msra.mxu0 0.0
    %4269 = vmatprep.subr.mxu0 0.0
    %4270 = vmatpush1.msra.mxu0 0.0
    %4271 = vmatprep.subr.mxu0 0.0
    %4272 = vmatpush1.msra.mxu0 0.0
    %4273 = vmatprep.subr.mxu0 0.0
    %4274 = vmatpush1.msra.mxu0 0.0
    %4275 = vmatprep.subr.mxu0 0.0
    %4276 = vmatpush1.msra.mxu0 0.0
    %4277 = vmatprep.subr.mxu0 0.0
    %4278 = vmatpush1.msra.mxu0 0.0
    %4279 = vmatprep.subr.mxu0 0.0
    %4280 = vmatpush1.msra.mxu0 0.0
    %4281 = vmatprep.subr.mxu0 0.0
    %4282 = vmatpush1.msra.mxu0 %v4242
    %4283 = vmatprep.subr.mxu0 0.0
    %4284 = vmatpush2.msra.mxu0 0.0
    %4285 = vmatprep.subr.mxu0 0.0
    %4286 = vmatpush2.msra.mxu0 0.0
    %4287 = vmatprep.subr.mxu0 0.0
    %4288 = vmatpush2.msra.mxu0 0.0
    %4289 = vmatprep.subr.mxu0 0.0
    %4290 = vmatpush2.msra.mxu0 0.0
    %4291 = vmatprep.subr.mxu0 0.0
    %4292 = vmatpush2.msra.mxu0 0.0
    %4293 = vmatprep.subr.mxu0 0.0
    %4294 = vmatpush2.msra.mxu0 0.0
    %4295 = vmatprep.subr.mxu0 0.0
    %4296 = vmatpush2.msra.mxu0 0.0
    %4297 = vmatprep.subr.mxu0 0.0
    %4298 = vmatpush2.msra.mxu0 0.0
    %4299 = vmatprep.subr.mxu0 0.0
    %4300 = vmatpush2.msra.mxu0 0.0
    %4301 = vmatprep.subr.mxu0 0.0
    %4302 = vmatpush2.msra.mxu0 0.0
    %4303 = vmatprep.subr.mxu0 0.0
    %4304 = vmatpush2.msra.mxu0 0.0
    %4305 = vmatprep.subr.mxu0 0.0
    %4306 = vmatpush2.msra.mxu0 0.0
    %4307 = vmatprep.subr.mxu0 0.0
    %4308 = vmatpush2.msra.mxu0 0.0
    %4309 = vmatprep.subr.mxu0 0.0
    %4310 = vmatpush2.msra.mxu0 0.0
    %4311 = vmatprep.subr.mxu0 0.0
    %4312 = vmatpush2.msra.mxu0 0.0
    %4313 = vmatprep.subr.mxu0 0.0
    %4314 = vmatpush2.msra.mxu0 0.0
    %4315 = vmatprep.mubr.f32.mxu0 0.0
    %4316 = vmatmul.mubr.f32.gmra.mxu0 %v4249
    %v4317 = vpop.f32.mrf.mxu0
    %v4318 = vadd.f32 0.0, %v4317
    %v4319 = vpop.f32.mrf.mxu0
    %4320 = vdwg.mxu0
    %v4321 = vsel %vm3428, %v4318, 0.0
    %v4322 = vrot.slane %v4321, 4
    %v4323 = vadd.f32 %v4321, %v4322
    %v4324 = vrot.slane %v4323, 2
    %v4325 = vadd.f32 %v4323, %v4324
    %v4326 = vrot.slane %v4325, 1
    %v4327 = vadd.f32 %v4325, %v4326
    %v4328 = vmul.f32 %v4318, %v4318
    %v4329 = vsel %vm3428, %v4328, 0.0
    %v4330 = vrot.slane %v4329, 4
    %v4331 = vadd.f32 %v4329, %v4330
    %v4332 = vrot.slane %v4331, 2
    %v4333 = vadd.f32 %v4331, %v4332
    %v4334 = vrot.slane %v4333, 1
    %v4335 = vadd.f32 %v4333, %v4334
    %v4336 = vsel %vm619, %v4327, %v4335
    %v4337 = vld [vmem:[%s109] sm:$0xff]
    %v4338 = vld [vmem:[%s109 + $0x8] sm:$0xff]
    %v4339 = vld [vmem:[%s109 + $0x10] sm:$0xff]
    %v4340 = vld [vmem:[%s109 + $0x18] sm:$0xff]
    %v4341 = vld [vmem:[%s109 + $0x20] sm:$0xff]
    %v4342 = vld [vmem:[%s109 + $0x28] sm:$0xff]
    %v4343 = vld [vmem:[%s109 + $0x30] sm:$0xff]
    %v4344 = vld [vmem:[%s109 + $0x38] sm:$0xff]
    %v4346 = vsel %vm1168, %v4336, 0
    %4348 = vmatprep.subr.mxu0 0.0
    %4349 = vmatpush1.msra.mxu0 0.0
    %4350 = vmatprep.subr.mxu0 0.0
    %4351 = vmatpush1.msra.mxu0 0.0
    %4352 = vmatprep.subr.mxu0 0.0
    %4353 = vmatpush1.msra.mxu0 0.0
    %4354 = vmatprep.subr.mxu0 0.0
    %4355 = vmatpush1.msra.mxu0 0.0
    %4356 = vmatprep.subr.mxu0 0.0
    %4357 = vmatpush1.msra.mxu0 0.0
    %4358 = vmatprep.subr.mxu0 0.0
    %4359 = vmatpush1.msra.mxu0 0.0
    %4360 = vmatprep.subr.mxu0 0.0
    %4361 = vmatpush1.msra.mxu0 0.0
    %4362 = vmatprep.subr.mxu0 0.0
    %4363 = vmatpush1.msra.mxu0 0.0
    %4364 = vmatprep.subr.mxu0 0.0
    %4365 = vmatpush1.msra.mxu0 %v4344
    %4366 = vmatprep.subr.mxu0 0.0
    %4367 = vmatpush1.msra.mxu0 %v4343
    %4368 = vmatprep.subr.mxu0 0.0
    %4369 = vmatpush1.msra.mxu0 %v4342
    %4370 = vmatprep.subr.mxu0 0.0
    %4371 = vmatpush1.msra.mxu0 %v4341
    %4372 = vmatprep.subr.mxu0 0.0
    %4373 = vmatpush1.msra.mxu0 %v4340
    %4374 = vmatprep.subr.mxu0 0.0
    %4375 = vmatpush1.msra.mxu0 %v4339
    %4376 = vmatprep.subr.mxu0 0.0
    %4377 = vmatpush1.msra.mxu0 %v4338
    %4378 = vmatprep.subr.mxu0 0.0
    %4379 = vmatpush1.msra.mxu0 %v4337
    %4380 = vmatprep.subr.mxu0 0.0
    %4381 = vmatpush2.msra.mxu0 0.0
    %4382 = vmatprep.subr.mxu0 0.0
    %4383 = vmatpush2.msra.mxu0 0.0
    %4384 = vmatprep.subr.mxu0 0.0
    %4385 = vmatpush2.msra.mxu0 0.0
    %4386 = vmatprep.subr.mxu0 0.0
    %4387 = vmatpush2.msra.mxu0 0.0
    %4388 = vmatprep.subr.mxu0 0.0
    %4389 = vmatpush2.msra.mxu0 0.0
    %4390 = vmatprep.subr.mxu0 0.0
    %4391 = vmatpush2.msra.mxu0 0.0
    %4392 = vmatprep.subr.mxu0 0.0
    %4393 = vmatpush2.msra.mxu0 0.0
    %4394 = vmatprep.subr.mxu0 0.0
    %4395 = vmatpush2.msra.mxu0 0.0
    %4396 = vmatprep.subr.mxu0 0.0
    %4397 = vmatpush2.msra.mxu0 0.0
    %4398 = vmatprep.subr.mxu0 0.0
    %4399 = vmatpush2.msra.mxu0 0.0
    %4400 = vmatprep.subr.mxu0 0.0
    %4401 = vmatpush2.msra.mxu0 0.0
    %4402 = vmatprep.subr.mxu0 0.0
    %4403 = vmatpush2.msra.mxu0 0.0
    %4404 = vmatprep.subr.mxu0 0.0
    %4405 = vmatpush2.msra.mxu0 0.0
    %4406 = vmatprep.subr.mxu0 0.0
    %4407 = vmatpush2.msra.mxu0 0.0
    %4408 = vmatprep.subr.mxu0 0.0
    %4409 = vmatpush2.msra.mxu0 0.0
    %4410 = vmatprep.subr.mxu0 0.0
    %4411 = vmatpush2.msra.mxu0 0.0
    %4412 = vmatprep.mubr.f32.mxu0 0.0
    %4413 = vmatmul.mubr.f32.gmra.mxu0 %v4346
    %v4414 = vpop.f32.mrf.mxu0
    %v4415 = vadd.f32 0.0, %v4414
    %v4416 = vpop.f32.mrf.mxu0
    %4417 = vdwg.mxu0
    %v4418 = vmul.f32 %v4415, %v4415
    %v4420 = vrot.slane %v4418, 7
    %v4422 = vsub.f32 %v4415, %v4420
    %v4423 = vmax.f32 %v4422, 0.0
    %v4424 = vld [vmem:[%s105] sm:$0x1]
    %v4425 = vadd.f32 %v4423, 1e-05
    %v4426 = vrsqrt.pop %v4425
    %v4429 = vunpack.c.l.s4 1966171168
    %v4430 = vunpack.c.0.s8 %v4429
    %v4431 = vlaneseq
    %v4432 = vshrl.u32 %v4431, 7
    %v4433 = vsub.s32 %v4430, %v4432
    %v4434 = vrot.slane %v4426, %v4433
    %v4435 = vcombine.high %v4434, %v4434
    %v4437 = vunpack.c.l.s4 1966171168
    %v4438 = vunpack.c.0.s8 %v4437
    %v4439 = vlaneseq
    %v4440 = vshrl.u32 %v4439, 7
    %v4441 = vsub.s32 %v4438, %v4440
    %v4442 = vrot.slane %v4435, %v4441
    %v4444 = vmul.f32 %v4424, %v4442
    %v4445 = vld [vmem:[%s101] sm:$0x1]
    %v4446 = vmul.f32 %v4415, %v4444
    %v4447 = vsub.f32 %v4445, %v4446
    %v4449 = vlaneseq
    %v4450 = vshrl.u32 %v4449, 7
    %v4451 = vsub.s32 0, %v4450
    %v4452 = vrot.slane %v4447, %v4451
    %v4454 = vsel %vm619, %v4444, %v4452
    %v4455 = vld [vmem:[%s107] sm:$0xff]
    %v4456 = vld [vmem:[%s107 + $0x8] sm:$0xff]
    %v4457 = vld [vmem:[%s107 + $0x10] sm:$0xff]
    %v4458 = vld [vmem:[%s107 + $0x18] sm:$0xff]
    %v4460 = vsel %vm921, %v4454, 0
    %4462 = vmatprep.subr.mxu0 0.0
    %4463 = vmatpush1.msra.mxu0 0.0
    %4464 = vmatprep.subr.mxu0 0.0
    %4465 = vmatpush1.msra.mxu0 0.0
    %4466 = vmatprep.subr.mxu0 0.0
    %4467 = vmatpush1.msra.mxu0 0.0
    %4468 = vmatprep.subr.mxu0 0.0
    %4469 = vmatpush1.msra.mxu0 0.0
    %4470 = vmatprep.subr.mxu0 0.0
    %4471 = vmatpush1.msra.mxu0 0.0
    %4472 = vmatprep.subr.mxu0 0.0
    %4473 = vmatpush1.msra.mxu0 0.0
    %4474 = vmatprep.subr.mxu0 0.0
    %4475 = vmatpush1.msra.mxu0 0.0
    %4476 = vmatprep.subr.mxu0 0.0
    %4477 = vmatpush1.msra.mxu0 0.0
    %4478 = vmatprep.subr.mxu0 0.0
    %4479 = vmatpush1.msra.mxu0 0.0
    %4480 = vmatprep.subr.mxu0 0.0
    %4481 = vmatpush1.msra.mxu0 0.0
    %4482 = vmatprep.subr.mxu0 0.0
    %4483 = vmatpush1.msra.mxu0 0.0
    %4484 = vmatprep.subr.mxu0 0.0
    %4485 = vmatpush1.msra.mxu0 0.0
    %4486 = vmatprep.subr.mxu0 0.0
    %4487 = vmatpush1.msra.mxu0 %v4458
    %4488 = vmatprep.subr.mxu0 0.0
    %4489 = vmatpush1.msra.mxu0 %v4457
    %4490 = vmatprep.subr.mxu0 0.0
    %4491 = vmatpush1.msra.mxu0 %v4456
    %4492 = vmatprep.subr.mxu0 0.0
    %4493 = vmatpush1.msra.mxu0 %v4455
    %4494 = vmatprep.subr.mxu0 0.0
    %4495 = vmatpush2.msra.mxu0 0.0
    %4496 = vmatprep.subr.mxu0 0.0
    %4497 = vmatpush2.msra.mxu0 0.0
    %4498 = vmatprep.subr.mxu0 0.0
    %4499 = vmatpush2.msra.mxu0 0.0
    %4500 = vmatprep.subr.mxu0 0.0
    %4501 = vmatpush2.msra.mxu0 0.0
    %4502 = vmatprep.subr.mxu0 0.0
    %4503 = vmatpush2.msra.mxu0 0.0
    %4504 = vmatprep.subr.mxu0 0.0
    %4505 = vmatpush2.msra.mxu0 0.0
    %4506 = vmatprep.subr.mxu0 0.0
    %4507 = vmatpush2.msra.mxu0 0.0
    %4508 = vmatprep.subr.mxu0 0.0
    %4509 = vmatpush2.msra.mxu0 0.0
    %4510 = vmatprep.subr.mxu0 0.0
    %4511 = vmatpush2.msra.mxu0 0.0
    %4512 = vmatprep.subr.mxu0 0.0
    %4513 = vmatpush2.msra.mxu0 0.0
    %4514 = vmatprep.subr.mxu0 0.0
    %4515 = vmatpush2.msra.mxu0 0.0
    %4516 = vmatprep.subr.mxu0 0.0
    %4517 = vmatpush2.msra.mxu0 0.0
    %4518 = vmatprep.subr.mxu0 0.0
    %4519 = vmatpush2.msra.mxu0 0.0
    %4520 = vmatprep.subr.mxu0 0.0
    %4521 = vmatpush2.msra.mxu0 0.0
    %4522 = vmatprep.subr.mxu0 0.0
    %4523 = vmatpush2.msra.mxu0 0.0
    %4524 = vmatprep.subr.mxu0 0.0
    %4525 = vmatpush2.msra.mxu0 0.0
    %4526 = vmatprep.mubr.f32.mxu0 0.0
    %4527 = vmatmul.mubr.f32.gmra.mxu0 %v4460
    %v4528 = vpop.f32.mrf.mxu0
    %v4529 = vadd.f32 0.0, %v4528
    %v4530 = vpop.f32.mrf.mxu0
    %4531 = vdwg.mxu0
    %v4532 = vlaneseq
    %v4533 = vshrl.u32 %v4532, 7
    %v4534 = vsub.s32 0, %v4533
    %v4535 = vrot.slane %v4529, %v4534
    %v4536 = vmul.f32 %v4318, %v4535
    %v4537 = vlaneseq
    %v4538 = vshrl.u32 %v4537, 7
    %v4539 = vsub.s32 1, %v4538
    %v4540 = vrot.slane %v4529, %v4539
    %v4541 = vadd.f32 %v4536, %v4540
    %v4542 = vadd.f32 %v4170, %v4541
    %v4543 = vmax.f32 %v4542, 0.0
    %v4544 = vld [vmem:[%s131] sm:$0x3]
    %v4546 = vsel %vm3652, %v4544, 0
    %v4549 = vsel %vm3656, %v4543, 0
    %4551 = vmatprep.subr.mxu0 0.0
    %4552 = vmatpush1.msra.mxu0 0.0
    %4553 = vmatprep.subr.mxu0 0.0
    %4554 = vmatpush1.msra.mxu0 0.0
    %4555 = vmatprep.subr.mxu0 0.0
    %4556 = vmatpush1.msra.mxu0 0.0
    %4557 = vmatprep.subr.mxu0 0.0
    %4558 = vmatpush1.msra.mxu0 0.0
    %4559 = vmatprep.subr.mxu0 0.0
    %4560 = vmatpush1.msra.mxu0 0.0
    %4561 = vmatprep.subr.mxu0 0.0
    %4562 = vmatpush1.msra.mxu0 0.0
    %4563 = vmatprep.subr.mxu0 0.0
    %4564 = vmatpush1.msra.mxu0 0.0
    %4565 = vmatprep.subr.mxu0 0.0
    %4566 = vmatpush1.msra.mxu0 0.0
    %4567 = vmatprep.subr.mxu0 0.0
    %4568 = vmatpush1.msra.mxu0 0.0
    %4569 = vmatprep.subr.mxu0 0.0
    %4570 = vmatpush1.msra.mxu0 0.0
    %4571 = vmatprep.subr.mxu0 0.0
    %4572 = vmatpush1.msra.mxu0 0.0
    %4573 = vmatprep.subr.mxu0 0.0
    %4574 = vmatpush1.msra.mxu0 0.0
    %4575 = vmatprep.subr.mxu0 0.0
    %4576 = vmatpush1.msra.mxu0 0.0
    %4577 = vmatprep.subr.mxu0 0.0
    %4578 = vmatpush1.msra.mxu0 0.0
    %4579 = vmatprep.subr.mxu0 0.0
    %4580 = vmatpush1.msra.mxu0 0.0
    %4581 = vmatprep.subr.mxu0 0.0
    %4582 = vmatpush1.msra.mxu0 %v4549
    %4583 = vmatprep.subr.mxu0 0.0
    %4584 = vmatpush2.msra.mxu0 0.0
    %4585 = vmatprep.subr.mxu0 0.0
    %4586 = vmatpush2.msra.mxu0 0.0
    %4587 = vmatprep.subr.mxu0 0.0
    %4588 = vmatpush2.msra.mxu0 0.0
    %4589 = vmatprep.subr.mxu0 0.0
    %4590 = vmatpush2.msra.mxu0 0.0
    %4591 = vmatprep.subr.mxu0 0.0
    %4592 = vmatpush2.msra.mxu0 0.0
    %4593 = vmatprep.subr.mxu0 0.0
    %4594 = vmatpush2.msra.mxu0 0.0
    %4595 = vmatprep.subr.mxu0 0.0
    %4596 = vmatpush2.msra.mxu0 0.0
    %4597 = vmatprep.subr.mxu0 0.0
    %4598 = vmatpush2.msra.mxu0 0.0
    %4599 = vmatprep.subr.mxu0 0.0
    %4600 = vmatpush2.msra.mxu0 0.0
    %4601 = vmatprep.subr.mxu0 0.0
    %4602 = vmatpush2.msra.mxu0 0.0
    %4603 = vmatprep.subr.mxu0 0.0
    %4604 = vmatpush2.msra.mxu0 0.0
    %4605 = vmatprep.subr.mxu0 0.0
    %4606 = vmatpush2.msra.mxu0 0.0
    %4607 = vmatprep.subr.mxu0 0.0
    %4608 = vmatpush2.msra.mxu0 0.0
    %4609 = vmatprep.subr.mxu0 0.0
    %4610 = vmatpush2.msra.mxu0 0.0
    %4611 = vmatprep.subr.mxu0 0.0
    %4612 = vmatpush2.msra.mxu0 0.0
    %4613 = vmatprep.subr.mxu0 0.0
    %4614 = vmatpush2.msra.mxu0 0.0
    %4615 = vmatprep.mubr.f32.mxu0 0.0
    %4616 = vmatmul.mubr.f32.gmra.mxu0 %v4546
    %v4617 = vpop.f32.mrf.mxu0
    %v4618 = vadd.f32 0.0, %v4617
    %v4619 = vpop.f32.mrf.mxu0
    %4620 = vdwg.mxu0
    %v4621 = vld [vmem:[%s127] sm:$0xff]
    %v4622 = vld [vmem:[%s127 + $0x8] sm:$0xff]
    %v4623 = vld [vmem:[%s127 + $0x10] sm:$0xff]
    %v4624 = vld [vmem:[%s127 + $0x18] sm:$0xff]
    %v4625 = vld [vmem:[%s127 + $0x20] sm:$0xff]
    %v4626 = vld [vmem:[%s127 + $0x28] sm:$0xff]
    %v4627 = vld [vmem:[%s127 + $0x30] sm:$0xff]
    %v4628 = vld [vmem:[%s127 + $0x38] sm:$0xff]
    %v4629 = vld [vmem:[#allocation5] sm:$0x1]
    %v4631 = vlaneseq
    %v4632 = vshrl.u32 %v4631, 7
    %v4633 = vsub.s32 0, %v4632
    %v4634 = vrot.slane %v4629, %v4633
    %v4637 = vsel %vm1168, %v4618, 0
    %4639 = vmatprep.subr.mxu0 0.0
    %4640 = vmatpush1.msra.mxu0 0.0
    %4641 = vmatprep.subr.mxu0 0.0
    %4642 = vmatpush1.msra.mxu0 0.0
    %4643 = vmatprep.subr.mxu0 0.0
    %4644 = vmatpush1.msra.mxu0 0.0
    %4645 = vmatprep.subr.mxu0 0.0
    %4646 = vmatpush1.msra.mxu0 0.0
    %4647 = vmatprep.subr.mxu0 0.0
    %4648 = vmatpush1.msra.mxu0 0.0
    %4649 = vmatprep.subr.mxu0 0.0
    %4650 = vmatpush1.msra.mxu0 0.0
    %4651 = vmatprep.subr.mxu0 0.0
    %4652 = vmatpush1.msra.mxu0 0.0
    %4653 = vmatprep.subr.mxu0 0.0
    %4654 = vmatpush1.msra.mxu0 0.0
    %4655 = vmatprep.subr.mxu0 0.0
    %4656 = vmatpush1.msra.mxu0 %v4628
    %4657 = vmatprep.subr.mxu0 0.0
    %4658 = vmatpush1.msra.mxu0 %v4627
    %4659 = vmatprep.subr.mxu0 0.0
    %4660 = vmatpush1.msra.mxu0 %v4626
    %4661 = vmatprep.subr.mxu0 0.0
    %4662 = vmatpush1.msra.mxu0 %v4625
    %4663 = vmatprep.subr.mxu0 0.0
    %4664 = vmatpush1.msra.mxu0 %v4624
    %4665 = vmatprep.subr.mxu0 0.0
    %4666 = vmatpush1.msra.mxu0 %v4623
    %4667 = vmatprep.subr.mxu0 0.0
    %4668 = vmatpush1.msra.mxu0 %v4622
    %4669 = vmatprep.subr.mxu0 0.0
    %4670 = vmatpush1.msra.mxu0 %v4621
    %4671 = vmatprep.subr.mxu0 0.0
    %4672 = vmatpush2.msra.mxu0 0.0
    %4673 = vmatprep.subr.mxu0 0.0
    %4674 = vmatpush2.msra.mxu0 0.0
    %4675 = vmatprep.subr.mxu0 0.0
    %4676 = vmatpush2.msra.mxu0 0.0
    %4677 = vmatprep.subr.mxu0 0.0
    %4678 = vmatpush2.msra.mxu0 0.0
    %4679 = vmatprep.subr.mxu0 0.0
    %4680 = vmatpush2.msra.mxu0 0.0
    %4681 = vmatprep.subr.mxu0 0.0
    %4682 = vmatpush2.msra.mxu0 0.0
    %4683 = vmatprep.subr.mxu0 0.0
    %4684 = vmatpush2.msra.mxu0 0.0
    %4685 = vmatprep.subr.mxu0 0.0
    %4686 = vmatpush2.msra.mxu0 0.0
    %4687 = vmatprep.subr.mxu0 0.0
    %4688 = vmatpush2.msra.mxu0 0.0
    %4689 = vmatprep.subr.mxu0 0.0
    %4690 = vmatpush2.msra.mxu0 0.0
    %4691 = vmatprep.subr.mxu0 0.0
    %4692 = vmatpush2.msra.mxu0 0.0
    %4693 = vmatprep.subr.mxu0 0.0
    %4694 = vmatpush2.msra.mxu0 0.0
    %4695 = vmatprep.subr.mxu0 0.0
    %4696 = vmatpush2.msra.mxu0 0.0
    %4697 = vmatprep.subr.mxu0 0.0
    %4698 = vmatpush2.msra.mxu0 0.0
    %4699 = vmatprep.subr.mxu0 0.0
    %4700 = vmatpush2.msra.mxu0 0.0
    %4701 = vmatprep.subr.mxu0 0.0
    %4702 = vmatpush2.msra.mxu0 0.0
    %4703 = vmatprep.mubr.f32.mxu0 0.0
    %4704 = vmatmul.mubr.f32.gmra.mxu0 %v4637
    %v4705 = vpop.f32.mrf.mxu0
    %v4706 = vadd.f32 %v4634, %v4705
    %v4707 = vpop.f32.mrf.mxu0
    %4708 = vdwg.mxu0
    %vm4709 = vcmask 74752
    %4710 = vst.msk [vmem:[#allocation10] sm:$0x3] %vm4709, %v4706
    // Predicated region
    $region306: #{resnet8_forward.1} parent=1 // pred_check
      _
    $region307: #{resnet8_forward.1} parent=1 // pred_check_branch
      %4712 = sbr.rel (0) target = $region309
    $region308: #{resnet8_forward.1} parent=1 // pred_region
      %s4714 = ssub.s32 32, 32
      %4715 = vsyncadd [#allocation4], %s4714
      %s4717 = sshll.u32 [#allocation10], 4
      %s4718 = int_to_ptr.vmem [resolvable:$true] %s4717
      %4720 = dma.vmem_to_hbm [thread:$0]  %s4718, 32, %s145, [#allocation4]
    $region309: #{resnet8_forward.1} parent=1 // pred_fallthru
      _
    // Predicated region
    $region310: #{resnet8_forward.1} parent=1 // pred_check
      _
    $region311: #{resnet8_forward.1} parent=1 // pred_check_branch
      %4722 = sbr.rel (0) target = $region313
    $region312: #{resnet8_forward.1} parent=1 // pred_region
      %4723 = dma.done [#allocation4], 32
    $region313: #{resnet8_forward.1} parent=1 // pred_fallthru
      _
    %4724 = vsyncpa [#allocation3], 1
    %4725 = vsyncpa [#allocation6], 1
    %4726 = vsyncpa [#allocation9], 1
    %4727 = vsyncpa [#allocation4], 1

</llo_original>
